<compile_context>
chip_gen: v6e
topology: v6e:2x2x1
jax: 0.10.0
libtpu: 0.0.40
codegen_flags: <defaults>
</compile_context>

<pallas_src>
import functools

import jax
import jax.numpy as jnp
from jax import lax
from jax.experimental import pallas as pl
from jax.experimental.pallas import tpu as pltpu


def qrnn_layer_kernel(x_ref, w_ref, b_ref, h_ref, hn_ref,
                      c_carry, zc_scr, f_scr, o_scr):
    """One (batch-block, time-block) tile of a single QRNN-fo layer.

    x_ref : (T, BB, Din)   input tile
    w_ref : (3, Din, H)    per-gate weights (Z, F, O), matmul dtype (bf16/f32)
    b_ref : (3, 1, H)      per-gate biases, f32
    h_ref : (T, BB, H)     output tile  H_t = sigmoid(O_t) * C_t
    hn_ref: (BB, H)        final cell state (written at the last time block)
    c_carry: (BB, H) f32   cell-state carry across time blocks (scratch)
    zc_scr : (T, BB, H)    f*z slab, overwritten in place with C_t
    f_scr  : (T, BB, H)    (1 - f) slab
    o_scr  : (T, BB, H)    sigmoid(O) slab
    """
    T, BB, Din = x_ref.shape
    H = hn_ref.shape[-1]
    t_id = pl.program_id(1)

    # Initial cell state is zero (hidden=None in the PyTorch forward); reset
    # at the first time block of every batch block.
    @pl.when(t_id == 0)
    def _init():
        c_carry[...] = jnp.zeros_like(c_carry)

    # ---- Per-gate matmuls (low-precision inputs, f32 accumulation) ----------
    x2 = x_ref[...].reshape(T * BB, Din).astype(w_ref.dtype)
    z = jnp.tanh(jnp.dot(x2, w_ref[0], preferred_element_type=jnp.float32)
                 + b_ref[0])
    f = jax.nn.sigmoid(jnp.dot(x2, w_ref[1], preferred_element_type=jnp.float32)
                       + b_ref[1])
    o = jax.nn.sigmoid(jnp.dot(x2, w_ref[2], preferred_element_type=jnp.float32)
                       + b_ref[2])

    # Hoist one multiply per timestep off the serial chain:
    #   C_t = F_t*Z_t + (1-F_t)*C_{t-1}  ->  C_t = fz[t] + g[t]*C_{t-1}
    zc_scr[...] = (f * z).reshape(T, BB, H)        # fz slab
    f_scr[...] = (1.0 - f).reshape(T, BB, H)       # g slab
    o_scr[...] = o.reshape(T, BB, H)

    # ---- Serial ForgetMult recurrence (f32 carry); zc_scr[t] becomes C_t ----
    c0 = c_carry[...]
    if T <= 16:
        c = c0
        for t in range(T):                          # fully unrolled, static idx
            c = zc_scr[t] + f_scr[t] * c
            zc_scr[t] = c
    else:
        def step(t, c):
            c_new = zc_scr[t] + f_scr[t] * c
            zc_scr[t] = c_new
            return c_new
        c = lax.fori_loop(0, T, step, c0, unroll=8)
    c_carry[...] = c

    # ---- Output gate + store as one lane-dense slab, off the serial path ----
    h_ref[...] = (o_scr[...] * zc_scr[...]).astype(h_ref.dtype)

    @pl.when(t_id == pl.num_programs(1) - 1)
    def _store_hn():
        hn_ref[...] = c.astype(hn_ref.dtype)


# ----------------------------- wrapper helpers ------------------------------
def _largest_divisor_leq(n, cap):
    cap = max(1, min(n, cap))
    for d in range(cap, 0, -1):
        if n % d == 0:
            return d
    return 1


def _vmem_capacity_bytes():
    try:
        info = pltpu.get_tpu_info()
        cap = getattr(info, "vmem_capacity_bytes", None)
        if cap:
            return int(cap)
    except Exception:
        pass
    return 64 << 20  # conservative default: v7x per-TensorCore VMEM


def _pick_batch_block(B, b_block):
    if b_block is not None:
        assert B % b_block == 0, "b_block must divide batch"
        if b_block != B:
            assert b_block % 8 == 0, "sub-batch blocks must be sublane-aligned"
        return b_block
    # Split the batch across the 2 TensorCores (v7x) when sublane-aligned;
    # harmless (one extra serial sweep) on single-core v5e/v6e.
    if B % 16 == 0:
        return B // 2
    return B


def qrnn_layer_forward(x, weight, bias, *, t_block=None, b_block=None,
                       matmul_dtype=jnp.bfloat16, single_buffer_resident=True):
    """x: (S, B, Din); weight: (3H, Din) [PyTorch Linear layout]; bias: (3H,)."""
    S, B, Din = x.shape
    H = weight.shape[0] // 3

    BB = _pick_batch_block(B, b_block)
    io_b = jnp.dtype(x.dtype).itemsize
    w_b = jnp.dtype(matmul_dtype).itemsize
    vmem_cap = _vmem_capacity_bytes()
    n_w_buf = 1 if single_buffer_resident else 2

    # Generation-aware time-block size: fit double-buffered I/O tiles, f32 gate
    # slabs and matmul temps into ~50% of physical VMEM.
    if t_block is None:
        resident = n_w_buf * (3 * Din * H * w_b + 3 * H * 4)
        resident += 2 * BB * H * io_b + BB * H * 4
        per_t = (2 * BB * (Din + H) * io_b      # double-buffered x/h tiles
                 + 3 * BB * H * 4               # gate slabs
                 + BB * H * 4                   # per-gate matmul f32 temp
                 + BB * Din * w_b)              # low-precision cast of x tile
        t_block = int(min(max(1, (vmem_cap // 2 - resident) // max(per_t, 1)), 512))
    T = _largest_divisor_leq(S, t_block)
    # TODO(synk): for prime/awkward S, pad the sequence externally so T stays large.

    grid = (B // BB, S // T)

    # Per-gate weight (3, Din, H) in matmul dtype; per-gate bias (3, 1, H) f32.
    w3 = jnp.transpose(weight.reshape(3, H, Din), (0, 2, 1)).astype(matmul_dtype)
    b3 = bias.reshape(3, 1, H).astype(jnp.float32)

    def resident_spec(shape):
        idx = lambda b, s: (0,) * len(shape)
        if single_buffer_resident:
            return pl.BlockSpec(shape, idx, pipeline_mode=pl.Buffered(1))
        return pl.BlockSpec(shape, idx)

    # Explicit, generation-aware VMEM limit (accounts for slabs + temps + the
    # resident weight's buffer count).
    demand = (2 * T * BB * Din * io_b + 2 * T * BB * H * io_b
              + n_w_buf * (3 * Din * H * w_b + 3 * H * 4)
              + 2 * BB * H * io_b
              + 3 * T * BB * H * 4 + BB * H * 4
              + T * BB * H * 4 + T * BB * Din * w_b)
    vmem_limit = int(min(max(demand + (8 << 20), 16 << 20), (vmem_cap * 9) // 10))

    h_out, h_n = pl.pallas_call(
        qrnn_layer_kernel,
        out_shape=(
            jax.ShapeDtypeStruct((S, B, H), x.dtype),
            jax.ShapeDtypeStruct((B, H), x.dtype),
        ),
        grid_spec=pltpu.PrefetchScalarGridSpec(
            num_scalar_prefetch=0,
            grid=grid,
            in_specs=[
                pl.BlockSpec((T, BB, Din), lambda b, s: (s, b, 0)),   # streamed X
                resident_spec((3, Din, H)),                           # weights
                resident_spec((3, 1, H)),                             # biases
            ],
            out_specs=(
                pl.BlockSpec((T, BB, H), lambda b, s: (s, b, 0)),     # streamed H
                pl.BlockSpec((BB, H), lambda b, s: (b, 0)),           # final C
            ),
            scratch_shapes=[
                pltpu.VMEM((BB, H), jnp.float32),      # cell carry across blocks
                pltpu.VMEM((T, BB, H), jnp.float32),   # f*z slab -> C slab (in place)
                pltpu.VMEM((T, BB, H), jnp.float32),   # (1-f) slab
                pltpu.VMEM((T, BB, H), jnp.float32),   # sigmoid(O) slab
            ],
        ),
        compiler_params=pltpu.CompilerParams(
            dimension_semantics=("parallel", "arbitrary"),  # batch ||, time serial
            vmem_limit_bytes=vmem_limit,
        ),
    )(x, w3, b3)
    return h_out, h_n


@functools.partial(jax.jit, static_argnames=("num_layers", "t_block", "b_block",
                                             "matmul_dtype",
                                             "single_buffer_resident"))
def qrnn_forward(x, weights, biases, num_layers, t_block=None, b_block=None,
                 matmul_dtype=jnp.bfloat16, single_buffer_resident=True):
    """Multi-layer QRNN.  x: (S, B, input_size).

    Returns:
      output: (S, B, hidden_size)
      h_n   : (num_layers, B, hidden_size)
    """
    next_hidden = []
    inp = x
    for l in range(num_layers):
        inp, hn = qrnn_layer_forward(inp, weights[l], biases[l],
                                     t_block=t_block, b_block=b_block,
                                     matmul_dtype=matmul_dtype,
                                     single_buffer_resident=single_buffer_resident)
        next_hidden.append(hn)
    return inp, jnp.stack(next_hidden, axis=0)


# ------------------------- pure-JAX references -------------------------------
def ref_layer(x, weight, bias, matmul_dtype=jnp.float32):
    S, B, Din = x.shape
    H = weight.shape[0] // 3
    w3 = jnp.transpose(weight.reshape(3, H, Din), (0, 2, 1)).astype(matmul_dtype)
    b3 = bias.reshape(3, 1, 1, H).astype(jnp.float32)
    xm = x.astype(matmul_dtype)
    z = jnp.tanh(jnp.dot(xm, w3[0], preferred_element_type=jnp.float32) + b3[0])
    f = jax.nn.sigmoid(jnp.dot(xm, w3[1], preferred_element_type=jnp.float32) + b3[1])
    o = jax.nn.sigmoid(jnp.dot(xm, w3[2], preferred_element_type=jnp.float32) + b3[2])
    c = jnp.zeros((B, H), jnp.float32)
    cs = []
    for t in range(S):
        c = f[t] * z[t] + (1.0 - f[t]) * c
        cs.append(c)
    C = jnp.stack(cs, 0)
    return (o * C).astype(x.dtype), C[-1].astype(x.dtype)


def ref_qrnn(x, weights, biases, num_layers, matmul_dtype=jnp.float32):
    hs = []
    inp = x
    for l in range(num_layers):
        inp, hn = ref_layer(inp, weights[l], biases[l], matmul_dtype=matmul_dtype)
        hs.append(hn)
    return inp, jnp.stack(hs, 0)


# -----------------------------------------------------------------------------
if __name__ == "__main__":
    seq_len, batch, input_size, hidden_size, num_layers = 8, 2, 16, 32, 2

    key = jax.random.PRNGKey(0)
    kx, *kw = jax.random.split(key, 1 + 2 * num_layers)
    x = jax.random.normal(kx, (seq_len, batch, input_size), dtype=jnp.float32)

    # Deterministic parameter init (PyTorch Linear-style uniform bounds).
    weights, biases = [], []
    for l in range(num_layers):
        fan_in = input_size if l == 0 else hidden_size
        bound = 1.0 / float(fan_in) ** 0.5
        w = jax.random.uniform(kw[2 * l], (3 * hidden_size, fan_in),
                               minval=-bound, maxval=bound, dtype=jnp.float32)
        b = jax.random.uniform(kw[2 * l + 1], (3 * hidden_size,),
                               minval=-bound, maxval=bound, dtype=jnp.float32)
        weights.append(w)
        biases.append(b)

    # References: matched-precision (bf16 matmul) and full-f32 module math.
    ref_out_bf, ref_hn_bf = ref_qrnn(x, weights, biases, num_layers,
                                     matmul_dtype=jnp.bfloat16)
    ref_out_f32, ref_hn_f32 = ref_qrnn(x, weights, biases, num_layers,
                                       matmul_dtype=jnp.float32)

    def run(matmul_dtype, sb):
        out, hn = qrnn_forward(x, weights, biases, num_layers, t_block=4,
                               matmul_dtype=matmul_dtype,
                               single_buffer_resident=sb)
        return jax.block_until_ready(out), jax.block_until_ready(hn)

    # bf16-matmul fast path; fall back to default double-buffered resident
    # weights if this jax/Mosaic build rejects (or mishandles) pl.Buffered(1).
    single_buffer = True
    try:
        out_bf, hn_bf = run(jnp.bfloat16, True)
        ok = bool(jnp.allclose(out_bf, ref_out_bf, atol=2e-3, rtol=2e-3)
                  and jnp.allclose(hn_bf, ref_hn_bf, atol=2e-3, rtol=2e-3))
    except Exception:
        ok = False
    if not ok:
        single_buffer = False
        out_bf, hn_bf = run(jnp.bfloat16, False)

    assert out_bf.shape == (seq_len, batch, hidden_size)
    assert hn_bf.shape == (num_layers, batch, hidden_size)
    # Matched-precision check (same bf16-input / f32-accumulate math in JAX).
    assert jnp.allclose(out_bf, ref_out_bf, atol=2e-3, rtol=2e-3)
    assert jnp.allclose(hn_bf, ref_hn_bf, atol=2e-3, rtol=2e-3)
    # Loose fidelity check of the bf16 path against full-f32 module semantics.
    assert jnp.allclose(out_bf, ref_out_f32, atol=5e-2, rtol=5e-2)
    assert jnp.allclose(hn_bf, ref_hn_f32, atol=5e-2, rtol=5e-2)

    # f32-matmul path: tight match to the original PyTorch-module math.
    out_f32, hn_f32 = run(jnp.float32, single_buffer)
    assert jnp.allclose(out_f32, ref_out_f32, atol=5e-5, rtol=5e-5)
    assert jnp.allclose(hn_f32, ref_hn_f32, atol=5e-5, rtol=5e-5)

    print("KERNEL_OK")
</pallas_src>

<mosaic_0001>
module attributes {stable_mosaic.version = 11 : i64} {
  func.func @qrnn_layer_kernel(%arg0: i32, %arg1: i32, %arg2: memref<4x2x32xf32, #tpu.memory_space<vmem>>, %arg3: memref<3x32x32xbf16, #tpu.memory_space<vmem>>, %arg4: memref<3x1x32xf32, #tpu.memory_space<vmem>>, %arg5: memref<4x2x32xf32, #tpu.memory_space<vmem>>, %arg6: memref<2x32xf32, #tpu.memory_space<vmem>>, %arg7: memref<2x32xf32, #tpu.memory_space<vmem>>, %arg8: memref<4x2x32xf32, #tpu.memory_space<vmem>>, %arg9: memref<4x2x32xf32, #tpu.memory_space<vmem>>, %arg10: memref<4x2x32xf32, #tpu.memory_space<vmem>>) attributes {dimension_semantics = [#tpu.dimension_semantics<parallel>, #tpu.dimension_semantics<arbitrary>], iteration_bounds = array<i64: 1, 2>, scalar_prefetch = 0 : i64, scratch_operands = 4 : i64, tpu.core_type = #tpu.core_type<tc>, window_params = [{transform_indices = @transform_0, window_bounds = array<i64: 4, 2, 32>}, {pipeline_mode = #tpu.pipeline_mode<synchronous>, transform_indices = @transform_1, window_bounds = array<i64: 3, 32, 32>}, {pipeline_mode = #tpu.pipeline_mode<synchronous>, transform_indices = @transform_2, window_bounds = array<i64: 3, 1, 32>}, {transform_indices = @transform_3, window_bounds = array<i64: 4, 2, 32>}, {transform_indices = @transform_4, window_bounds = array<i64: 2, 32>}]} {
    %c0_i32 = arith.constant 0 : i32
    %0 = arith.cmpi eq, %arg1, %c0_i32 : i32
    %1 = arith.extui %0 : i1 to i32
    %c0_i32_0 = arith.constant 0 : i32
    %2 = arith.cmpi ne, %1, %c0_i32_0 : i32
    scf.if %2 {
      %cst_82 = arith.constant 0.000000e+00 : f32
      %92 = vector.broadcast %cst_82 : f32 to vector<2x32xf32>
      %c0_83 = arith.constant 0 : index
      %c0_84 = arith.constant 0 : index
      %93 = vector.load %arg7[%c0_83, %c0_84] : memref<2x32xf32, #tpu.memory_space<vmem>>, vector<2x32xf32>
      tpu.vector_store %arg7[%c0_83, %c0_84], %92 {strides = array<i32>} : memref<2x32xf32, #tpu.memory_space<vmem>>, vector<2x32xf32>,
    } else {
    }
    %c0 = arith.constant 0 : index
    %c0_1 = arith.constant 0 : index
    %c0_2 = arith.constant 0 : index
    %3 = vector.load %arg2[%c0, %c0_1, %c0_2] : memref<4x2x32xf32, #tpu.memory_space<vmem>>, vector<4x2x32xf32>
    %4 = vector.shape_cast %3 : vector<4x2x32xf32> to vector<8x32xf32>
    %5 = arith.truncf %4 : vector<8x32xf32> to vector<8x32xbf16>
    %c0_3 = arith.constant 0 : index
    %c0_4 = arith.constant 0 : index
    %c0_5 = arith.constant 0 : index
    %6 = vector.load %arg3[%c0_3, %c0_4, %c0_5] : memref<3x32x32xbf16, #tpu.memory_space<vmem>>, vector<1x32x32xbf16>
    %7 = vector.shape_cast %6 : vector<1x32x32xbf16> to vector<32x32xbf16>
    %cst = arith.constant dense<0.000000e+00> : vector<8x32xf32>
    %8 = tpu.matmul %5, %7, %cst {dimension_numbers = #tpu.dot_dimension_numbers<[1], [0], [0], [1], [0, 0, 1, 1], [], []>} : vector<8x32xbf16>, vector<32x32xbf16>, vector<8x32xf32> -> vector<8x32xf32>
    %c0_6 = arith.constant 0 : index
    %c0_7 = arith.constant 0 : index
    %c0_8 = arith.constant 0 : index
    %9 = vector.load %arg4[%c0_6, %c0_7, %c0_8] : memref<3x1x32xf32, #tpu.memory_space<vmem>>, vector<1x1x32xf32>
    %10 = vector.shape_cast %9 : vector<1x1x32xf32> to vector<1x32xf32>
    %11 = vector.broadcast %10 : vector<1x32xf32> to vector<8x32xf32>
    %12 = arith.addf %8, %11 : vector<8x32xf32>
    %13 = math.tanh %12 : vector<8x32xf32>
    %c1 = arith.constant 1 : index
    %c0_9 = arith.constant 0 : index
    %c0_10 = arith.constant 0 : index
    %14 = vector.load %arg3[%c1, %c0_9, %c0_10] : memref<3x32x32xbf16, #tpu.memory_space<vmem>>, vector<1x32x32xbf16>
    %15 = vector.shape_cast %14 : vector<1x32x32xbf16> to vector<32x32xbf16>
    %cst_11 = arith.constant dense<0.000000e+00> : vector<8x32xf32>
    %16 = tpu.matmul %5, %15, %cst_11 {dimension_numbers = #tpu.dot_dimension_numbers<[1], [0], [0], [1], [0, 0, 1, 1], [], []>} : vector<8x32xbf16>, vector<32x32xbf16>, vector<8x32xf32> -> vector<8x32xf32>
    %c1_12 = arith.constant 1 : index
    %c0_13 = arith.constant 0 : index
    %c0_14 = arith.constant 0 : index
    %17 = vector.load %arg4[%c1_12, %c0_13, %c0_14] : memref<3x1x32xf32, #tpu.memory_space<vmem>>, vector<1x1x32xf32>
    %18 = vector.shape_cast %17 : vector<1x1x32xf32> to vector<1x32xf32>
    %19 = vector.broadcast %18 : vector<1x32xf32> to vector<8x32xf32>
    %20 = arith.addf %16, %19 : vector<8x32xf32>
    %21 = arith.negf %20 : vector<8x32xf32>
    %22 = math.exp %21 : vector<8x32xf32>
    %cst_15 = arith.constant 1.000000e+00 : f32
    %23 = vector.broadcast %cst_15 : f32 to vector<8x32xf32>
    %24 = arith.addf %23, %22 : vector<8x32xf32>
    %25 = arith.divf %23, %24 : vector<8x32xf32>
    %c2 = arith.constant 2 : index
    %c0_16 = arith.constant 0 : index
    %c0_17 = arith.constant 0 : index
    %26 = vector.load %arg3[%c2, %c0_16, %c0_17] : memref<3x32x32xbf16, #tpu.memory_space<vmem>>, vector<1x32x32xbf16>
    %27 = vector.shape_cast %26 : vector<1x32x32xbf16> to vector<32x32xbf16>
    %cst_18 = arith.constant dense<0.000000e+00> : vector<8x32xf32>
    %28 = tpu.matmul %5, %27, %cst_18 {dimension_numbers = #tpu.dot_dimension_numbers<[1], [0], [0], [1], [0, 0, 1, 1], [], []>} : vector<8x32xbf16>, vector<32x32xbf16>, vector<8x32xf32> -> vector<8x32xf32>
    %c2_19 = arith.constant 2 : index
    %c0_20 = arith.constant 0 : index
    %c0_21 = arith.constant 0 : index
    %29 = vector.load %arg4[%c2_19, %c0_20, %c0_21] : memref<3x1x32xf32, #tpu.memory_space<vmem>>, vector<1x1x32xf32>
    %30 = vector.shape_cast %29 : vector<1x1x32xf32> to vector<1x32xf32>
    %31 = vector.broadcast %30 : vector<1x32xf32> to vector<8x32xf32>
    %32 = arith.addf %28, %31 : vector<8x32xf32>
    %33 = arith.negf %32 : vector<8x32xf32>
    %34 = math.exp %33 : vector<8x32xf32>
    %cst_22 = arith.constant 1.000000e+00 : f32
    %35 = vector.broadcast %cst_22 : f32 to vector<8x32xf32>
    %36 = arith.addf %35, %34 : vector<8x32xf32>
    %37 = arith.divf %35, %36 : vector<8x32xf32>
    %38 = arith.mulf %25, %13 : vector<8x32xf32>
    %39 = vector.shape_cast %38 : vector<8x32xf32> to vector<4x2x32xf32>
    %c0_23 = arith.constant 0 : index
    %c0_24 = arith.constant 0 : index
    %c0_25 = arith.constant 0 : index
    %40 = vector.load %arg8[%c0_23, %c0_24, %c0_25] : memref<4x2x32xf32, #tpu.memory_space<vmem>>, vector<4x2x32xf32>
    tpu.vector_store %arg8[%c0_23, %c0_24, %c0_25], %39 {strides = array<i32>} : memref<4x2x32xf32, #tpu.memory_space<vmem>>, vector<4x2x32xf32>,
    %cst_26 = arith.constant 1.000000e+00 : f32
    %41 = vector.broadcast %cst_26 : f32 to vector<8x32xf32>
    %42 = arith.subf %41, %25 : vector<8x32xf32>
    %43 = vector.shape_cast %42 : vector<8x32xf32> to vector<4x2x32xf32>
    %c0_27 = arith.constant 0 : index
    %c0_28 = arith.constant 0 : index
    %c0_29 = arith.constant 0 : index
    %44 = vector.load %arg9[%c0_27, %c0_28, %c0_29] : memref<4x2x32xf32, #tpu.memory_space<vmem>>, vector<4x2x32xf32>
    tpu.vector_store %arg9[%c0_27, %c0_28, %c0_29], %43 {strides = array<i32>} : memref<4x2x32xf32, #tpu.memory_space<vmem>>, vector<4x2x32xf32>,
    %45 = vector.shape_cast %37 : vector<8x32xf32> to vector<4x2x32xf32>
    %c0_30 = arith.constant 0 : index
    %c0_31 = arith.constant 0 : index
    %c0_32 = arith.constant 0 : index
    %46 = vector.load %arg10[%c0_30, %c0_31, %c0_32] : memref<4x2x32xf32, #tpu.memory_space<vmem>>, vector<4x2x32xf32>
    tpu.vector_store %arg10[%c0_30, %c0_31, %c0_32], %45 {strides = array<i32>} : memref<4x2x32xf32, #tpu.memory_space<vmem>>, vector<4x2x32xf32>,
    %c0_33 = arith.constant 0 : index
    %c0_34 = arith.constant 0 : index
    %47 = vector.load %arg7[%c0_33, %c0_34] : memref<2x32xf32, #tpu.memory_space<vmem>>, vector<2x32xf32>
    %c0_35 = arith.constant 0 : index
    %c0_36 = arith.constant 0 : index
    %c0_37 = arith.constant 0 : index
    %48 = vector.load %arg8[%c0_35, %c0_36, %c0_37] : memref<4x2x32xf32, #tpu.memory_space<vmem>>, vector<1x2x32xf32>
    %49 = vector.shape_cast %48 : vector<1x2x32xf32> to vector<2x32xf32>
    %c0_38 = arith.constant 0 : index
    %c0_39 = arith.constant 0 : index
    %c0_40 = arith.constant 0 : index
    %50 = vector.load %arg9[%c0_38, %c0_39, %c0_40] : memref<4x2x32xf32, #tpu.memory_space<vmem>>, vector<1x2x32xf32>
    %51 = vector.shape_cast %50 : vector<1x2x32xf32> to vector<2x32xf32>
    %52 = arith.mulf %51, %47 : vector<2x32xf32>
    %53 = arith.addf %49, %52 : vector<2x32xf32>
    %c0_41 = arith.constant 0 : index
    %c0_42 = arith.constant 0 : index
    %c0_43 = arith.constant 0 : index
    %54 = vector.load %arg8[%c0_41, %c0_42, %c0_43] : memref<4x2x32xf32, #tpu.memory_space<vmem>>, vector<1x2x32xf32>
    %55 = vector.shape_cast %54 : vector<1x2x32xf32> to vector<2x32xf32>
    %56 = vector.shape_cast %53 : vector<2x32xf32> to vector<1x2x32xf32>
    tpu.vector_store %arg8[%c0_41, %c0_42, %c0_43], %56 {strides = array<i32>} : memref<4x2x32xf32, #tpu.memory_space<vmem>>, vector<1x2x32xf32>,
    %c1_44 = arith.constant 1 : index
    %c0_45 = arith.constant 0 : index
    %c0_46 = arith.constant 0 : index
    %57 = vector.load %arg8[%c1_44, %c0_45, %c0_46] : memref<4x2x32xf32, #tpu.memory_space<vmem>>, vector<1x2x32xf32>
    %58 = vector.shape_cast %57 : vector<1x2x32xf32> to vector<2x32xf32>
    %c1_47 = arith.constant 1 : index
    %c0_48 = arith.constant 0 : index
    %c0_49 = arith.constant 0 : index
    %59 = vector.load %arg9[%c1_47, %c0_48, %c0_49] : memref<4x2x32xf32, #tpu.memory_space<vmem>>, vector<1x2x32xf32>
    %60 = vector.shape_cast %59 : vector<1x2x32xf32> to vector<2x32xf32>
    %61 = arith.mulf %60, %53 : vector<2x32xf32>
    %62 = arith.addf %58, %61 : vector<2x32xf32>
    %c1_50 = arith.constant 1 : index
    %c0_51 = arith.constant 0 : index
    %c0_52 = arith.constant 0 : index
    %63 = vector.load %arg8[%c1_50, %c0_51, %c0_52] : memref<4x2x32xf32, #tpu.memory_space<vmem>>, vector<1x2x32xf32>
    %64 = vector.shape_cast %63 : vector<1x2x32xf32> to vector<2x32xf32>
    %65 = vector.shape_cast %62 : vector<2x32xf32> to vector<1x2x32xf32>
    tpu.vector_store %arg8[%c1_50, %c0_51, %c0_52], %65 {strides = array<i32>} : memref<4x2x32xf32, #tpu.memory_space<vmem>>, vector<1x2x32xf32>,
    %c2_53 = arith.constant 2 : index
    %c0_54 = arith.constant 0 : index
    %c0_55 = arith.constant 0 : index
    %66 = vector.load %arg8[%c2_53, %c0_54, %c0_55] : memref<4x2x32xf32, #tpu.memory_space<vmem>>, vector<1x2x32xf32>
    %67 = vector.shape_cast %66 : vector<1x2x32xf32> to vector<2x32xf32>
    %c2_56 = arith.constant 2 : index
    %c0_57 = arith.constant 0 : index
    %c0_58 = arith.constant 0 : index
    %68 = vector.load %arg9[%c2_56, %c0_57, %c0_58] : memref<4x2x32xf32, #tpu.memory_space<vmem>>, vector<1x2x32xf32>
    %69 = vector.shape_cast %68 : vector<1x2x32xf32> to vector<2x32xf32>
    %70 = arith.mulf %69, %62 : vector<2x32xf32>
    %71 = arith.addf %67, %70 : vector<2x32xf32>
    %c2_59 = arith.constant 2 : index
    %c0_60 = arith.constant 0 : index
    %c0_61 = arith.constant 0 : index
    %72 = vector.load %arg8[%c2_59, %c0_60, %c0_61] : memref<4x2x32xf32, #tpu.memory_space<vmem>>, vector<1x2x32xf32>
    %73 = vector.shape_cast %72 : vector<1x2x32xf32> to vector<2x32xf32>
    %74 = vector.shape_cast %71 : vector<2x32xf32> to vector<1x2x32xf32>
    tpu.vector_store %arg8[%c2_59, %c0_60, %c0_61], %74 {strides = array<i32>} : memref<4x2x32xf32, #tpu.memory_space<vmem>>, vector<1x2x32xf32>,
    %c3 = arith.constant 3 : index
    %c0_62 = arith.constant 0 : index
    %c0_63 = arith.constant 0 : index
    %75 = vector.load %arg8[%c3, %c0_62, %c0_63] : memref<4x2x32xf32, #tpu.memory_space<vmem>>, vector<1x2x32xf32>
    %76 = vector.shape_cast %75 : vector<1x2x32xf32> to vector<2x32xf32>
    %c3_64 = arith.constant 3 : index
    %c0_65 = arith.constant 0 : index
    %c0_66 = arith.constant 0 : index
    %77 = vector.load %arg9[%c3_64, %c0_65, %c0_66] : memref<4x2x32xf32, #tpu.memory_space<vmem>>, vector<1x2x32xf32>
    %78 = vector.shape_cast %77 : vector<1x2x32xf32> to vector<2x32xf32>
    %79 = arith.mulf %78, %71 : vector<2x32xf32>
    %80 = arith.addf %76, %79 : vector<2x32xf32>
    %c3_67 = arith.constant 3 : index
    %c0_68 = arith.constant 0 : index
    %c0_69 = arith.constant 0 : index
    %81 = vector.load %arg8[%c3_67, %c0_68, %c0_69] : memref<4x2x32xf32, #tpu.memory_space<vmem>>, vector<1x2x32xf32>
    %82 = vector.shape_cast %81 : vector<1x2x32xf32> to vector<2x32xf32>
    %83 = vector.shape_cast %80 : vector<2x32xf32> to vector<1x2x32xf32>
    tpu.vector_store %arg8[%c3_67, %c0_68, %c0_69], %83 {strides = array<i32>} : memref<4x2x32xf32, #tpu.memory_space<vmem>>, vector<1x2x32xf32>,
    %c0_70 = arith.constant 0 : index
    %c0_71 = arith.constant 0 : index
    %84 = vector.load %arg7[%c0_70, %c0_71] : memref<2x32xf32, #tpu.memory_space<vmem>>, vector<2x32xf32>
    tpu.vector_store %arg7[%c0_70, %c0_71], %80 {strides = array<i32>} : memref<2x32xf32, #tpu.memory_space<vmem>>, vector<2x32xf32>,
    %c0_72 = arith.constant 0 : index
    %c0_73 = arith.constant 0 : index
    %c0_74 = arith.constant 0 : index
    %85 = vector.load %arg10[%c0_72, %c0_73, %c0_74] : memref<4x2x32xf32, #tpu.memory_space<vmem>>, vector<4x2x32xf32>
    %c0_75 = arith.constant 0 : index
    %c0_76 = arith.constant 0 : index
    %c0_77 = arith.constant 0 : index
    %86 = vector.load %arg8[%c0_75, %c0_76, %c0_77] : memref<4x2x32xf32, #tpu.memory_space<vmem>>, vector<4x2x32xf32>
    %87 = arith.mulf %85, %86 : vector<4x2x32xf32>
    %c0_78 = arith.constant 0 : index
    %c0_79 = arith.constant 0 : index
    %c0_80 = arith.constant 0 : index
    %88 = vector.load %arg5[%c0_78, %c0_79, %c0_80] : memref<4x2x32xf32, #tpu.memory_space<vmem>>, vector<4x2x32xf32>
    tpu.vector_store %arg5[%c0_78, %c0_79, %c0_80], %87 {strides = array<i32>} : memref<4x2x32xf32, #tpu.memory_space<vmem>>, vector<4x2x32xf32>,
    %c1_i32 = arith.constant 1 : i32
    %89 = arith.cmpi eq, %arg1, %c1_i32 : i32
    %90 = arith.extui %89 : i1 to i32
    %c0_i32_81 = arith.constant 0 : i32
    %91 = arith.cmpi ne, %90, %c0_i32_81 : i32
    scf.if %91 {
      %c0_82 = arith.constant 0 : index
      %c0_83 = arith.constant 0 : index
      %92 = vector.load %arg6[%c0_82, %c0_83] : memref<2x32xf32, #tpu.memory_space<vmem>>, vector<2x32xf32>
      tpu.vector_store %arg6[%c0_82, %c0_83], %80 {strides = array<i32>} : memref<2x32xf32, #tpu.memory_space<vmem>>, vector<2x32xf32>,
    } else {
    }
    return
  }
  func.func @transform_0(%arg0: i32, %arg1: i32) -> (i32, i32, i32) {
    %c0_i32 = arith.constant 0 : i32
    %c0_i32_0 = arith.constant 0 : i32
    return %arg1, %arg0, %c0_i32 : i32, i32, i32
  }
  func.func @transform_1(%arg0: i32, %arg1: i32) -> (i32, i32, i32) {
    %c0_i32 = arith.constant 0 : i32
    %c0_i32_0 = arith.constant 0 : i32
    %c0_i32_1 = arith.constant 0 : i32
    %c0_i32_2 = arith.constant 0 : i32
    return %c0_i32, %c0_i32_0, %c0_i32_1 : i32, i32, i32
  }
  func.func @transform_2(%arg0: i32, %arg1: i32) -> (i32, i32, i32) {
    %c0_i32 = arith.constant 0 : i32
    %c0_i32_0 = arith.constant 0 : i32
    %c0_i32_1 = arith.constant 0 : i32
    %c0_i32_2 = arith.constant 0 : i32
    return %c0_i32, %c0_i32_0, %c0_i32_1 : i32, i32, i32
  }
  func.func @transform_3(%arg0: i32, %arg1: i32) -> (i32, i32, i32) {
    %c0_i32 = arith.constant 0 : i32
    %c0_i32_0 = arith.constant 0 : i32
    return %arg1, %arg0, %c0_i32 : i32, i32, i32
  }
  func.func @transform_4(%arg0: i32, %arg1: i32) -> (i32, i32) {
    %c0_i32 = arith.constant 0 : i32
    %c0_i32_0 = arith.constant 0 : i32
    return %arg0, %c0_i32 : i32, i32
  }
}

module attributes {stable_mosaic.version = 11 : i64} {
  func.func @qrnn_layer_kernel(%arg0: i32, %arg1: i32, %arg2: memref<4x2x16xf32, #tpu.memory_space<vmem>>, %arg3: memref<3x16x32xbf16, #tpu.memory_space<vmem>>, %arg4: memref<3x1x32xf32, #tpu.memory_space<vmem>>, %arg5: memref<4x2x32xf32, #tpu.memory_space<vmem>>, %arg6: memref<2x32xf32, #tpu.memory_space<vmem>>, %arg7: memref<2x32xf32, #tpu.memory_space<vmem>>, %arg8: memref<4x2x32xf32, #tpu.memory_space<vmem>>, %arg9: memref<4x2x32xf32, #tpu.memory_space<vmem>>, %arg10: memref<4x2x32xf32, #tpu.memory_space<vmem>>) attributes {dimension_semantics = [#tpu.dimension_semantics<parallel>, #tpu.dimension_semantics<arbitrary>], iteration_bounds = array<i64: 1, 2>, scalar_prefetch = 0 : i64, scratch_operands = 4 : i64, tpu.core_type = #tpu.core_type<tc>, window_params = [{transform_indices = @transform_0, window_bounds = array<i64: 4, 2, 16>}, {pipeline_mode = #tpu.pipeline_mode<synchronous>, transform_indices = @transform_1, window_bounds = array<i64: 3, 16, 32>}, {pipeline_mode = #tpu.pipeline_mode<synchronous>, transform_indices = @transform_2, window_bounds = array<i64: 3, 1, 32>}, {transform_indices = @transform_3, window_bounds = array<i64: 4, 2, 32>}, {transform_indices = @transform_4, window_bounds = array<i64: 2, 32>}]} {
    %c0_i32 = arith.constant 0 : i32
    %0 = arith.cmpi eq, %arg1, %c0_i32 : i32
    %1 = arith.extui %0 : i1 to i32
    %c0_i32_0 = arith.constant 0 : i32
    %2 = arith.cmpi ne, %1, %c0_i32_0 : i32
    scf.if %2 {
      %cst_82 = arith.constant 0.000000e+00 : f32
      %92 = vector.broadcast %cst_82 : f32 to vector<2x32xf32>
      %c0_83 = arith.constant 0 : index
      %c0_84 = arith.constant 0 : index
      %93 = vector.load %arg7[%c0_83, %c0_84] : memref<2x32xf32, #tpu.memory_space<vmem>>, vector<2x32xf32>
      tpu.vector_store %arg7[%c0_83, %c0_84], %92 {strides = array<i32>} : memref<2x32xf32, #tpu.memory_space<vmem>>, vector<2x32xf32>,
    } else {
    }
    %c0 = arith.constant 0 : index
    %c0_1 = arith.constant 0 : index
    %c0_2 = arith.constant 0 : index
    %3 = vector.load %arg2[%c0, %c0_1, %c0_2] : memref<4x2x16xf32, #tpu.memory_space<vmem>>, vector<4x2x16xf32>
    %4 = vector.shape_cast %3 : vector<4x2x16xf32> to vector<8x16xf32>
    %5 = arith.truncf %4 : vector<8x16xf32> to vector<8x16xbf16>
    %c0_3 = arith.constant 0 : index
    %c0_4 = arith.constant 0 : index
    %c0_5 = arith.constant 0 : index
    %6 = vector.load %arg3[%c0_3, %c0_4, %c0_5] : memref<3x16x32xbf16, #tpu.memory_space<vmem>>, vector<1x16x32xbf16>
    %7 = vector.shape_cast %6 : vector<1x16x32xbf16> to vector<16x32xbf16>
    %cst = arith.constant dense<0.000000e+00> : vector<8x32xf32>
    %8 = tpu.matmul %5, %7, %cst {dimension_numbers = #tpu.dot_dimension_numbers<[1], [0], [0], [1], [0, 0, 1, 1], [], []>} : vector<8x16xbf16>, vector<16x32xbf16>, vector<8x32xf32> -> vector<8x32xf32>
    %c0_6 = arith.constant 0 : index
    %c0_7 = arith.constant 0 : index
    %c0_8 = arith.constant 0 : index
    %9 = vector.load %arg4[%c0_6, %c0_7, %c0_8] : memref<3x1x32xf32, #tpu.memory_space<vmem>>, vector<1x1x32xf32>
    %10 = vector.shape_cast %9 : vector<1x1x32xf32> to vector<1x32xf32>
    %11 = vector.broadcast %10 : vector<1x32xf32> to vector<8x32xf32>
    %12 = arith.addf %8, %11 : vector<8x32xf32>
    %13 = math.tanh %12 : vector<8x32xf32>
    %c1 = arith.constant 1 : index
    %c0_9 = arith.constant 0 : index
    %c0_10 = arith.constant 0 : index
    %14 = vector.load %arg3[%c1, %c0_9, %c0_10] : memref<3x16x32xbf16, #tpu.memory_space<vmem>>, vector<1x16x32xbf16>
    %15 = vector.shape_cast %14 : vector<1x16x32xbf16> to vector<16x32xbf16>
    %cst_11 = arith.constant dense<0.000000e+00> : vector<8x32xf32>
    %16 = tpu.matmul %5, %15, %cst_11 {dimension_numbers = #tpu.dot_dimension_numbers<[1], [0], [0], [1], [0, 0, 1, 1], [], []>} : vector<8x16xbf16>, vector<16x32xbf16>, vector<8x32xf32> -> vector<8x32xf32>
    %c1_12 = arith.constant 1 : index
    %c0_13 = arith.constant 0 : index
    %c0_14 = arith.constant 0 : index
    %17 = vector.load %arg4[%c1_12, %c0_13, %c0_14] : memref<3x1x32xf32, #tpu.memory_space<vmem>>, vector<1x1x32xf32>
    %18 = vector.shape_cast %17 : vector<1x1x32xf32> to vector<1x32xf32>
    %19 = vector.broadcast %18 : vector<1x32xf32> to vector<8x32xf32>
    %20 = arith.addf %16, %19 : vector<8x32xf32>
    %21 = arith.negf %20 : vector<8x32xf32>
    %22 = math.exp %21 : vector<8x32xf32>
    %cst_15 = arith.constant 1.000000e+00 : f32
    %23 = vector.broadcast %cst_15 : f32 to vector<8x32xf32>
    %24 = arith.addf %23, %22 : vector<8x32xf32>
    %25 = arith.divf %23, %24 : vector<8x32xf32>
    %c2 = arith.constant 2 : index
    %c0_16 = arith.constant 0 : index
    %c0_17 = arith.constant 0 : index
    %26 = vector.load %arg3[%c2, %c0_16, %c0_17] : memref<3x16x32xbf16, #tpu.memory_space<vmem>>, vector<1x16x32xbf16>
    %27 = vector.shape_cast %26 : vector<1x16x32xbf16> to vector<16x32xbf16>
    %cst_18 = arith.constant dense<0.000000e+00> : vector<8x32xf32>
    %28 = tpu.matmul %5, %27, %cst_18 {dimension_numbers = #tpu.dot_dimension_numbers<[1], [0], [0], [1], [0, 0, 1, 1], [], []>} : vector<8x16xbf16>, vector<16x32xbf16>, vector<8x32xf32> -> vector<8x32xf32>
    %c2_19 = arith.constant 2 : index
    %c0_20 = arith.constant 0 : index
    %c0_21 = arith.constant 0 : index
    %29 = vector.load %arg4[%c2_19, %c0_20, %c0_21] : memref<3x1x32xf32, #tpu.memory_space<vmem>>, vector<1x1x32xf32>
    %30 = vector.shape_cast %29 : vector<1x1x32xf32> to vector<1x32xf32>
    %31 = vector.broadcast %30 : vector<1x32xf32> to vector<8x32xf32>
    %32 = arith.addf %28, %31 : vector<8x32xf32>
    %33 = arith.negf %32 : vector<8x32xf32>
    %34 = math.exp %33 : vector<8x32xf32>
    %cst_22 = arith.constant 1.000000e+00 : f32
    %35 = vector.broadcast %cst_22 : f32 to vector<8x32xf32>
    %36 = arith.addf %35, %34 : vector<8x32xf32>
    %37 = arith.divf %35, %36 : vector<8x32xf32>
    %38 = arith.mulf %25, %13 : vector<8x32xf32>
    %39 = vector.shape_cast %38 : vector<8x32xf32> to vector<4x2x32xf32>
    %c0_23 = arith.constant 0 : index
    %c0_24 = arith.constant 0 : index
    %c0_25 = arith.constant 0 : index
    %40 = vector.load %arg8[%c0_23, %c0_24, %c0_25] : memref<4x2x32xf32, #tpu.memory_space<vmem>>, vector<4x2x32xf32>
    tpu.vector_store %arg8[%c0_23, %c0_24, %c0_25], %39 {strides = array<i32>} : memref<4x2x32xf32, #tpu.memory_space<vmem>>, vector<4x2x32xf32>,
    %cst_26 = arith.constant 1.000000e+00 : f32
    %41 = vector.broadcast %cst_26 : f32 to vector<8x32xf32>
    %42 = arith.subf %41, %25 : vector<8x32xf32>
    %43 = vector.shape_cast %42 : vector<8x32xf32> to vector<4x2x32xf32>
    %c0_27 = arith.constant 0 : index
    %c0_28 = arith.constant 0 : index
    %c0_29 = arith.constant 0 : index
    %44 = vector.load %arg9[%c0_27, %c0_28, %c0_29] : memref<4x2x32xf32, #tpu.memory_space<vmem>>, vector<4x2x32xf32>
    tpu.vector_store %arg9[%c0_27, %c0_28, %c0_29], %43 {strides = array<i32>} : memref<4x2x32xf32, #tpu.memory_space<vmem>>, vector<4x2x32xf32>,
    %45 = vector.shape_cast %37 : vector<8x32xf32> to vector<4x2x32xf32>
    %c0_30 = arith.constant 0 : index
    %c0_31 = arith.constant 0 : index
    %c0_32 = arith.constant 0 : index
    %46 = vector.load %arg10[%c0_30, %c0_31, %c0_32] : memref<4x2x32xf32, #tpu.memory_space<vmem>>, vector<4x2x32xf32>
    tpu.vector_store %arg10[%c0_30, %c0_31, %c0_32], %45 {strides = array<i32>} : memref<4x2x32xf32, #tpu.memory_space<vmem>>, vector<4x2x32xf32>,
    %c0_33 = arith.constant 0 : index
    %c0_34 = arith.constant 0 : index
    %47 = vector.load %arg7[%c0_33, %c0_34] : memref<2x32xf32, #tpu.memory_space<vmem>>, vector<2x32xf32>
    %c0_35 = arith.constant 0 : index
    %c0_36 = arith.constant 0 : index
    %c0_37 = arith.constant 0 : index
    %48 = vector.load %arg8[%c0_35, %c0_36, %c0_37] : memref<4x2x32xf32, #tpu.memory_space<vmem>>, vector<1x2x32xf32>
    %49 = vector.shape_cast %48 : vector<1x2x32xf32> to vector<2x32xf32>
    %c0_38 = arith.constant 0 : index
    %c0_39 = arith.constant 0 : index
    %c0_40 = arith.constant 0 : index
    %50 = vector.load %arg9[%c0_38, %c0_39, %c0_40] : memref<4x2x32xf32, #tpu.memory_space<vmem>>, vector<1x2x32xf32>
    %51 = vector.shape_cast %50 : vector<1x2x32xf32> to vector<2x32xf32>
    %52 = arith.mulf %51, %47 : vector<2x32xf32>
    %53 = arith.addf %49, %52 : vector<2x32xf32>
    %c0_41 = arith.constant 0 : index
    %c0_42 = arith.constant 0 : index
    %c0_43 = arith.constant 0 : index
    %54 = vector.load %arg8[%c0_41, %c0_42, %c0_43] : memref<4x2x32xf32, #tpu.memory_space<vmem>>, vector<1x2x32xf32>
    %55 = vector.shape_cast %54 : vector<1x2x32xf32> to vector<2x32xf32>
    %56 = vector.shape_cast %53 : vector<2x32xf32> to vector<1x2x32xf32>
    tpu.vector_store %arg8[%c0_41, %c0_42, %c0_43], %56 {strides = array<i32>} : memref<4x2x32xf32, #tpu.memory_space<vmem>>, vector<1x2x32xf32>,
    %c1_44 = arith.constant 1 : index
    %c0_45 = arith.constant 0 : index
    %c0_46 = arith.constant 0 : index
    %57 = vector.load %arg8[%c1_44, %c0_45, %c0_46] : memref<4x2x32xf32, #tpu.memory_space<vmem>>, vector<1x2x32xf32>
    %58 = vector.shape_cast %57 : vector<1x2x32xf32> to vector<2x32xf32>
    %c1_47 = arith.constant 1 : index
    %c0_48 = arith.constant 0 : index
    %c0_49 = arith.constant 0 : index
    %59 = vector.load %arg9[%c1_47, %c0_48, %c0_49] : memref<4x2x32xf32, #tpu.memory_space<vmem>>, vector<1x2x32xf32>
    %60 = vector.shape_cast %59 : vector<1x2x32xf32> to vector<2x32xf32>
    %61 = arith.mulf %60, %53 : vector<2x32xf32>
    %62 = arith.addf %58, %61 : vector<2x32xf32>
    %c1_50 = arith.constant 1 : index
    %c0_51 = arith.constant 0 : index
    %c0_52 = arith.constant 0 : index
    %63 = vector.load %arg8[%c1_50, %c0_51, %c0_52] : memref<4x2x32xf32, #tpu.memory_space<vmem>>, vector<1x2x32xf32>
    %64 = vector.shape_cast %63 : vector<1x2x32xf32> to vector<2x32xf32>
    %65 = vector.shape_cast %62 : vector<2x32xf32> to vector<1x2x32xf32>
    tpu.vector_store %arg8[%c1_50, %c0_51, %c0_52], %65 {strides = array<i32>} : memref<4x2x32xf32, #tpu.memory_space<vmem>>, vector<1x2x32xf32>,
    %c2_53 = arith.constant 2 : index
    %c0_54 = arith.constant 0 : index
    %c0_55 = arith.constant 0 : index
    %66 = vector.load %arg8[%c2_53, %c0_54, %c0_55] : memref<4x2x32xf32, #tpu.memory_space<vmem>>, vector<1x2x32xf32>
    %67 = vector.shape_cast %66 : vector<1x2x32xf32> to vector<2x32xf32>
    %c2_56 = arith.constant 2 : index
    %c0_57 = arith.constant 0 : index
    %c0_58 = arith.constant 0 : index
    %68 = vector.load %arg9[%c2_56, %c0_57, %c0_58] : memref<4x2x32xf32, #tpu.memory_space<vmem>>, vector<1x2x32xf32>
    %69 = vector.shape_cast %68 : vector<1x2x32xf32> to vector<2x32xf32>
    %70 = arith.mulf %69, %62 : vector<2x32xf32>
    %71 = arith.addf %67, %70 : vector<2x32xf32>
    %c2_59 = arith.constant 2 : index
    %c0_60 = arith.constant 0 : index
    %c0_61 = arith.constant 0 : index
    %72 = vector.load %arg8[%c2_59, %c0_60, %c0_61] : memref<4x2x32xf32, #tpu.memory_space<vmem>>, vector<1x2x32xf32>
    %73 = vector.shape_cast %72 : vector<1x2x32xf32> to vector<2x32xf32>
    %74 = vector.shape_cast %71 : vector<2x32xf32> to vector<1x2x32xf32>
    tpu.vector_store %arg8[%c2_59, %c0_60, %c0_61], %74 {strides = array<i32>} : memref<4x2x32xf32, #tpu.memory_space<vmem>>, vector<1x2x32xf32>,
    %c3 = arith.constant 3 : index
    %c0_62 = arith.constant 0 : index
    %c0_63 = arith.constant 0 : index
    %75 = vector.load %arg8[%c3, %c0_62, %c0_63] : memref<4x2x32xf32, #tpu.memory_space<vmem>>, vector<1x2x32xf32>
    %76 = vector.shape_cast %75 : vector<1x2x32xf32> to vector<2x32xf32>
    %c3_64 = arith.constant 3 : index
    %c0_65 = arith.constant 0 : index
    %c0_66 = arith.constant 0 : index
    %77 = vector.load %arg9[%c3_64, %c0_65, %c0_66] : memref<4x2x32xf32, #tpu.memory_space<vmem>>, vector<1x2x32xf32>
    %78 = vector.shape_cast %77 : vector<1x2x32xf32> to vector<2x32xf32>
    %79 = arith.mulf %78, %71 : vector<2x32xf32>
    %80 = arith.addf %76, %79 : vector<2x32xf32>
    %c3_67 = arith.constant 3 : index
    %c0_68 = arith.constant 0 : index
    %c0_69 = arith.constant 0 : index
    %81 = vector.load %arg8[%c3_67, %c0_68, %c0_69] : memref<4x2x32xf32, #tpu.memory_space<vmem>>, vector<1x2x32xf32>
    %82 = vector.shape_cast %81 : vector<1x2x32xf32> to vector<2x32xf32>
    %83 = vector.shape_cast %80 : vector<2x32xf32> to vector<1x2x32xf32>
    tpu.vector_store %arg8[%c3_67, %c0_68, %c0_69], %83 {strides = array<i32>} : memref<4x2x32xf32, #tpu.memory_space<vmem>>, vector<1x2x32xf32>,
    %c0_70 = arith.constant 0 : index
    %c0_71 = arith.constant 0 : index
    %84 = vector.load %arg7[%c0_70, %c0_71] : memref<2x32xf32, #tpu.memory_space<vmem>>, vector<2x32xf32>
    tpu.vector_store %arg7[%c0_70, %c0_71], %80 {strides = array<i32>} : memref<2x32xf32, #tpu.memory_space<vmem>>, vector<2x32xf32>,
    %c0_72 = arith.constant 0 : index
    %c0_73 = arith.constant 0 : index
    %c0_74 = arith.constant 0 : index
    %85 = vector.load %arg10[%c0_72, %c0_73, %c0_74] : memref<4x2x32xf32, #tpu.memory_space<vmem>>, vector<4x2x32xf32>
    %c0_75 = arith.constant 0 : index
    %c0_76 = arith.constant 0 : index
    %c0_77 = arith.constant 0 : index
    %86 = vector.load %arg8[%c0_75, %c0_76, %c0_77] : memref<4x2x32xf32, #tpu.memory_space<vmem>>, vector<4x2x32xf32>
    %87 = arith.mulf %85, %86 : vector<4x2x32xf32>
    %c0_78 = arith.constant 0 : index
    %c0_79 = arith.constant 0 : index
    %c0_80 = arith.constant 0 : index
    %88 = vector.load %arg5[%c0_78, %c0_79, %c0_80] : memref<4x2x32xf32, #tpu.memory_space<vmem>>, vector<4x2x32xf32>
    tpu.vector_store %arg5[%c0_78, %c0_79, %c0_80], %87 {strides = array<i32>} : memref<4x2x32xf32, #tpu.memory_space<vmem>>, vector<4x2x32xf32>,
    %c1_i32 = arith.constant 1 : i32
    %89 = arith.cmpi eq, %arg1, %c1_i32 : i32
    %90 = arith.extui %89 : i1 to i32
    %c0_i32_81 = arith.constant 0 : i32
    %91 = arith.cmpi ne, %90, %c0_i32_81 : i32
    scf.if %91 {
      %c0_82 = arith.constant 0 : index
      %c0_83 = arith.constant 0 : index
      %92 = vector.load %arg6[%c0_82, %c0_83] : memref<2x32xf32, #tpu.memory_space<vmem>>, vector<2x32xf32>
      tpu.vector_store %arg6[%c0_82, %c0_83], %80 {strides = array<i32>} : memref<2x32xf32, #tpu.memory_space<vmem>>, vector<2x32xf32>,
    } else {
    }
    return
  }
  func.func @transform_0(%arg0: i32, %arg1: i32) -> (i32, i32, i32) {
    %c0_i32 = arith.constant 0 : i32
    %c0_i32_0 = arith.constant 0 : i32
    return %arg1, %arg0, %c0_i32 : i32, i32, i32
  }
  func.func @transform_1(%arg0: i32, %arg1: i32) -> (i32, i32, i32) {
    %c0_i32 = arith.constant 0 : i32
    %c0_i32_0 = arith.constant 0 : i32
    %c0_i32_1 = arith.constant 0 : i32
    %c0_i32_2 = arith.constant 0 : i32
    return %c0_i32, %c0_i32_0, %c0_i32_1 : i32, i32, i32
  }
  func.func @transform_2(%arg0: i32, %arg1: i32) -> (i32, i32, i32) {
    %c0_i32 = arith.constant 0 : i32
    %c0_i32_0 = arith.constant 0 : i32
    %c0_i32_1 = arith.constant 0 : i32
    %c0_i32_2 = arith.constant 0 : i32
    return %c0_i32, %c0_i32_0, %c0_i32_1 : i32, i32, i32
  }
  func.func @transform_3(%arg0: i32, %arg1: i32) -> (i32, i32, i32) {
    %c0_i32 = arith.constant 0 : i32
    %c0_i32_0 = arith.constant 0 : i32
    return %arg1, %arg0, %c0_i32 : i32, i32, i32
  }
  func.func @transform_4(%arg0: i32, %arg1: i32) -> (i32, i32) {
    %c0_i32 = arith.constant 0 : i32
    %c0_i32_0 = arith.constant 0 : i32
    return %arg0, %c0_i32 : i32, i32
  }
}

module attributes {stable_mosaic.version = 11 : i64} {
  func.func @qrnn_layer_kernel(%arg0: i32, %arg1: i32, %arg2: memref<4x2x32xf32, #tpu.memory_space<vmem>>, %arg3: memref<3x32x32xbf16, #tpu.memory_space<vmem>>, %arg4: memref<3x1x32xf32, #tpu.memory_space<vmem>>, %arg5: memref<4x2x32xf32, #tpu.memory_space<vmem>>, %arg6: memref<2x32xf32, #tpu.memory_space<vmem>>, %arg7: memref<2x32xf32, #tpu.memory_space<vmem>>, %arg8: memref<4x2x32xf32, #tpu.memory_space<vmem>>, %arg9: memref<4x2x32xf32, #tpu.memory_space<vmem>>, %arg10: memref<4x2x32xf32, #tpu.memory_space<vmem>>) attributes {dimension_semantics = [#tpu.dimension_semantics<parallel>, #tpu.dimension_semantics<arbitrary>], iteration_bounds = array<i64: 1, 2>, scalar_prefetch = 0 : i64, scratch_operands = 4 : i64, tpu.core_type = #tpu.core_type<tc>, window_params = [{transform_indices = @transform_0, window_bounds = array<i64: 4, 2, 32>}, {pipeline_mode = #tpu.pipeline_mode<synchronous>, transform_indices = @transform_1, window_bounds = array<i64: 3, 32, 32>}, {pipeline_mode = #tpu.pipeline_mode<synchronous>, transform_indices = @transform_2, window_bounds = array<i64: 3, 1, 32>}, {transform_indices = @transform_3, window_bounds = array<i64: 4, 2, 32>}, {transform_indices = @transform_4, window_bounds = array<i64: 2, 32>}]} {
    %c0_i32 = arith.constant 0 : i32
    %0 = arith.cmpi eq, %arg1, %c0_i32 : i32
    %1 = arith.extui %0 : i1 to i32
    %c0_i32_0 = arith.constant 0 : i32
    %2 = arith.cmpi ne, %1, %c0_i32_0 : i32
    scf.if %2 {
      %cst_82 = arith.constant 0.000000e+00 : f32
      %92 = vector.broadcast %cst_82 : f32 to vector<2x32xf32>
      %c0_83 = arith.constant 0 : index
      %c0_84 = arith.constant 0 : index
      %93 = vector.load %arg7[%c0_83, %c0_84] : memref<2x32xf32, #tpu.memory_space<vmem>>, vector<2x32xf32>
      tpu.vector_store %arg7[%c0_83, %c0_84], %92 {strides = array<i32>} : memref<2x32xf32, #tpu.memory_space<vmem>>, vector<2x32xf32>,
    } else {
    }
    %c0 = arith.constant 0 : index
    %c0_1 = arith.constant 0 : index
    %c0_2 = arith.constant 0 : index
    %3 = vector.load %arg2[%c0, %c0_1, %c0_2] : memref<4x2x32xf32, #tpu.memory_space<vmem>>, vector<4x2x32xf32>
    %4 = vector.shape_cast %3 : vector<4x2x32xf32> to vector<8x32xf32>
    %5 = arith.truncf %4 : vector<8x32xf32> to vector<8x32xbf16>
    %c0_3 = arith.constant 0 : index
    %c0_4 = arith.constant 0 : index
    %c0_5 = arith.constant 0 : index
    %6 = vector.load %arg3[%c0_3, %c0_4, %c0_5] : memref<3x32x32xbf16, #tpu.memory_space<vmem>>, vector<1x32x32xbf16>
    %7 = vector.shape_cast %6 : vector<1x32x32xbf16> to vector<32x32xbf16>
    %cst = arith.constant dense<0.000000e+00> : vector<8x32xf32>
    %8 = tpu.matmul %5, %7, %cst {dimension_numbers = #tpu.dot_dimension_numbers<[1], [0], [0], [1], [0, 0, 1, 1], [], []>} : vector<8x32xbf16>, vector<32x32xbf16>, vector<8x32xf32> -> vector<8x32xf32>
    %c0_6 = arith.constant 0 : index
    %c0_7 = arith.constant 0 : index
    %c0_8 = arith.constant 0 : index
    %9 = vector.load %arg4[%c0_6, %c0_7, %c0_8] : memref<3x1x32xf32, #tpu.memory_space<vmem>>, vector<1x1x32xf32>
    %10 = vector.shape_cast %9 : vector<1x1x32xf32> to vector<1x32xf32>
    %11 = vector.broadcast %10 : vector<1x32xf32> to vector<8x32xf32>
    %12 = arith.addf %8, %11 : vector<8x32xf32>
    %13 = math.tanh %12 : vector<8x32xf32>
    %c1 = arith.constant 1 : index
    %c0_9 = arith.constant 0 : index
    %c0_10 = arith.constant 0 : index
    %14 = vector.load %arg3[%c1, %c0_9, %c0_10] : memref<3x32x32xbf16, #tpu.memory_space<vmem>>, vector<1x32x32xbf16>
    %15 = vector.shape_cast %14 : vector<1x32x32xbf16> to vector<32x32xbf16>
    %cst_11 = arith.constant dense<0.000000e+00> : vector<8x32xf32>
    %16 = tpu.matmul %5, %15, %cst_11 {dimension_numbers = #tpu.dot_dimension_numbers<[1], [0], [0], [1], [0, 0, 1, 1], [], []>} : vector<8x32xbf16>, vector<32x32xbf16>, vector<8x32xf32> -> vector<8x32xf32>
    %c1_12 = arith.constant 1 : index
    %c0_13 = arith.constant 0 : index
    %c0_14 = arith.constant 0 : index
    %17 = vector.load %arg4[%c1_12, %c0_13, %c0_14] : memref<3x1x32xf32, #tpu.memory_space<vmem>>, vector<1x1x32xf32>
    %18 = vector.shape_cast %17 : vector<1x1x32xf32> to vector<1x32xf32>
    %19 = vector.broadcast %18 : vector<1x32xf32> to vector<8x32xf32>
    %20 = arith.addf %16, %19 : vector<8x32xf32>
    %21 = arith.negf %20 : vector<8x32xf32>
    %22 = math.exp %21 : vector<8x32xf32>
    %cst_15 = arith.constant 1.000000e+00 : f32
    %23 = vector.broadcast %cst_15 : f32 to vector<8x32xf32>
    %24 = arith.addf %23, %22 : vector<8x32xf32>
    %25 = arith.divf %23, %24 : vector<8x32xf32>
    %c2 = arith.constant 2 : index
    %c0_16 = arith.constant 0 : index
    %c0_17 = arith.constant 0 : index
    %26 = vector.load %arg3[%c2, %c0_16, %c0_17] : memref<3x32x32xbf16, #tpu.memory_space<vmem>>, vector<1x32x32xbf16>
    %27 = vector.shape_cast %26 : vector<1x32x32xbf16> to vector<32x32xbf16>
    %cst_18 = arith.constant dense<0.000000e+00> : vector<8x32xf32>
    %28 = tpu.matmul %5, %27, %cst_18 {dimension_numbers = #tpu.dot_dimension_numbers<[1], [0], [0], [1], [0, 0, 1, 1], [], []>} : vector<8x32xbf16>, vector<32x32xbf16>, vector<8x32xf32> -> vector<8x32xf32>
    %c2_19 = arith.constant 2 : index
    %c0_20 = arith.constant 0 : index
    %c0_21 = arith.constant 0 : index
    %29 = vector.load %arg4[%c2_19, %c0_20, %c0_21] : memref<3x1x32xf32, #tpu.memory_space<vmem>>, vector<1x1x32xf32>
    %30 = vector.shape_cast %29 : vector<1x1x32xf32> to vector<1x32xf32>
    %31 = vector.broadcast %30 : vector<1x32xf32> to vector<8x32xf32>
    %32 = arith.addf %28, %31 : vector<8x32xf32>
    %33 = arith.negf %32 : vector<8x32xf32>
    %34 = math.exp %33 : vector<8x32xf32>
    %cst_22 = arith.constant 1.000000e+00 : f32
    %35 = vector.broadcast %cst_22 : f32 to vector<8x32xf32>
    %36 = arith.addf %35, %34 : vector<8x32xf32>
    %37 = arith.divf %35, %36 : vector<8x32xf32>
    %38 = arith.mulf %25, %13 : vector<8x32xf32>
    %39 = vector.shape_cast %38 : vector<8x32xf32> to vector<4x2x32xf32>
    %c0_23 = arith.constant 0 : index
    %c0_24 = arith.constant 0 : index
    %c0_25 = arith.constant 0 : index
    %40 = vector.load %arg8[%c0_23, %c0_24, %c0_25] : memref<4x2x32xf32, #tpu.memory_space<vmem>>, vector<4x2x32xf32>
    tpu.vector_store %arg8[%c0_23, %c0_24, %c0_25], %39 {strides = array<i32>} : memref<4x2x32xf32, #tpu.memory_space<vmem>>, vector<4x2x32xf32>,
    %cst_26 = arith.constant 1.000000e+00 : f32
    %41 = vector.broadcast %cst_26 : f32 to vector<8x32xf32>
    %42 = arith.subf %41, %25 : vector<8x32xf32>
    %43 = vector.shape_cast %42 : vector<8x32xf32> to vector<4x2x32xf32>
    %c0_27 = arith.constant 0 : index
    %c0_28 = arith.constant 0 : index
    %c0_29 = arith.constant 0 : index
    %44 = vector.load %arg9[%c0_27, %c0_28, %c0_29] : memref<4x2x32xf32, #tpu.memory_space<vmem>>, vector<4x2x32xf32>
    tpu.vector_store %arg9[%c0_27, %c0_28, %c0_29], %43 {strides = array<i32>} : memref<4x2x32xf32, #tpu.memory_space<vmem>>, vector<4x2x32xf32>,
    %45 = vector.shape_cast %37 : vector<8x32xf32> to vector<4x2x32xf32>
    %c0_30 = arith.constant 0 : index
    %c0_31 = arith.constant 0 : index
    %c0_32 = arith.constant 0 : index
    %46 = vector.load %arg10[%c0_30, %c0_31, %c0_32] : memref<4x2x32xf32, #tpu.memory_space<vmem>>, vector<4x2x32xf32>
    tpu.vector_store %arg10[%c0_30, %c0_31, %c0_32], %45 {strides = array<i32>} : memref<4x2x32xf32, #tpu.memory_space<vmem>>, vector<4x2x32xf32>,
    %c0_33 = arith.constant 0 : index
    %c0_34 = arith.constant 0 : index
    %47 = vector.load %arg7[%c0_33, %c0_34] : memref<2x32xf32, #tpu.memory_space<vmem>>, vector<2x32xf32>
    %c0_35 = arith.constant 0 : index
    %c0_36 = arith.constant 0 : index
    %c0_37 = arith.constant 0 : index
    %48 = vector.load %arg8[%c0_35, %c0_36, %c0_37] : memref<4x2x32xf32, #tpu.memory_space<vmem>>, vector<1x2x32xf32>
    %49 = vector.shape_cast %48 : vector<1x2x32xf32> to vector<2x32xf32>
    %c0_38 = arith.constant 0 : index
    %c0_39 = arith.constant 0 : index
    %c0_40 = arith.constant 0 : index
    %50 = vector.load %arg9[%c0_38, %c0_39, %c0_40] : memref<4x2x32xf32, #tpu.memory_space<vmem>>, vector<1x2x32xf32>
    %51 = vector.shape_cast %50 : vector<1x2x32xf32> to vector<2x32xf32>
    %52 = arith.mulf %51, %47 : vector<2x32xf32>
    %53 = arith.addf %49, %52 : vector<2x32xf32>
    %c0_41 = arith.constant 0 : index
    %c0_42 = arith.constant 0 : index
    %c0_43 = arith.constant 0 : index
    %54 = vector.load %arg8[%c0_41, %c0_42, %c0_43] : memref<4x2x32xf32, #tpu.memory_space<vmem>>, vector<1x2x32xf32>
    %55 = vector.shape_cast %54 : vector<1x2x32xf32> to vector<2x32xf32>
    %56 = vector.shape_cast %53 : vector<2x32xf32> to vector<1x2x32xf32>
    tpu.vector_store %arg8[%c0_41, %c0_42, %c0_43], %56 {strides = array<i32>} : memref<4x2x32xf32, #tpu.memory_space<vmem>>, vector<1x2x32xf32>,
    %c1_44 = arith.constant 1 : index
    %c0_45 = arith.constant 0 : index
    %c0_46 = arith.constant 0 : index
    %57 = vector.load %arg8[%c1_44, %c0_45, %c0_46] : memref<4x2x32xf32, #tpu.memory_space<vmem>>, vector<1x2x32xf32>
    %58 = vector.shape_cast %57 : vector<1x2x32xf32> to vector<2x32xf32>
    %c1_47 = arith.constant 1 : index
    %c0_48 = arith.constant 0 : index
    %c0_49 = arith.constant 0 : index
    %59 = vector.load %arg9[%c1_47, %c0_48, %c0_49] : memref<4x2x32xf32, #tpu.memory_space<vmem>>, vector<1x2x32xf32>
    %60 = vector.shape_cast %59 : vector<1x2x32xf32> to vector<2x32xf32>
    %61 = arith.mulf %60, %53 : vector<2x32xf32>
    %62 = arith.addf %58, %61 : vector<2x32xf32>
    %c1_50 = arith.constant 1 : index
    %c0_51 = arith.constant 0 : index
    %c0_52 = arith.constant 0 : index
    %63 = vector.load %arg8[%c1_50, %c0_51, %c0_52] : memref<4x2x32xf32, #tpu.memory_space<vmem>>, vector<1x2x32xf32>
    %64 = vector.shape_cast %63 : vector<1x2x32xf32> to vector<2x32xf32>
    %65 = vector.shape_cast %62 : vector<2x32xf32> to vector<1x2x32xf32>
    tpu.vector_store %arg8[%c1_50, %c0_51, %c0_52], %65 {strides = array<i32>} : memref<4x2x32xf32, #tpu.memory_space<vmem>>, vector<1x2x32xf32>,
    %c2_53 = arith.constant 2 : index
    %c0_54 = arith.constant 0 : index
    %c0_55 = arith.constant 0 : index
    %66 = vector.load %arg8[%c2_53, %c0_54, %c0_55] : memref<4x2x32xf32, #tpu.memory_space<vmem>>, vector<1x2x32xf32>
    %67 = vector.shape_cast %66 : vector<1x2x32xf32> to vector<2x32xf32>
    %c2_56 = arith.constant 2 : index
    %c0_57 = arith.constant 0 : index
    %c0_58 = arith.constant 0 : index
    %68 = vector.load %arg9[%c2_56, %c0_57, %c0_58] : memref<4x2x32xf32, #tpu.memory_space<vmem>>, vector<1x2x32xf32>
    %69 = vector.shape_cast %68 : vector<1x2x32xf32> to vector<2x32xf32>
    %70 = arith.mulf %69, %62 : vector<2x32xf32>
    %71 = arith.addf %67, %70 : vector<2x32xf32>
    %c2_59 = arith.constant 2 : index
    %c0_60 = arith.constant 0 : index
    %c0_61 = arith.constant 0 : index
    %72 = vector.load %arg8[%c2_59, %c0_60, %c0_61] : memref<4x2x32xf32, #tpu.memory_space<vmem>>, vector<1x2x32xf32>
    %73 = vector.shape_cast %72 : vector<1x2x32xf32> to vector<2x32xf32>
    %74 = vector.shape_cast %71 : vector<2x32xf32> to vector<1x2x32xf32>
    tpu.vector_store %arg8[%c2_59, %c0_60, %c0_61], %74 {strides = array<i32>} : memref<4x2x32xf32, #tpu.memory_space<vmem>>, vector<1x2x32xf32>,
    %c3 = arith.constant 3 : index
    %c0_62 = arith.constant 0 : index
    %c0_63 = arith.constant 0 : index
    %75 = vector.load %arg8[%c3, %c0_62, %c0_63] : memref<4x2x32xf32, #tpu.memory_space<vmem>>, vector<1x2x32xf32>
    %76 = vector.shape_cast %75 : vector<1x2x32xf32> to vector<2x32xf32>
    %c3_64 = arith.constant 3 : index
    %c0_65 = arith.constant 0 : index
    %c0_66 = arith.constant 0 : index
    %77 = vector.load %arg9[%c3_64, %c0_65, %c0_66] : memref<4x2x32xf32, #tpu.memory_space<vmem>>, vector<1x2x32xf32>
    %78 = vector.shape_cast %77 : vector<1x2x32xf32> to vector<2x32xf32>
    %79 = arith.mulf %78, %71 : vector<2x32xf32>
    %80 = arith.addf %76, %79 : vector<2x32xf32>
    %c3_67 = arith.constant 3 : index
    %c0_68 = arith.constant 0 : index
    %c0_69 = arith.constant 0 : index
    %81 = vector.load %arg8[%c3_67, %c0_68, %c0_69] : memref<4x2x32xf32, #tpu.memory_space<vmem>>, vector<1x2x32xf32>
    %82 = vector.shape_cast %81 : vector<1x2x32xf32> to vector<2x32xf32>
    %83 = vector.shape_cast %80 : vector<2x32xf32> to vector<1x2x32xf32>
    tpu.vector_store %arg8[%c3_67, %c0_68, %c0_69], %83 {strides = array<i32>} : memref<4x2x32xf32, #tpu.memory_space<vmem>>, vector<1x2x32xf32>,
    %c0_70 = arith.constant 0 : index
    %c0_71 = arith.constant 0 : index
    %84 = vector.load %arg7[%c0_70, %c0_71] : memref<2x32xf32, #tpu.memory_space<vmem>>, vector<2x32xf32>
    tpu.vector_store %arg7[%c0_70, %c0_71], %80 {strides = array<i32>} : memref<2x32xf32, #tpu.memory_space<vmem>>, vector<2x32xf32>,
    %c0_72 = arith.constant 0 : index
    %c0_73 = arith.constant 0 : index
    %c0_74 = arith.constant 0 : index
    %85 = vector.load %arg10[%c0_72, %c0_73, %c0_74] : memref<4x2x32xf32, #tpu.memory_space<vmem>>, vector<4x2x32xf32>
    %c0_75 = arith.constant 0 : index
    %c0_76 = arith.constant 0 : index
    %c0_77 = arith.constant 0 : index
    %86 = vector.load %arg8[%c0_75, %c0_76, %c0_77] : memref<4x2x32xf32, #tpu.memory_space<vmem>>, vector<4x2x32xf32>
    %87 = arith.mulf %85, %86 : vector<4x2x32xf32>
    %c0_78 = arith.constant 0 : index
    %c0_79 = arith.constant 0 : index
    %c0_80 = arith.constant 0 : index
    %88 = vector.load %arg5[%c0_78, %c0_79, %c0_80] : memref<4x2x32xf32, #tpu.memory_space<vmem>>, vector<4x2x32xf32>
    tpu.vector_store %arg5[%c0_78, %c0_79, %c0_80], %87 {strides = array<i32>} : memref<4x2x32xf32, #tpu.memory_space<vmem>>, vector<4x2x32xf32>,
    %c1_i32 = arith.constant 1 : i32
    %89 = arith.cmpi eq, %arg1, %c1_i32 : i32
    %90 = arith.extui %89 : i1 to i32
    %c0_i32_81 = arith.constant 0 : i32
    %91 = arith.cmpi ne, %90, %c0_i32_81 : i32
    scf.if %91 {
      %c0_82 = arith.constant 0 : index
      %c0_83 = arith.constant 0 : index
      %92 = vector.load %arg6[%c0_82, %c0_83] : memref<2x32xf32, #tpu.memory_space<vmem>>, vector<2x32xf32>
      tpu.vector_store %arg6[%c0_82, %c0_83], %80 {strides = array<i32>} : memref<2x32xf32, #tpu.memory_space<vmem>>, vector<2x32xf32>,
    } else {
    }
    return
  }
  func.func @transform_0(%arg0: i32, %arg1: i32) -> (i32, i32, i32) {
    %c0_i32 = arith.constant 0 : i32
    %c0_i32_0 = arith.constant 0 : i32
    return %arg1, %arg0, %c0_i32 : i32, i32, i32
  }
  func.func @transform_1(%arg0: i32, %arg1: i32) -> (i32, i32, i32) {
    %c0_i32 = arith.constant 0 : i32
    %c0_i32_0 = arith.constant 0 : i32
    %c0_i32_1 = arith.constant 0 : i32
    %c0_i32_2 = arith.constant 0 : i32
    return %c0_i32, %c0_i32_0, %c0_i32_1 : i32, i32, i32
  }
  func.func @transform_2(%arg0: i32, %arg1: i32) -> (i32, i32, i32) {
    %c0_i32 = arith.constant 0 : i32
    %c0_i32_0 = arith.constant 0 : i32
    %c0_i32_1 = arith.constant 0 : i32
    %c0_i32_2 = arith.constant 0 : i32
    return %c0_i32, %c0_i32_0, %c0_i32_1 : i32, i32, i32
  }
  func.func @transform_3(%arg0: i32, %arg1: i32) -> (i32, i32, i32) {
    %c0_i32 = arith.constant 0 : i32
    %c0_i32_0 = arith.constant 0 : i32
    return %arg1, %arg0, %c0_i32 : i32, i32, i32
  }
  func.func @transform_4(%arg0: i32, %arg1: i32) -> (i32, i32) {
    %c0_i32 = arith.constant 0 : i32
    %c0_i32_0 = arith.constant 0 : i32
    return %arg0, %c0_i32 : i32, i32
  }
}

module attributes {stable_mosaic.version = 11 : i64} {
  func.func @qrnn_layer_kernel(%arg0: i32, %arg1: i32, %arg2: memref<4x2x16xf32, #tpu.memory_space<vmem>>, %arg3: memref<3x16x32xbf16, #tpu.memory_space<vmem>>, %arg4: memref<3x1x32xf32, #tpu.memory_space<vmem>>, %arg5: memref<4x2x32xf32, #tpu.memory_space<vmem>>, %arg6: memref<2x32xf32, #tpu.memory_space<vmem>>, %arg7: memref<2x32xf32, #tpu.memory_space<vmem>>, %arg8: memref<4x2x32xf32, #tpu.memory_space<vmem>>, %arg9: memref<4x2x32xf32, #tpu.memory_space<vmem>>, %arg10: memref<4x2x32xf32, #tpu.memory_space<vmem>>) attributes {dimension_semantics = [#tpu.dimension_semantics<parallel>, #tpu.dimension_semantics<arbitrary>], iteration_bounds = array<i64: 1, 2>, scalar_prefetch = 0 : i64, scratch_operands = 4 : i64, tpu.core_type = #tpu.core_type<tc>, window_params = [{transform_indices = @transform_0, window_bounds = array<i64: 4, 2, 16>}, {pipeline_mode = #tpu.pipeline_mode<synchronous>, transform_indices = @transform_1, window_bounds = array<i64: 3, 16, 32>}, {pipeline_mode = #tpu.pipeline_mode<synchronous>, transform_indices = @transform_2, window_bounds = array<i64: 3, 1, 32>}, {transform_indices = @transform_3, window_bounds = array<i64: 4, 2, 32>}, {transform_indices = @transform_4, window_bounds = array<i64: 2, 32>}]} {
    %c0_i32 = arith.constant 0 : i32
    %0 = arith.cmpi eq, %arg1, %c0_i32 : i32
    %1 = arith.extui %0 : i1 to i32
    %c0_i32_0 = arith.constant 0 : i32
    %2 = arith.cmpi ne, %1, %c0_i32_0 : i32
    scf.if %2 {
      %cst_82 = arith.constant 0.000000e+00 : f32
      %92 = vector.broadcast %cst_82 : f32 to vector<2x32xf32>
      %c0_83 = arith.constant 0 : index
      %c0_84 = arith.constant 0 : index
      %93 = vector.load %arg7[%c0_83, %c0_84] : memref<2x32xf32, #tpu.memory_space<vmem>>, vector<2x32xf32>
      tpu.vector_store %arg7[%c0_83, %c0_84], %92 {strides = array<i32>} : memref<2x32xf32, #tpu.memory_space<vmem>>, vector<2x32xf32>,
    } else {
    }
    %c0 = arith.constant 0 : index
    %c0_1 = arith.constant 0 : index
    %c0_2 = arith.constant 0 : index
    %3 = vector.load %arg2[%c0, %c0_1, %c0_2] : memref<4x2x16xf32, #tpu.memory_space<vmem>>, vector<4x2x16xf32>
    %4 = vector.shape_cast %3 : vector<4x2x16xf32> to vector<8x16xf32>
    %5 = arith.truncf %4 : vector<8x16xf32> to vector<8x16xbf16>
    %c0_3 = arith.constant 0 : index
    %c0_4 = arith.constant 0 : index
    %c0_5 = arith.constant 0 : index
    %6 = vector.load %arg3[%c0_3, %c0_4, %c0_5] : memref<3x16x32xbf16, #tpu.memory_space<vmem>>, vector<1x16x32xbf16>
    %7 = vector.shape_cast %6 : vector<1x16x32xbf16> to vector<16x32xbf16>
    %cst = arith.constant dense<0.000000e+00> : vector<8x32xf32>
    %8 = tpu.matmul %5, %7, %cst {dimension_numbers = #tpu.dot_dimension_numbers<[1], [0], [0], [1], [0, 0, 1, 1], [], []>} : vector<8x16xbf16>, vector<16x32xbf16>, vector<8x32xf32> -> vector<8x32xf32>
    %c0_6 = arith.constant 0 : index
    %c0_7 = arith.constant 0 : index
    %c0_8 = arith.constant 0 : index
    %9 = vector.load %arg4[%c0_6, %c0_7, %c0_8] : memref<3x1x32xf32, #tpu.memory_space<vmem>>, vector<1x1x32xf32>
    %10 = vector.shape_cast %9 : vector<1x1x32xf32> to vector<1x32xf32>
    %11 = vector.broadcast %10 : vector<1x32xf32> to vector<8x32xf32>
    %12 = arith.addf %8, %11 : vector<8x32xf32>
    %13 = math.tanh %12 : vector<8x32xf32>
    %c1 = arith.constant 1 : index
    %c0_9 = arith.constant 0 : index
    %c0_10 = arith.constant 0 : index
    %14 = vector.load %arg3[%c1, %c0_9, %c0_10] : memref<3x16x32xbf16, #tpu.memory_space<vmem>>, vector<1x16x32xbf16>
    %15 = vector.shape_cast %14 : vector<1x16x32xbf16> to vector<16x32xbf16>
    %cst_11 = arith.constant dense<0.000000e+00> : vector<8x32xf32>
    %16 = tpu.matmul %5, %15, %cst_11 {dimension_numbers = #tpu.dot_dimension_numbers<[1], [0], [0], [1], [0, 0, 1, 1], [], []>} : vector<8x16xbf16>, vector<16x32xbf16>, vector<8x32xf32> -> vector<8x32xf32>
    %c1_12 = arith.constant 1 : index
    %c0_13 = arith.constant 0 : index
    %c0_14 = arith.constant 0 : index
    %17 = vector.load %arg4[%c1_12, %c0_13, %c0_14] : memref<3x1x32xf32, #tpu.memory_space<vmem>>, vector<1x1x32xf32>
    %18 = vector.shape_cast %17 : vector<1x1x32xf32> to vector<1x32xf32>
    %19 = vector.broadcast %18 : vector<1x32xf32> to vector<8x32xf32>
    %20 = arith.addf %16, %19 : vector<8x32xf32>
    %21 = arith.negf %20 : vector<8x32xf32>
    %22 = math.exp %21 : vector<8x32xf32>
    %cst_15 = arith.constant 1.000000e+00 : f32
    %23 = vector.broadcast %cst_15 : f32 to vector<8x32xf32>
    %24 = arith.addf %23, %22 : vector<8x32xf32>
    %25 = arith.divf %23, %24 : vector<8x32xf32>
    %c2 = arith.constant 2 : index
    %c0_16 = arith.constant 0 : index
    %c0_17 = arith.constant 0 : index
    %26 = vector.load %arg3[%c2, %c0_16, %c0_17] : memref<3x16x32xbf16, #tpu.memory_space<vmem>>, vector<1x16x32xbf16>
    %27 = vector.shape_cast %26 : vector<1x16x32xbf16> to vector<16x32xbf16>
    %cst_18 = arith.constant dense<0.000000e+00> : vector<8x32xf32>
    %28 = tpu.matmul %5, %27, %cst_18 {dimension_numbers = #tpu.dot_dimension_numbers<[1], [0], [0], [1], [0, 0, 1, 1], [], []>} : vector<8x16xbf16>, vector<16x32xbf16>, vector<8x32xf32> -> vector<8x32xf32>
    %c2_19 = arith.constant 2 : index
    %c0_20 = arith.constant 0 : index
    %c0_21 = arith.constant 0 : index
    %29 = vector.load %arg4[%c2_19, %c0_20, %c0_21] : memref<3x1x32xf32, #tpu.memory_space<vmem>>, vector<1x1x32xf32>
    %30 = vector.shape_cast %29 : vector<1x1x32xf32> to vector<1x32xf32>
    %31 = vector.broadcast %30 : vector<1x32xf32> to vector<8x32xf32>
    %32 = arith.addf %28, %31 : vector<8x32xf32>
    %33 = arith.negf %32 : vector<8x32xf32>
    %34 = math.exp %33 : vector<8x32xf32>
    %cst_22 = arith.constant 1.000000e+00 : f32
    %35 = vector.broadcast %cst_22 : f32 to vector<8x32xf32>
    %36 = arith.addf %35, %34 : vector<8x32xf32>
    %37 = arith.divf %35, %36 : vector<8x32xf32>
    %38 = arith.mulf %25, %13 : vector<8x32xf32>
    %39 = vector.shape_cast %38 : vector<8x32xf32> to vector<4x2x32xf32>
    %c0_23 = arith.constant 0 : index
    %c0_24 = arith.constant 0 : index
    %c0_25 = arith.constant 0 : index
    %40 = vector.load %arg8[%c0_23, %c0_24, %c0_25] : memref<4x2x32xf32, #tpu.memory_space<vmem>>, vector<4x2x32xf32>
    tpu.vector_store %arg8[%c0_23, %c0_24, %c0_25], %39 {strides = array<i32>} : memref<4x2x32xf32, #tpu.memory_space<vmem>>, vector<4x2x32xf32>,
    %cst_26 = arith.constant 1.000000e+00 : f32
    %41 = vector.broadcast %cst_26 : f32 to vector<8x32xf32>
    %42 = arith.subf %41, %25 : vector<8x32xf32>
    %43 = vector.shape_cast %42 : vector<8x32xf32> to vector<4x2x32xf32>
    %c0_27 = arith.constant 0 : index
    %c0_28 = arith.constant 0 : index
    %c0_29 = arith.constant 0 : index
    %44 = vector.load %arg9[%c0_27, %c0_28, %c0_29] : memref<4x2x32xf32, #tpu.memory_space<vmem>>, vector<4x2x32xf32>
    tpu.vector_store %arg9[%c0_27, %c0_28, %c0_29], %43 {strides = array<i32>} : memref<4x2x32xf32, #tpu.memory_space<vmem>>, vector<4x2x32xf32>,
    %45 = vector.shape_cast %37 : vector<8x32xf32> to vector<4x2x32xf32>
    %c0_30 = arith.constant 0 : index
    %c0_31 = arith.constant 0 : index
    %c0_32 = arith.constant 0 : index
    %46 = vector.load %arg10[%c0_30, %c0_31, %c0_32] : memref<4x2x32xf32, #tpu.memory_space<vmem>>, vector<4x2x32xf32>
    tpu.vector_store %arg10[%c0_30, %c0_31, %c0_32], %45 {strides = array<i32>} : memref<4x2x32xf32, #tpu.memory_space<vmem>>, vector<4x2x32xf32>,
    %c0_33 = arith.constant 0 : index
    %c0_34 = arith.constant 0 : index
    %47 = vector.load %arg7[%c0_33, %c0_34] : memref<2x32xf32, #tpu.memory_space<vmem>>, vector<2x32xf32>
    %c0_35 = arith.constant 0 : index
    %c0_36 = arith.constant 0 : index
    %c0_37 = arith.constant 0 : index
    %48 = vector.load %arg8[%c0_35, %c0_36, %c0_37] : memref<4x2x32xf32, #tpu.memory_space<vmem>>, vector<1x2x32xf32>
    %49 = vector.shape_cast %48 : vector<1x2x32xf32> to vector<2x32xf32>
    %c0_38 = arith.constant 0 : index
    %c0_39 = arith.constant 0 : index
    %c0_40 = arith.constant 0 : index
    %50 = vector.load %arg9[%c0_38, %c0_39, %c0_40] : memref<4x2x32xf32, #tpu.memory_space<vmem>>, vector<1x2x32xf32>
    %51 = vector.shape_cast %50 : vector<1x2x32xf32> to vector<2x32xf32>
    %52 = arith.mulf %51, %47 : vector<2x32xf32>
    %53 = arith.addf %49, %52 : vector<2x32xf32>
    %c0_41 = arith.constant 0 : index
    %c0_42 = arith.constant 0 : index
    %c0_43 = arith.constant 0 : index
    %54 = vector.load %arg8[%c0_41, %c0_42, %c0_43] : memref<4x2x32xf32, #tpu.memory_space<vmem>>, vector<1x2x32xf32>
    %55 = vector.shape_cast %54 : vector<1x2x32xf32> to vector<2x32xf32>
    %56 = vector.shape_cast %53 : vector<2x32xf32> to vector<1x2x32xf32>
    tpu.vector_store %arg8[%c0_41, %c0_42, %c0_43], %56 {strides = array<i32>} : memref<4x2x32xf32, #tpu.memory_space<vmem>>, vector<1x2x32xf32>,
    %c1_44 = arith.constant 1 : index
    %c0_45 = arith.constant 0 : index
    %c0_46 = arith.constant 0 : index
    %57 = vector.load %arg8[%c1_44, %c0_45, %c0_46] : memref<4x2x32xf32, #tpu.memory_space<vmem>>, vector<1x2x32xf32>
    %58 = vector.shape_cast %57 : vector<1x2x32xf32> to vector<2x32xf32>
    %c1_47 = arith.constant 1 : index
    %c0_48 = arith.constant 0 : index
    %c0_49 = arith.constant 0 : index
    %59 = vector.load %arg9[%c1_47, %c0_48, %c0_49] : memref<4x2x32xf32, #tpu.memory_space<vmem>>, vector<1x2x32xf32>
    %60 = vector.shape_cast %59 : vector<1x2x32xf32> to vector<2x32xf32>
    %61 = arith.mulf %60, %53 : vector<2x32xf32>
    %62 = arith.addf %58, %61 : vector<2x32xf32>
    %c1_50 = arith.constant 1 : index
    %c0_51 = arith.constant 0 : index
    %c0_52 = arith.constant 0 : index
    %63 = vector.load %arg8[%c1_50, %c0_51, %c0_52] : memref<4x2x32xf32, #tpu.memory_space<vmem>>, vector<1x2x32xf32>
    %64 = vector.shape_cast %63 : vector<1x2x32xf32> to vector<2x32xf32>
    %65 = vector.shape_cast %62 : vector<2x32xf32> to vector<1x2x32xf32>
    tpu.vector_store %arg8[%c1_50, %c0_51, %c0_52], %65 {strides = array<i32>} : memref<4x2x32xf32, #tpu.memory_space<vmem>>, vector<1x2x32xf32>,
    %c2_53 = arith.constant 2 : index
    %c0_54 = arith.constant 0 : index
    %c0_55 = arith.constant 0 : index
    %66 = vector.load %arg8[%c2_53, %c0_54, %c0_55] : memref<4x2x32xf32, #tpu.memory_space<vmem>>, vector<1x2x32xf32>
    %67 = vector.shape_cast %66 : vector<1x2x32xf32> to vector<2x32xf32>
    %c2_56 = arith.constant 2 : index
    %c0_57 = arith.constant 0 : index
    %c0_58 = arith.constant 0 : index
    %68 = vector.load %arg9[%c2_56, %c0_57, %c0_58] : memref<4x2x32xf32, #tpu.memory_space<vmem>>, vector<1x2x32xf32>
    %69 = vector.shape_cast %68 : vector<1x2x32xf32> to vector<2x32xf32>
    %70 = arith.mulf %69, %62 : vector<2x32xf32>
    %71 = arith.addf %67, %70 : vector<2x32xf32>
    %c2_59 = arith.constant 2 : index
    %c0_60 = arith.constant 0 : index
    %c0_61 = arith.constant 0 : index
    %72 = vector.load %arg8[%c2_59, %c0_60, %c0_61] : memref<4x2x32xf32, #tpu.memory_space<vmem>>, vector<1x2x32xf32>
    %73 = vector.shape_cast %72 : vector<1x2x32xf32> to vector<2x32xf32>
    %74 = vector.shape_cast %71 : vector<2x32xf32> to vector<1x2x32xf32>
    tpu.vector_store %arg8[%c2_59, %c0_60, %c0_61], %74 {strides = array<i32>} : memref<4x2x32xf32, #tpu.memory_space<vmem>>, vector<1x2x32xf32>,
    %c3 = arith.constant 3 : index
    %c0_62 = arith.constant 0 : index
    %c0_63 = arith.constant 0 : index
    %75 = vector.load %arg8[%c3, %c0_62, %c0_63] : memref<4x2x32xf32, #tpu.memory_space<vmem>>, vector<1x2x32xf32>
    %76 = vector.shape_cast %75 : vector<1x2x32xf32> to vector<2x32xf32>
    %c3_64 = arith.constant 3 : index
    %c0_65 = arith.constant 0 : index
    %c0_66 = arith.constant 0 : index
    %77 = vector.load %arg9[%c3_64, %c0_65, %c0_66] : memref<4x2x32xf32, #tpu.memory_space<vmem>>, vector<1x2x32xf32>
    %78 = vector.shape_cast %77 : vector<1x2x32xf32> to vector<2x32xf32>
    %79 = arith.mulf %78, %71 : vector<2x32xf32>
    %80 = arith.addf %76, %79 : vector<2x32xf32>
    %c3_67 = arith.constant 3 : index
    %c0_68 = arith.constant 0 : index
    %c0_69 = arith.constant 0 : index
    %81 = vector.load %arg8[%c3_67, %c0_68, %c0_69] : memref<4x2x32xf32, #tpu.memory_space<vmem>>, vector<1x2x32xf32>
    %82 = vector.shape_cast %81 : vector<1x2x32xf32> to vector<2x32xf32>
    %83 = vector.shape_cast %80 : vector<2x32xf32> to vector<1x2x32xf32>
    tpu.vector_store %arg8[%c3_67, %c0_68, %c0_69], %83 {strides = array<i32>} : memref<4x2x32xf32, #tpu.memory_space<vmem>>, vector<1x2x32xf32>,
    %c0_70 = arith.constant 0 : index
    %c0_71 = arith.constant 0 : index
    %84 = vector.load %arg7[%c0_70, %c0_71] : memref<2x32xf32, #tpu.memory_space<vmem>>, vector<2x32xf32>
    tpu.vector_store %arg7[%c0_70, %c0_71], %80 {strides = array<i32>} : memref<2x32xf32, #tpu.memory_space<vmem>>, vector<2x32xf32>,
    %c0_72 = arith.constant 0 : index
    %c0_73 = arith.constant 0 : index
    %c0_74 = arith.constant 0 : index
    %85 = vector.load %arg10[%c0_72, %c0_73, %c0_74] : memref<4x2x32xf32, #tpu.memory_space<vmem>>, vector<4x2x32xf32>
    %c0_75 = arith.constant 0 : index
    %c0_76 = arith.constant 0 : index
    %c0_77 = arith.constant 0 : index
    %86 = vector.load %arg8[%c0_75, %c0_76, %c0_77] : memref<4x2x32xf32, #tpu.memory_space<vmem>>, vector<4x2x32xf32>
    %87 = arith.mulf %85, %86 : vector<4x2x32xf32>
    %c0_78 = arith.constant 0 : index
    %c0_79 = arith.constant 0 : index
    %c0_80 = arith.constant 0 : index
    %88 = vector.load %arg5[%c0_78, %c0_79, %c0_80] : memref<4x2x32xf32, #tpu.memory_space<vmem>>, vector<4x2x32xf32>
    tpu.vector_store %arg5[%c0_78, %c0_79, %c0_80], %87 {strides = array<i32>} : memref<4x2x32xf32, #tpu.memory_space<vmem>>, vector<4x2x32xf32>,
    %c1_i32 = arith.constant 1 : i32
    %89 = arith.cmpi eq, %arg1, %c1_i32 : i32
    %90 = arith.extui %89 : i1 to i32
    %c0_i32_81 = arith.constant 0 : i32
    %91 = arith.cmpi ne, %90, %c0_i32_81 : i32
    scf.if %91 {
      %c0_82 = arith.constant 0 : index
      %c0_83 = arith.constant 0 : index
      %92 = vector.load %arg6[%c0_82, %c0_83] : memref<2x32xf32, #tpu.memory_space<vmem>>, vector<2x32xf32>
      tpu.vector_store %arg6[%c0_82, %c0_83], %80 {strides = array<i32>} : memref<2x32xf32, #tpu.memory_space<vmem>>, vector<2x32xf32>,
    } else {
    }
    return
  }
  func.func @transform_0(%arg0: i32, %arg1: i32) -> (i32, i32, i32) {
    %c0_i32 = arith.constant 0 : i32
    %c0_i32_0 = arith.constant 0 : i32
    return %arg1, %arg0, %c0_i32 : i32, i32, i32
  }
  func.func @transform_1(%arg0: i32, %arg1: i32) -> (i32, i32, i32) {
    %c0_i32 = arith.constant 0 : i32
    %c0_i32_0 = arith.constant 0 : i32
    %c0_i32_1 = arith.constant 0 : i32
    %c0_i32_2 = arith.constant 0 : i32
    return %c0_i32, %c0_i32_0, %c0_i32_1 : i32, i32, i32
  }
  func.func @transform_2(%arg0: i32, %arg1: i32) -> (i32, i32, i32) {
    %c0_i32 = arith.constant 0 : i32
    %c0_i32_0 = arith.constant 0 : i32
    %c0_i32_1 = arith.constant 0 : i32
    %c0_i32_2 = arith.constant 0 : i32
    return %c0_i32, %c0_i32_0, %c0_i32_1 : i32, i32, i32
  }
  func.func @transform_3(%arg0: i32, %arg1: i32) -> (i32, i32, i32) {
    %c0_i32 = arith.constant 0 : i32
    %c0_i32_0 = arith.constant 0 : i32
    return %arg1, %arg0, %c0_i32 : i32, i32, i32
  }
  func.func @transform_4(%arg0: i32, %arg1: i32) -> (i32, i32) {
    %c0_i32 = arith.constant 0 : i32
    %c0_i32_0 = arith.constant 0 : i32
    return %arg0, %c0_i32 : i32, i32
  }
}

</mosaic_0001>

<llo_original>
// kernel: qrnn_forward.3
$region0: #{qrnn_forward.3}
  #allocation0 [shape = 'u32[]', space=smem, size = 0x4, offset = 0x4, fixed_abs, tag = 'smem constant byte address 0x4 - core index']
  #allocation1 [shape = 'u32[144,128]{1,0:T(1,128)}', space=vmem, size = 0x12000, scoped, tag = 'internal scratch']
  #allocation2 [shape = 'f32[2,32]{1,0:T(2,128)}', space=vmem, size = 0x400, scoped, tag = 'scratch operand']
  #allocation3 [shape = 'f32[4,2,32]{2,1,0:T(2,128)}', space=vmem, size = 0x1000, scoped, tag = 'scratch operand']
  #allocation4 [shape = 'f32[4,2,32]{2,1,0:T(2,128)}', space=vmem, size = 0x1000, scoped, tag = 'scratch operand']
  #allocation5 [shape = 'f32[4,2,32]{2,1,0:T(2,128)}', space=vmem, size = 0x1000, scoped, tag = 'scratch operand']
  %s0 = inlined_call_operand.vmem [shape: f32[8,2,32], index: 0, kind: input, shape index: {}]
  %s1 = inlined_call_operand.vmem [shape: bf16[3,32,32], index: 1, kind: input, shape index: {}]
  %s2 = inlined_call_operand.vmem [shape: f32[3,1,32], index: 2, kind: input, shape index: {}]
  %s3 = inlined_call_operand.hbm [shape: f32[8,2,32], index: 3, kind: output, shape index: {0}]
  %s4 = inlined_call_operand.vmem [shape: f32[2,32], index: 4, kind: output, shape index: {1}]
  %5 = xla_tuple %s3, %s4
  %s6 = sld [smem:[#allocation0]]
  $region61: #{qrnn_forward.3} parent=0
    _
  %s8 = ssub.s32 1, %s6
  %s9 = scalar_select 0, %s8, %s6
  $region1: #{qrnn_forward.3} parent=0
    #allocation6 [shape = 'u8[8192]{0}', space=vmem, size = 0x2000, scoped, tag = 'output window, operand 0']
    #allocation7 [shape = 's32[2]{0}', space=sflag, size = 0x8, scoped, tag = 'scoped memory for qrnn_forward.3']
    %10 = vsyncpa [#allocation7], 0
    %s11 = scalar_lea.sflag [#allocation7], 1
    %12 = vsyncpa %s11, 0
    loop: start=0, step=1, limit=4
    $region2: #{qrnn_forward.3} parent=1 // loop_pre_header
      _
    $region3: #{qrnn_forward.3} parent=1 // loop_header
      %s14 = sphi 0, %s18
      %p15 = scmp.ge.s32.totalorder %s14, 4
      %s21 = sphi 0, %s33
      %s22 = sphi 0, %s29
      %s23 = sphi 0, %s21
      %s24 = sphi 0, %s22
      %s25 = sphi 0, %s23
      %s26 = sphi 0, %s24
      %s38 = sphi 0, %s40
      %s41 = sphi 0, %s38
      %s42 = sphi 0, %s41
      %s58 = sphi 0, %s42
      %s62 = sphi 0, %s62
      %s64 = sphi 0, %s62
      %s65 = sphi 0, %s64
      %s79 = sphi 0, %s65
      %s83 = sphi 0, %s83
      %s85 = sphi 0, %s83
      %s86 = sphi 0, %s85
      %s100 = sphi 0, %s86
      %s108 = sphi 0, %s110
      %s111 = sphi 0, %s108
      %s112 = sphi 0, %s111
      %s128 = sphi 0, %s112
      %s134 = sphi 0, %s136
      %s137 = sphi 0, %s134
      %s138 = sphi 0, %s137
      %s154 = sphi 0, %s138
    $region4: #{qrnn_forward.3} parent=1 // loop_header_branch
      %17 = sbr.rel (%p15) target = $region8
    $region5: #{qrnn_forward.3} parent=1 // loop_body
      %s19 = ssub.s32 %s14, 1
      %s20 = ssub.s32 %s14, 2
      %s27 = sadd.s32 1, %s22
      %p28 = scmp.ge.s32.totalorder %s27, 2
      %s29 = scalar_select %p28, 0, %s27
      %s30 = sadd.s32 1, %s21
      %s31 = scalar_select %p28, %s30, %s21
      %p32 = scmp.ge.s32.totalorder %s31, 1
      %s33 = scalar_select %p32, 0, %s31
      %s34 = ssub.s32 %s22, %s29
      %s35 = ssub.s32 %s21, %s33
      %s36 = sor.u32 %s34, %s35
      %p37 = scmp.eq.s32.totalorder %s36, 0
      %s39 = sadd.s32 %s38, 1
      %s40 = scalar_select %p37, %s38, %s39
      %p43 = pneg %p37
      %p44 = scmp.eq.s32.totalorder %s14, 1
      %p45 = por %p43, %p44
      %p46 = scmp.ne.s32.totalorder %s38, %s41
      %p47 = scmp.eq.s32.totalorder %s14, 0
      %p48 = por %p46, %p47
      %p49 = scmp.ne.s32.totalorder %s38, %s41
      %p50 = scmp.eq.s32.totalorder %s19, 1
      %p51 = por %p49, %p50
      %p52 = scmp.ne.s32.totalorder %s41, %s42
      %p53 = scmp.eq.s32.totalorder %s19, 0
      %p54 = por %p52, %p53
      %p55 = scmp.ne.s32.totalorder %s41, %s42
      %p56 = scmp.eq.s32.totalorder %s20, 1
      %p57 = por %p55, %p56
      %p59 = scmp.ne.s32.totalorder %s42, %s58
      %p60 = scmp.eq.s32.totalorder %s20, 0
      %p61 = por %p59, %p60
      %s63 = sadd.s32 %s62, 1
      %p66 = scmp.eq.s32.totalorder %s14, 1
      %p67 = scmp.ne.s32.totalorder %s62, %s64
      %p68 = scmp.eq.s32.totalorder %s14, 0
      %p69 = por %p67, %p68
      %p70 = scmp.ne.s32.totalorder %s62, %s64
      %p71 = scmp.eq.s32.totalorder %s19, 1
      %p72 = por %p70, %p71
      %p73 = scmp.ne.s32.totalorder %s64, %s65
      %p74 = scmp.eq.s32.totalorder %s19, 0
      %p75 = por %p73, %p74
      %p76 = scmp.ne.s32.totalorder %s64, %s65
      %p77 = scmp.eq.s32.totalorder %s20, 1
      %p78 = por %p76, %p77
      %p80 = scmp.ne.s32.totalorder %s65, %s79
      %p81 = scmp.eq.s32.totalorder %s20, 0
      %p82 = por %p80, %p81
      %s84 = sadd.s32 %s83, 1
      %p87 = scmp.eq.s32.totalorder %s14, 1
      %p88 = scmp.ne.s32.totalorder %s83, %s85
      %p89 = scmp.eq.s32.totalorder %s14, 0
      %p90 = por %p88, %p89
      %p91 = scmp.ne.s32.totalorder %s83, %s85
      %p92 = scmp.eq.s32.totalorder %s19, 1
      %p93 = por %p91, %p92
      %p94 = scmp.ne.s32.totalorder %s85, %s86
      %p95 = scmp.eq.s32.totalorder %s19, 0
      %p96 = por %p94, %p95
      %p97 = scmp.ne.s32.totalorder %s85, %s86
      %p98 = scmp.eq.s32.totalorder %s20, 1
      %p99 = por %p97, %p98
      %p101 = scmp.ne.s32.totalorder %s86, %s100
      %p102 = scmp.eq.s32.totalorder %s20, 0
      %p103 = por %p101, %p102
      %s104 = ssub.s32 %s22, %s29
      %s105 = ssub.s32 %s21, %s33
      %s106 = sor.u32 %s104, %s105
      %p107 = scmp.eq.s32.totalorder %s106, 0
      %s109 = sadd.s32 %s108, 1
      %s110 = scalar_select %p107, %s108, %s109
      %p113 = pneg %p107
      %p114 = scmp.eq.s32.totalorder %s14, 1
      %p115 = por %p113, %p114
      %p116 = scmp.ne.s32.totalorder %s108, %s111
      %p117 = scmp.eq.s32.totalorder %s14, 0
      %p118 = por %p116, %p117
      %p119 = scmp.ne.s32.totalorder %s108, %s111
      %p120 = scmp.eq.s32.totalorder %s19, 1
      %p121 = por %p119, %p120
      %p122 = scmp.ne.s32.totalorder %s111, %s112
      %p123 = scmp.eq.s32.totalorder %s19, 0
      %p124 = por %p122, %p123
      %p125 = scmp.ne.s32.totalorder %s111, %s112
      %p126 = scmp.eq.s32.totalorder %s20, 1
      %p127 = por %p125, %p126
      %p129 = scmp.ne.s32.totalorder %s112, %s128
      %p130 = scmp.eq.s32.totalorder %s20, 0
      %p131 = por %p129, %p130
      %s132 = ssub.s32 %s21, %s33
      %p133 = scmp.eq.s32.totalorder %s132, 0
      %s135 = sadd.s32 %s134, 1
      %s136 = scalar_select %p133, %s134, %s135
      %p139 = pneg %p133
      %p140 = scmp.eq.s32.totalorder %s14, 1
      %p141 = por %p139, %p140
      %p142 = scmp.ne.s32.totalorder %s134, %s137
      %p143 = scmp.eq.s32.totalorder %s14, 0
      %p144 = por %p142, %p143
      %p145 = scmp.ne.s32.totalorder %s134, %s137
      %p146 = scmp.eq.s32.totalorder %s19, 1
      %p147 = por %p145, %p146
      %p148 = scmp.ne.s32.totalorder %s137, %s138
      %p149 = scmp.eq.s32.totalorder %s19, 0
      %p150 = por %p148, %p149
      %p151 = scmp.ne.s32.totalorder %s137, %s138
      %p152 = scmp.eq.s32.totalorder %s20, 1
      %p153 = por %p151, %p152
      %p155 = scmp.ne.s32.totalorder %s138, %s154
      %p156 = scmp.eq.s32.totalorder %s20, 0
      %p157 = por %p155, %p156
      %p158 = scmp.le.s32.totalorder 1, %s14
      %p159 = scmp.lt.s32.totalorder %s14, 3
      %p160 = pnand %p158, %p159
      %p161 = pneg %p160
      // Predicated region
      $region9: #{qrnn_forward.3} parent=5 // pred_check
        _
      $region10: #{qrnn_forward.3} parent=5 // pred_check_branch
        %163 = sbr.rel (%p160) target = $region12
      $region11: #{qrnn_forward.3} parent=5 // pred_region
        %s164 = ssub.s32 %s14, 1
        // Predicated region
        $region13: #{qrnn_forward.3} parent=11 // pred_check
          %p165 = pneg %p75
        $region14: #{qrnn_forward.3} parent=11 // pred_check_branch
          %167 = sbr.rel (%p165) target = $region16
        $region15: #{qrnn_forward.3} parent=11 // pred_region
          _
        $region16: #{qrnn_forward.3} parent=11 // pred_fallthru
          _
        // Predicated region
        $region17: #{qrnn_forward.3} parent=11 // pred_check
          %p168 = pneg %p96
        $region18: #{qrnn_forward.3} parent=11 // pred_check_branch
          %170 = sbr.rel (%p168) target = $region20
        $region19: #{qrnn_forward.3} parent=11 // pred_region
          _
        $region20: #{qrnn_forward.3} parent=11 // pred_fallthru
          _
      $region12: #{qrnn_forward.3} parent=5 // pred_fallthru
        _
      %p171 = scmp.lt.s32.totalorder %s14, 2
      // Predicated region
      $region21: #{qrnn_forward.3} parent=5 // pred_check
        %p172 = pneg %p171
      $region22: #{qrnn_forward.3} parent=5 // pred_check_branch
        %174 = sbr.rel (%p172) target = $region24
      $region23: #{qrnn_forward.3} parent=5 // pred_region
        // Predicated region
        $region25: #{qrnn_forward.3} parent=23 // pred_check
          %p175 = pneg %p48
        $region26: #{qrnn_forward.3} parent=23 // pred_check_branch
          %177 = sbr.rel (%p175) target = $region28
        $region27: #{qrnn_forward.3} parent=23 // pred_region
          %s178 = smul.u32 4, %s22
          %p179 = scmp.lt.s32.totalorder %s178, 7
          %s180 = scalar_select %p179, %s178, 7
          %p181 = scmp.lt.s32.totalorder %s21, 0
          %s182 = scalar_select %p181, %s21, 0
          %s183 = sadd.s32 %s182, %s180
          %s184 = smul.addr %s183, 2
          %s185 = scalar_lea.vmem %s0, %s184
          %s186 = smul.u32 4, %s22
        $region28: #{qrnn_forward.3} parent=23 // pred_fallthru
          _
      $region24: #{qrnn_forward.3} parent=5 // pred_fallthru
        _
      %p187 = scmp.le.s32.totalorder 1, %s14
      %p188 = scmp.lt.s32.totalorder %s14, 3
      %p189 = pnand %p187, %p188
      %p190 = pneg %p189
      // Predicated region
      $region29: #{qrnn_forward.3} parent=5 // pred_check
        _
      $region30: #{qrnn_forward.3} parent=5 // pred_check_branch
        %192 = sbr.rel (%p189) target = $region32
      $region31: #{qrnn_forward.3} parent=5 // pred_region
        %s193 = ssub.s32 %s14, 1
        %s194 = smul.u32 4, %s24
        %p195 = scmp.lt.s32.totalorder %s194, 7
        %s196 = scalar_select %p195, %s194, 7
        %p197 = scmp.lt.s32.totalorder %s23, 0
        %s198 = scalar_select %p197, %s23, 0
        %s199 = sadd.s32 %s198, %s196
        %s200 = smul.addr %s199, 2
        %s201 = scalar_lea.vmem %s0, %s200
        %p202 = pneg %p54
        %p203 = pneg %p51
        %p204 = pneg %p75
        %p205 = pneg %p72
        %p206 = pneg %p96
        %p207 = pneg %p93
        %p208 = pneg %p124
        %p209 = pneg %p121
        %s210 = sand.u32 %s111, 1
        %s211 = scalar_lea.sflag [#allocation7], %s210
        %s212 = sand.u32 %s111, 1
        %s213 = smul.addr %s212, 8
        %s214 = scalar_lea.vmem [#allocation6], %s213
        %p215 = pneg %p150
        %p216 = pneg %p147
        %p217 = scmp.lt.s32.totalorder %s23, 0
        %s218 = scalar_select %p217, %s23, 0
        %s219 = smul.addr %s218, 2
        %s220 = scalar_lea.vmem %s4, %s219
        %s221 = smul.u32 4, %s24
        %p222 = scmp.lt.s32.totalorder %s221, 7
        %s223 = scalar_select %p222, %s221, 7
        %p224 = scmp.lt.s32.totalorder %s23, 0
        %s225 = scalar_select %p224, %s23, 0
        %s226 = sadd.s32 %s225, %s223
        %s227 = smul.addr %s226, 2
        %s228 = scalar_lea.vmem %s0, %s227
        %s229 = smul.u32 4, %s24
        %s230 = smul.u32 4, %s24
        %p231 = scmp.lt.s32.totalorder %s23, 0
        %s232 = scalar_select %p231, %s23, 0
        %s233 = smul.addr %s232, 2
        %s234 = scalar_lea.vmem %s4, %s233
        %p236 = scmp.eq.s32.totalorder %s24, 0
        // Predicated region
        $region33: #{qrnn_forward.3} parent=31 // pred_check
          %p237 = pneg %p236
        $region34: #{qrnn_forward.3} parent=31 // pred_check_branch
          %239 = sbr.rel (%p237) target = $region36
        $region35: #{qrnn_forward.3} parent=31 // pred_region
          %vm240 = vcmask 254976
          %241 = vst.msk [vmem:[#allocation2] sm:$0x3] %vm240, 0.0
        $region36: #{qrnn_forward.3} parent=31 // pred_fallthru
          _
        %v242 = vld [vmem:[%s228] sm:$0x3]
        %v243 = vld [vmem:[%s228 + $0x2] sm:$0x3]
        %v244 = vld [vmem:[%s228 + $0x4] sm:$0x3]
        %v245 = vld [vmem:[%s228 + $0x6] sm:$0x3]
        %v250 = vcombine.low %v242, %v243
        %v251 = vcombine.low %v244, %v245
        %v253 = vunpack.c.l.s4 1983009808
        %v254 = vunpack.c.0.s8 %v253
        %v255 = vlaneseq
        %v256 = vshrl.u32 %v255, 7
        %v257 = vsub.s32 %v254, %v256
        %v258 = vrot.slane %v250, %v257
        %v260 = vunpack.c.l.s4 1983009808
        %v261 = vunpack.c.0.s8 %v260
        %v262 = vlaneseq
        %v263 = vshrl.u32 %v262, 7
        %v264 = vsub.s32 %v261, %v263
        %v265 = vrot.slane %v251, %v264
        %v266 = vcombine.low %v258, %v265
        %v268 = vpack.c.bf16 %v266, %v266
        %v269 = vld [vmem:[%s1] sm:$0xf]
        %v270 = vld [vmem:[%s1 + $0x4] sm:$0xf]
        %v271 = vld [vmem:[%s1 + $0x8] sm:$0xf]
        %v272 = vld [vmem:[%s1 + $0xc] sm:$0xf]
        %v273 = vld [vmem:[%s2] sm:$0x1]
        %v275 = vlaneseq
        %v276 = vshrl.u32 %v275, 7
        %v277 = vsub.s32 0, %v276
        %v278 = vrot.slane %v273, %v277
        %v284 = vunpack.c.l.b16 %v269
        %v285 = vunpack.c.l.b16 %v270
        %v286 = vunpack.c.l.b16 %v271
        %v287 = vunpack.c.l.b16 %v272
        %v288 = vpack.c.b16 %v285, %v284
        %v289 = vpack.c.b16 %v287, %v286
        %vm292 = vcmask 261120
        %v294 = vsel %vm292, %v268, 0
        %296 = vmatprep.subr.bf16.mxu0 0
        %297 = vmatpush1.bf16.msra.mxu0 0
        %298 = vmatprep.subr.bf16.mxu0 0
        %299 = vmatpush1.bf16.msra.mxu0 0
        %300 = vmatprep.subr.bf16.mxu0 0
        %301 = vmatpush1.bf16.msra.mxu0 0
        %302 = vmatprep.subr.bf16.mxu0 0
        %303 = vmatpush1.bf16.msra.mxu0 0
        %304 = vmatprep.subr.bf16.mxu0 0
        %305 = vmatpush1.bf16.msra.mxu0 0
        %306 = vmatprep.subr.bf16.mxu0 0
        %307 = vmatpush1.bf16.msra.mxu0 0
        %308 = vmatprep.subr.bf16.mxu0 0
        %309 = vmatpush1.bf16.msra.mxu0 %v289
        %310 = vmatprep.subr.bf16.mxu0 0
        %311 = vmatpush1.bf16.msra.mxu0 %v288
        %312 = vmatprep.subr.bf16.mxu0 0
        %313 = vmatpush2.bf16.msra.mxu0 0
        %314 = vmatprep.subr.bf16.mxu0 0
        %315 = vmatpush2.bf16.msra.mxu0 0
        %316 = vmatprep.subr.bf16.mxu0 0
        %317 = vmatpush2.bf16.msra.mxu0 0
        %318 = vmatprep.subr.bf16.mxu0 0
        %319 = vmatpush2.bf16.msra.mxu0 0
        %320 = vmatprep.subr.bf16.mxu0 0
        %321 = vmatpush2.bf16.msra.mxu0 0
        %322 = vmatprep.subr.bf16.mxu0 0
        %323 = vmatpush2.bf16.msra.mxu0 0
        %324 = vmatprep.subr.bf16.mxu0 0
        %325 = vmatpush2.bf16.msra.mxu0 0
        %326 = vmatprep.subr.bf16.mxu0 0
        %327 = vmatpush2.bf16.msra.mxu0 0
        %328 = vmatprep.mubr.bf16.mxu0 0
        %329 = vmatmul.mubr.bf16.gmra.mxu0 %v294
        %v330 = vpop.f32.mrf.mxu0
        %v331 = vadd.f32 %v278, %v330
        %v332 = vpop.f32.mrf.mxu0
        %v333 = vpop.f32.mrf.mxu0
        %v334 = vpop.f32.mrf.mxu0
        %335 = vdwg.mxu0
        %v336 = vtanh.pop %v331
        %s337 = scalar_lea.vmem %s1, 16
        %v338 = vld [vmem:[%s337] sm:$0xf]
        %v339 = vld [vmem:[%s337 + $0x4] sm:$0xf]
        %v340 = vld [vmem:[%s337 + $0x8] sm:$0xf]
        %v341 = vld [vmem:[%s337 + $0xc] sm:$0xf]
        %s342 = scalar_lea.vmem %s2, 1
        %v343 = vld [vmem:[%s342] sm:$0x1]
        %v345 = vlaneseq
        %v346 = vshrl.u32 %v345, 7
        %v347 = vsub.s32 0, %v346
        %v348 = vrot.slane %v343, %v347
        %v354 = vunpack.c.l.b16 %v338
        %v355 = vunpack.c.l.b16 %v339
        %v356 = vunpack.c.l.b16 %v340
        %v357 = vunpack.c.l.b16 %v341
        %v358 = vpack.c.b16 %v355, %v354
        %v359 = vpack.c.b16 %v357, %v356
        %362 = vmatprep.subr.bf16.mxu0 0
        %363 = vmatpush1.bf16.msra.mxu0 0
        %364 = vmatprep.subr.bf16.mxu0 0
        %365 = vmatpush1.bf16.msra.mxu0 0
        %366 = vmatprep.subr.bf16.mxu0 0
        %367 = vmatpush1.bf16.msra.mxu0 0
        %368 = vmatprep.subr.bf16.mxu0 0
        %369 = vmatpush1.bf16.msra.mxu0 0
        %370 = vmatprep.subr.bf16.mxu0 0
        %371 = vmatpush1.bf16.msra.mxu0 0
        %372 = vmatprep.subr.bf16.mxu0 0
        %373 = vmatpush1.bf16.msra.mxu0 0
        %374 = vmatprep.subr.bf16.mxu0 0
        %375 = vmatpush1.bf16.msra.mxu0 %v359
        %376 = vmatprep.subr.bf16.mxu0 0
        %377 = vmatpush1.bf16.msra.mxu0 %v358
        %378 = vmatprep.subr.bf16.mxu0 0
        %379 = vmatpush2.bf16.msra.mxu0 0
        %380 = vmatprep.subr.bf16.mxu0 0
        %381 = vmatpush2.bf16.msra.mxu0 0
        %382 = vmatprep.subr.bf16.mxu0 0
        %383 = vmatpush2.bf16.msra.mxu0 0
        %384 = vmatprep.subr.bf16.mxu0 0
        %385 = vmatpush2.bf16.msra.mxu0 0
        %386 = vmatprep.subr.bf16.mxu0 0
        %387 = vmatpush2.bf16.msra.mxu0 0
        %388 = vmatprep.subr.bf16.mxu0 0
        %389 = vmatpush2.bf16.msra.mxu0 0
        %390 = vmatprep.subr.bf16.mxu0 0
        %391 = vmatpush2.bf16.msra.mxu0 0
        %392 = vmatprep.subr.bf16.mxu0 0
        %393 = vmatpush2.bf16.msra.mxu0 0
        %394 = vmatprep.mubr.bf16.mxu0 0
        %395 = vmatmul.mubr.bf16.gmra.mxu0 %v294
        %v396 = vpop.f32.mrf.mxu0
        %v397 = vadd.f32 %v348, %v396
        %v398 = vpop.f32.mrf.mxu0
        %v399 = vpop.f32.mrf.mxu0
        %v400 = vpop.f32.mrf.mxu0
        %401 = vdwg.mxu0
        %v402 = vxor.u32 %v397, 2147483648
        %v403 = vmul.f32 %v402, 1.442695
        %v404 = vpow.pop %v403
        %v405 = vadd.f32 %v404, 1.0
        %v406 = vrcp.pop %v405
        %v407 = vmul.f32 1.0, %v406
        %s408 = scalar_lea.vmem %s1, 32
        %v409 = vld [vmem:[%s408] sm:$0xf]
        %v410 = vld [vmem:[%s408 + $0x4] sm:$0xf]
        %v411 = vld [vmem:[%s408 + $0x8] sm:$0xf]
        %v412 = vld [vmem:[%s408 + $0xc] sm:$0xf]
        %s413 = scalar_lea.vmem %s2, 2
        %v414 = vld [vmem:[%s413] sm:$0x1]
        %v416 = vlaneseq
        %v417 = vshrl.u32 %v416, 7
        %v418 = vsub.s32 0, %v417
        %v419 = vrot.slane %v414, %v418
        %v425 = vunpack.c.l.b16 %v409
        %v426 = vunpack.c.l.b16 %v410
        %v427 = vunpack.c.l.b16 %v411
        %v428 = vunpack.c.l.b16 %v412
        %v429 = vpack.c.b16 %v426, %v425
        %v430 = vpack.c.b16 %v428, %v427
        %433 = vmatprep.subr.bf16.mxu0 0
        %434 = vmatpush1.bf16.msra.mxu0 0
        %435 = vmatprep.subr.bf16.mxu0 0
        %436 = vmatpush1.bf16.msra.mxu0 0
        %437 = vmatprep.subr.bf16.mxu0 0
        %438 = vmatpush1.bf16.msra.mxu0 0
        %439 = vmatprep.subr.bf16.mxu0 0
        %440 = vmatpush1.bf16.msra.mxu0 0
        %441 = vmatprep.subr.bf16.mxu0 0
        %442 = vmatpush1.bf16.msra.mxu0 0
        %443 = vmatprep.subr.bf16.mxu0 0
        %444 = vmatpush1.bf16.msra.mxu0 0
        %445 = vmatprep.subr.bf16.mxu0 0
        %446 = vmatpush1.bf16.msra.mxu0 %v430
        %447 = vmatprep.subr.bf16.mxu0 0
        %448 = vmatpush1.bf16.msra.mxu0 %v429
        %449 = vmatprep.subr.bf16.mxu0 0
        %450 = vmatpush2.bf16.msra.mxu0 0
        %451 = vmatprep.subr.bf16.mxu0 0
        %452 = vmatpush2.bf16.msra.mxu0 0
        %453 = vmatprep.subr.bf16.mxu0 0
        %454 = vmatpush2.bf16.msra.mxu0 0
        %455 = vmatprep.subr.bf16.mxu0 0
        %456 = vmatpush2.bf16.msra.mxu0 0
        %457 = vmatprep.subr.bf16.mxu0 0
        %458 = vmatpush2.bf16.msra.mxu0 0
        %459 = vmatprep.subr.bf16.mxu0 0
        %460 = vmatpush2.bf16.msra.mxu0 0
        %461 = vmatprep.subr.bf16.mxu0 0
        %462 = vmatpush2.bf16.msra.mxu0 0
        %463 = vmatprep.subr.bf16.mxu0 0
        %464 = vmatpush2.bf16.msra.mxu0 0
        %465 = vmatprep.mubr.bf16.mxu0 0
        %466 = vmatmul.mubr.bf16.gmra.mxu0 %v294
        %v467 = vpop.f32.mrf.mxu0
        %v468 = vadd.f32 %v419, %v467
        %v469 = vpop.f32.mrf.mxu0
        %v470 = vpop.f32.mrf.mxu0
        %v471 = vpop.f32.mrf.mxu0
        %472 = vdwg.mxu0
        %v473 = vxor.u32 %v468, 2147483648
        %v474 = vmul.f32 %v473, 1.442695
        %v475 = vpow.pop %v474
        %v476 = vadd.f32 %v475, 1.0
        %v477 = vrcp.pop %v476
        %v478 = vmul.f32 1.0, %v477
        %v479 = vmul.f32 %v407, %v336
        %v481 = vcombine.high %v479, %v479
        %v483 = vunpack.c.l.s4 1983009808
        %v484 = vunpack.c.0.s8 %v483
        %v485 = vlaneseq
        %v486 = vshrl.u32 %v485, 7
        %v487 = vsub.s32 %v484, %v486
        %v488 = vrot.slane %v479, %v487
        %v490 = vunpack.c.l.s4 1983009808
        %v491 = vunpack.c.0.s8 %v490
        %v492 = vlaneseq
        %v493 = vshrl.u32 %v492, 7
        %v494 = vsub.s32 %v491, %v493
        %v495 = vrot.slane %v481, %v494
        %v496 = vcombine.high %v488, %v488
        %v497 = vcombine.high %v495, %v495
        %vm502 = vcmask 254976
        %503 = vst.msk [vmem:[#allocation3] sm:$0x3] %vm502, %v488
        %504 = vst.msk [vmem:[#allocation3 + $0x2] sm:$0x3] %vm502, %v496
        %505 = vst.msk [vmem:[#allocation3 + $0x4] sm:$0x3] %vm502, %v495
        %506 = vst.msk [vmem:[#allocation3 + $0x6] sm:$0x3] %vm502, %v497
        %v507 = vsub.f32 1.0, %v407
        %v509 = vcombine.high %v507, %v507
        %v511 = vunpack.c.l.s4 1983009808
        %v512 = vunpack.c.0.s8 %v511
        %v513 = vlaneseq
        %v514 = vshrl.u32 %v513, 7
        %v515 = vsub.s32 %v512, %v514
        %v516 = vrot.slane %v507, %v515
        %v518 = vunpack.c.l.s4 1983009808
        %v519 = vunpack.c.0.s8 %v518
        %v520 = vlaneseq
        %v521 = vshrl.u32 %v520, 7
        %v522 = vsub.s32 %v519, %v521
        %v523 = vrot.slane %v509, %v522
        %v524 = vcombine.high %v516, %v516
        %v525 = vcombine.high %v523, %v523
        %530 = vst.msk [vmem:[#allocation4] sm:$0x3] %vm502, %v516
        %531 = vst.msk [vmem:[#allocation4 + $0x2] sm:$0x3] %vm502, %v524
        %532 = vst.msk [vmem:[#allocation4 + $0x4] sm:$0x3] %vm502, %v523
        %533 = vst.msk [vmem:[#allocation4 + $0x6] sm:$0x3] %vm502, %v525
        %v535 = vcombine.high %v478, %v478
        %v537 = vunpack.c.l.s4 1983009808
        %v538 = vunpack.c.0.s8 %v537
        %v539 = vlaneseq
        %v540 = vshrl.u32 %v539, 7
        %v541 = vsub.s32 %v538, %v540
        %v542 = vrot.slane %v478, %v541
        %v544 = vunpack.c.l.s4 1983009808
        %v545 = vunpack.c.0.s8 %v544
        %v546 = vlaneseq
        %v547 = vshrl.u32 %v546, 7
        %v548 = vsub.s32 %v545, %v547
        %v549 = vrot.slane %v535, %v548
        %v550 = vcombine.high %v542, %v542
        %v551 = vcombine.high %v549, %v549
        %556 = vst.msk [vmem:[#allocation5] sm:$0x3] %vm502, %v542
        %557 = vst.msk [vmem:[#allocation5 + $0x2] sm:$0x3] %vm502, %v550
        %558 = vst.msk [vmem:[#allocation5 + $0x4] sm:$0x3] %vm502, %v549
        %559 = vst.msk [vmem:[#allocation5 + $0x6] sm:$0x3] %vm502, %v551
        %v560 = vld [vmem:[#allocation2] sm:$0x3]
        %v561 = vld [vmem:[#allocation3] sm:$0x3]
        %v562 = vld [vmem:[#allocation4] sm:$0x3]
        %v563 = vmul.f32 %v562, %v560
        %v564 = vadd.f32 %v561, %v563
        %565 = vst.msk [vmem:[#allocation3] sm:$0x3] %vm502, %v564
        %s566 = scalar_lea.vmem [#allocation3], 2
        %v567 = vld [vmem:[%s566] sm:$0x3]
        %s568 = scalar_lea.vmem [#allocation4], 2
        %v569 = vld [vmem:[%s568] sm:$0x3]
        %v570 = vmul.f32 %v569, %v564
        %v571 = vadd.f32 %v567, %v570
        %572 = vst.msk [vmem:[%s566] sm:$0x3] %vm502, %v571
        %s573 = scalar_lea.vmem [#allocation3], 4
        %v574 = vld [vmem:[%s573] sm:$0x3]
        %s575 = scalar_lea.vmem [#allocation4], 4
        %v576 = vld [vmem:[%s575] sm:$0x3]
        %v577 = vmul.f32 %v576, %v571
        %v578 = vadd.f32 %v574, %v577
        %579 = vst.msk [vmem:[%s573] sm:$0x3] %vm502, %v578
        %s580 = scalar_lea.vmem [#allocation3], 6
        %v581 = vld [vmem:[%s580] sm:$0x3]
        %s582 = scalar_lea.vmem [#allocation4], 6
        %v583 = vld [vmem:[%s582] sm:$0x3]
        %v584 = vmul.f32 %v583, %v578
        %v585 = vadd.f32 %v581, %v584
        %586 = vst.msk [vmem:[%s580] sm:$0x3] %vm502, %v585
        %587 = vst.msk [vmem:[#allocation2] sm:$0x3] %vm502, %v585
        %v588 = vld [vmem:[#allocation5] sm:$0x3]
        %v589 = vld [vmem:[#allocation5 + $0x2] sm:$0x3]
        %v590 = vld [vmem:[#allocation5 + $0x4] sm:$0x3]
        %v591 = vld [vmem:[#allocation5 + $0x6] sm:$0x3]
        %v592 = vld [vmem:[#allocation3] sm:$0x3]
        %v593 = vld [vmem:[#allocation3 + $0x2] sm:$0x3]
        %v594 = vld [vmem:[#allocation3 + $0x4] sm:$0x3]
        %v595 = vld [vmem:[#allocation3 + $0x6] sm:$0x3]
        %v596 = vmul.f32 %v588, %v592
        %v597 = vmul.f32 %v589, %v593
        %v598 = vmul.f32 %v590, %v594
        %v599 = vmul.f32 %v591, %v595
        %600 = vst.msk [vmem:[%s214] sm:$0x3] %vm502, %v596
        %601 = vst.msk [vmem:[%s214 + $0x2] sm:$0x3] %vm502, %v597
        %602 = vst.msk [vmem:[%s214 + $0x4] sm:$0x3] %vm502, %v598
        %603 = vst.msk [vmem:[%s214 + $0x6] sm:$0x3] %vm502, %v599
        %p604 = scmp.eq.s32.totalorder %s24, 1
        // Predicated region
        $region37: #{qrnn_forward.3} parent=31 // pred_check
          %p605 = pneg %p604
        $region38: #{qrnn_forward.3} parent=31 // pred_check_branch
          %607 = sbr.rel (%p605) target = $region40
        $region39: #{qrnn_forward.3} parent=31 // pred_region
          %608 = vst.msk [vmem:[%s234] sm:$0x3] %vm502, %v585
        $region40: #{qrnn_forward.3} parent=31 // pred_fallthru
          _
        %s609 = sand.u32 %s111, 1
        %s610 = scalar_lea.sflag [#allocation7], %s609
        %s611 = sand.u32 %s111, 1
        %s612 = smul.addr %s611, 8
        %s613 = scalar_lea.vmem [#allocation6], %s612
        %p614 = scmp.lt.s32.totalorder %s23, 0
        %s615 = scalar_select %p614, %s23, 0
        %s616 = smul.addr %s615, 2
        %s617 = scalar_lea.vmem %s4, %s616
        // Predicated region
        $region41: #{qrnn_forward.3} parent=31 // pred_check
          %p618 = pneg %p121
        $region42: #{qrnn_forward.3} parent=31 // pred_check_branch
          %620 = sbr.rel (%p618) target = $region44
        $region43: #{qrnn_forward.3} parent=31 // pred_region
          %s621 = smul.u32 4, %s24
          %s623 = ssub.s32 128, 128
          %624 = vsyncadd %s610, %s623
          %s625 = sadd.s32 %s23, %s621
          %s626 = smul.addr %s625, 32
          %s627 = scalar_lea.hbm %s3, %s626
          %s628 = sshll.u32 %s613, 4
          %s629 = int_to_ptr.vmem [resolvable:$true] %s628
          %634 = dma.vmem_to_hbm [thread:$0]  %s629, 128, %s627, %s610, 32, 32, 2
        $region44: #{qrnn_forward.3} parent=31 // pred_fallthru
          _
        // Predicated region
        $region45: #{qrnn_forward.3} parent=31 // pred_check
          %p635 = pneg %p147
        $region46: #{qrnn_forward.3} parent=31 // pred_check_branch
          %637 = sbr.rel (%p635) target = $region48
        $region47: #{qrnn_forward.3} parent=31 // pred_region
          _
        $region48: #{qrnn_forward.3} parent=31 // pred_fallthru
          _
        // Predicated region
        $region49: #{qrnn_forward.3} parent=31 // pred_check
          %p638 = pneg %p147
        $region50: #{qrnn_forward.3} parent=31 // pred_check_branch
          %640 = sbr.rel (%p638) target = $region52
        $region51: #{qrnn_forward.3} parent=31 // pred_region
          %p641 = scmp.lt.s32.totalorder %s23, 0
          %s642 = scalar_select %p641, %s23, 0
          %s643 = smul.addr %s642, 2
          %s644 = scalar_lea.vmem %s4, %s643
        $region52: #{qrnn_forward.3} parent=31 // pred_fallthru
          _
      $region32: #{qrnn_forward.3} parent=5 // pred_fallthru
        _
      %p645 = scmp.le.s32.totalorder 2, %s14
      // Predicated region
      $region53: #{qrnn_forward.3} parent=5 // pred_check
        %p646 = pneg %p645
      $region54: #{qrnn_forward.3} parent=5 // pred_check_branch
        %648 = sbr.rel (%p646) target = $region56
      $region55: #{qrnn_forward.3} parent=5 // pred_region
        %s649 = ssub.s32 %s14, 2
        // Predicated region
        $region57: #{qrnn_forward.3} parent=55 // pred_check
          %p650 = pneg %p127
        $region58: #{qrnn_forward.3} parent=55 // pred_check_branch
          %652 = sbr.rel (%p650) target = $region60
        $region59: #{qrnn_forward.3} parent=55 // pred_region
          %s653 = sand.u32 %s112, 1
          %s654 = scalar_lea.sflag [#allocation7], %s653
          %s655 = sand.u32 %s112, 1
          %s656 = smul.addr %s655, 8
          %s657 = scalar_lea.vmem [#allocation6], %s656
          %658 = dma.done %s654, 128
        $region60: #{qrnn_forward.3} parent=55 // pred_fallthru
          _
      $region56: #{qrnn_forward.3} parent=5 // pred_fallthru
        _
    $region6: #{qrnn_forward.3} parent=1 // loop_footer
      %s18 = sadd.s32 1, %s14
    $region7: #{qrnn_forward.3} parent=1 // loop_footer_branch
      %13 = sbr.rel target = $region3
    $region8: #{qrnn_forward.3} parent=1 // loop_exit
      _
    %659 = vsyncpa [#allocation7], 1
    %s660 = scalar_lea.sflag [#allocation7], 1
    %661 = vsyncpa %s660, 1

// kernel: qrnn_forward.2
$region0: #{qrnn_forward.2}
  #allocation0 [shape = 'u32[]', space=smem, size = 0x4, offset = 0x4, fixed_abs, tag = 'smem constant byte address 0x4 - core index']
  #allocation1 [shape = 'u32[144,128]{1,0:T(1,128)}', space=vmem, size = 0x12000, scoped, tag = 'internal scratch']
  #allocation2 [shape = 'f32[2,32]{1,0:T(2,128)}', space=vmem, size = 0x400, scoped, tag = 'scratch operand']
  #allocation3 [shape = 'f32[4,2,32]{2,1,0:T(2,128)}', space=vmem, size = 0x1000, scoped, tag = 'scratch operand']
  #allocation4 [shape = 'f32[4,2,32]{2,1,0:T(2,128)}', space=vmem, size = 0x1000, scoped, tag = 'scratch operand']
  #allocation5 [shape = 'f32[4,2,32]{2,1,0:T(2,128)}', space=vmem, size = 0x1000, scoped, tag = 'scratch operand']
  %s0 = inlined_call_operand.vmem [shape: f32[8,2,16], index: 0, kind: input, shape index: {}]
  %s1 = inlined_call_operand.vmem [shape: bf16[3,16,32], index: 1, kind: input, shape index: {}]
  %s2 = inlined_call_operand.vmem [shape: f32[3,1,32], index: 2, kind: input, shape index: {}]
  %s3 = inlined_call_operand.vmem [shape: f32[8,2,32], index: 3, kind: output, shape index: {0}]
  %s4 = inlined_call_operand.vmem [shape: f32[2,32], index: 4, kind: output, shape index: {1}]
  %5 = xla_tuple %s3, %s4
  %s6 = sld [smem:[#allocation0]]
  $region61: #{qrnn_forward.2} parent=0
    _
  %s8 = ssub.s32 1, %s6
  %s9 = scalar_select 0, %s8, %s6
  loop: start=0, step=1, limit=4
  $region2: #{qrnn_forward.2} parent=0 // loop_pre_header
    _
  $region3: #{qrnn_forward.2} parent=0 // loop_header
    %s11 = sphi 0, %s15
    %p12 = scmp.ge.s32.totalorder %s11, 4
    %s18 = sphi 0, %s30
    %s19 = sphi 0, %s26
    %s20 = sphi 0, %s18
    %s21 = sphi 0, %s19
    %s22 = sphi 0, %s20
    %s23 = sphi 0, %s21
    %s35 = sphi 0, %s37
    %s38 = sphi 0, %s35
    %s39 = sphi 0, %s38
    %s55 = sphi 0, %s39
    %s59 = sphi 0, %s59
    %s61 = sphi 0, %s59
    %s62 = sphi 0, %s61
    %s76 = sphi 0, %s62
    %s80 = sphi 0, %s80
    %s82 = sphi 0, %s80
    %s83 = sphi 0, %s82
    %s97 = sphi 0, %s83
    %s105 = sphi 0, %s107
    %s108 = sphi 0, %s105
    %s109 = sphi 0, %s108
    %s125 = sphi 0, %s109
    %s131 = sphi 0, %s133
    %s134 = sphi 0, %s131
    %s135 = sphi 0, %s134
    %s151 = sphi 0, %s135
  $region4: #{qrnn_forward.2} parent=0 // loop_header_branch
    %14 = sbr.rel (%p12) target = $region8
  $region5: #{qrnn_forward.2} parent=0 // loop_body
    %s16 = ssub.s32 %s11, 1
    %s17 = ssub.s32 %s11, 2
    %s24 = sadd.s32 1, %s19
    %p25 = scmp.ge.s32.totalorder %s24, 2
    %s26 = scalar_select %p25, 0, %s24
    %s27 = sadd.s32 1, %s18
    %s28 = scalar_select %p25, %s27, %s18
    %p29 = scmp.ge.s32.totalorder %s28, 1
    %s30 = scalar_select %p29, 0, %s28
    %s31 = ssub.s32 %s19, %s26
    %s32 = ssub.s32 %s18, %s30
    %s33 = sor.u32 %s31, %s32
    %p34 = scmp.eq.s32.totalorder %s33, 0
    %s36 = sadd.s32 %s35, 1
    %s37 = scalar_select %p34, %s35, %s36
    %p40 = pneg %p34
    %p41 = scmp.eq.s32.totalorder %s11, 1
    %p42 = por %p40, %p41
    %p43 = scmp.ne.s32.totalorder %s35, %s38
    %p44 = scmp.eq.s32.totalorder %s11, 0
    %p45 = por %p43, %p44
    %p46 = scmp.ne.s32.totalorder %s35, %s38
    %p47 = scmp.eq.s32.totalorder %s16, 1
    %p48 = por %p46, %p47
    %p49 = scmp.ne.s32.totalorder %s38, %s39
    %p50 = scmp.eq.s32.totalorder %s16, 0
    %p51 = por %p49, %p50
    %p52 = scmp.ne.s32.totalorder %s38, %s39
    %p53 = scmp.eq.s32.totalorder %s17, 1
    %p54 = por %p52, %p53
    %p56 = scmp.ne.s32.totalorder %s39, %s55
    %p57 = scmp.eq.s32.totalorder %s17, 0
    %p58 = por %p56, %p57
    %s60 = sadd.s32 %s59, 1
    %p63 = scmp.eq.s32.totalorder %s11, 1
    %p64 = scmp.ne.s32.totalorder %s59, %s61
    %p65 = scmp.eq.s32.totalorder %s11, 0
    %p66 = por %p64, %p65
    %p67 = scmp.ne.s32.totalorder %s59, %s61
    %p68 = scmp.eq.s32.totalorder %s16, 1
    %p69 = por %p67, %p68
    %p70 = scmp.ne.s32.totalorder %s61, %s62
    %p71 = scmp.eq.s32.totalorder %s16, 0
    %p72 = por %p70, %p71
    %p73 = scmp.ne.s32.totalorder %s61, %s62
    %p74 = scmp.eq.s32.totalorder %s17, 1
    %p75 = por %p73, %p74
    %p77 = scmp.ne.s32.totalorder %s62, %s76
    %p78 = scmp.eq.s32.totalorder %s17, 0
    %p79 = por %p77, %p78
    %s81 = sadd.s32 %s80, 1
    %p84 = scmp.eq.s32.totalorder %s11, 1
    %p85 = scmp.ne.s32.totalorder %s80, %s82
    %p86 = scmp.eq.s32.totalorder %s11, 0
    %p87 = por %p85, %p86
    %p88 = scmp.ne.s32.totalorder %s80, %s82
    %p89 = scmp.eq.s32.totalorder %s16, 1
    %p90 = por %p88, %p89
    %p91 = scmp.ne.s32.totalorder %s82, %s83
    %p92 = scmp.eq.s32.totalorder %s16, 0
    %p93 = por %p91, %p92
    %p94 = scmp.ne.s32.totalorder %s82, %s83
    %p95 = scmp.eq.s32.totalorder %s17, 1
    %p96 = por %p94, %p95
    %p98 = scmp.ne.s32.totalorder %s83, %s97
    %p99 = scmp.eq.s32.totalorder %s17, 0
    %p100 = por %p98, %p99
    %s101 = ssub.s32 %s19, %s26
    %s102 = ssub.s32 %s18, %s30
    %s103 = sor.u32 %s101, %s102
    %p104 = scmp.eq.s32.totalorder %s103, 0
    %s106 = sadd.s32 %s105, 1
    %s107 = scalar_select %p104, %s105, %s106
    %p110 = pneg %p104
    %p111 = scmp.eq.s32.totalorder %s11, 1
    %p112 = por %p110, %p111
    %p113 = scmp.ne.s32.totalorder %s105, %s108
    %p114 = scmp.eq.s32.totalorder %s11, 0
    %p115 = por %p113, %p114
    %p116 = scmp.ne.s32.totalorder %s105, %s108
    %p117 = scmp.eq.s32.totalorder %s16, 1
    %p118 = por %p116, %p117
    %p119 = scmp.ne.s32.totalorder %s108, %s109
    %p120 = scmp.eq.s32.totalorder %s16, 0
    %p121 = por %p119, %p120
    %p122 = scmp.ne.s32.totalorder %s108, %s109
    %p123 = scmp.eq.s32.totalorder %s17, 1
    %p124 = por %p122, %p123
    %p126 = scmp.ne.s32.totalorder %s109, %s125
    %p127 = scmp.eq.s32.totalorder %s17, 0
    %p128 = por %p126, %p127
    %s129 = ssub.s32 %s18, %s30
    %p130 = scmp.eq.s32.totalorder %s129, 0
    %s132 = sadd.s32 %s131, 1
    %s133 = scalar_select %p130, %s131, %s132
    %p136 = pneg %p130
    %p137 = scmp.eq.s32.totalorder %s11, 1
    %p138 = por %p136, %p137
    %p139 = scmp.ne.s32.totalorder %s131, %s134
    %p140 = scmp.eq.s32.totalorder %s11, 0
    %p141 = por %p139, %p140
    %p142 = scmp.ne.s32.totalorder %s131, %s134
    %p143 = scmp.eq.s32.totalorder %s16, 1
    %p144 = por %p142, %p143
    %p145 = scmp.ne.s32.totalorder %s134, %s135
    %p146 = scmp.eq.s32.totalorder %s16, 0
    %p147 = por %p145, %p146
    %p148 = scmp.ne.s32.totalorder %s134, %s135
    %p149 = scmp.eq.s32.totalorder %s17, 1
    %p150 = por %p148, %p149
    %p152 = scmp.ne.s32.totalorder %s135, %s151
    %p153 = scmp.eq.s32.totalorder %s17, 0
    %p154 = por %p152, %p153
    %p155 = scmp.le.s32.totalorder 1, %s11
    %p156 = scmp.lt.s32.totalorder %s11, 3
    %p157 = pnand %p155, %p156
    %p158 = pneg %p157
    // Predicated region
    $region9: #{qrnn_forward.2} parent=5 // pred_check
      _
    $region10: #{qrnn_forward.2} parent=5 // pred_check_branch
      %160 = sbr.rel (%p157) target = $region12
    $region11: #{qrnn_forward.2} parent=5 // pred_region
      %s161 = ssub.s32 %s11, 1
      // Predicated region
      $region13: #{qrnn_forward.2} parent=11 // pred_check
        %p162 = pneg %p72
      $region14: #{qrnn_forward.2} parent=11 // pred_check_branch
        %164 = sbr.rel (%p162) target = $region16
      $region15: #{qrnn_forward.2} parent=11 // pred_region
        _
      $region16: #{qrnn_forward.2} parent=11 // pred_fallthru
        _
      // Predicated region
      $region17: #{qrnn_forward.2} parent=11 // pred_check
        %p165 = pneg %p93
      $region18: #{qrnn_forward.2} parent=11 // pred_check_branch
        %167 = sbr.rel (%p165) target = $region20
      $region19: #{qrnn_forward.2} parent=11 // pred_region
        _
      $region20: #{qrnn_forward.2} parent=11 // pred_fallthru
        _
    $region12: #{qrnn_forward.2} parent=5 // pred_fallthru
      _
    %p168 = scmp.lt.s32.totalorder %s11, 2
    // Predicated region
    $region21: #{qrnn_forward.2} parent=5 // pred_check
      %p169 = pneg %p168
    $region22: #{qrnn_forward.2} parent=5 // pred_check_branch
      %171 = sbr.rel (%p169) target = $region24
    $region23: #{qrnn_forward.2} parent=5 // pred_region
      // Predicated region
      $region25: #{qrnn_forward.2} parent=23 // pred_check
        %p172 = pneg %p45
      $region26: #{qrnn_forward.2} parent=23 // pred_check_branch
        %174 = sbr.rel (%p172) target = $region28
      $region27: #{qrnn_forward.2} parent=23 // pred_region
        %s175 = smul.u32 4, %s19
        %p176 = scmp.lt.s32.totalorder %s175, 7
        %s177 = scalar_select %p176, %s175, 7
        %p178 = scmp.lt.s32.totalorder %s18, 0
        %s179 = scalar_select %p178, %s18, 0
        %s180 = sadd.s32 %s179, %s177
        %s181 = smul.addr %s180, 2
        %s182 = scalar_lea.vmem %s0, %s181
        %s183 = smul.u32 4, %s19
      $region28: #{qrnn_forward.2} parent=23 // pred_fallthru
        _
    $region24: #{qrnn_forward.2} parent=5 // pred_fallthru
      _
    %p184 = scmp.le.s32.totalorder 1, %s11
    %p185 = scmp.lt.s32.totalorder %s11, 3
    %p186 = pnand %p184, %p185
    %p187 = pneg %p186
    // Predicated region
    $region29: #{qrnn_forward.2} parent=5 // pred_check
      _
    $region30: #{qrnn_forward.2} parent=5 // pred_check_branch
      %189 = sbr.rel (%p186) target = $region32
    $region31: #{qrnn_forward.2} parent=5 // pred_region
      %s190 = ssub.s32 %s11, 1
      %s191 = smul.u32 4, %s21
      %p192 = scmp.lt.s32.totalorder %s191, 7
      %s193 = scalar_select %p192, %s191, 7
      %p194 = scmp.lt.s32.totalorder %s20, 0
      %s195 = scalar_select %p194, %s20, 0
      %s196 = sadd.s32 %s195, %s193
      %s197 = smul.addr %s196, 2
      %s198 = scalar_lea.vmem %s0, %s197
      %p199 = pneg %p51
      %p200 = pneg %p48
      %p201 = pneg %p72
      %p202 = pneg %p69
      %p203 = pneg %p93
      %p204 = pneg %p90
      %p205 = pneg %p121
      %p206 = pneg %p118
      %s207 = smul.u32 4, %s21
      %p208 = scmp.lt.s32.totalorder %s207, 7
      %s209 = scalar_select %p208, %s207, 7
      %p210 = scmp.lt.s32.totalorder %s20, 0
      %s211 = scalar_select %p210, %s20, 0
      %s212 = sadd.s32 %s211, %s209
      %s213 = smul.addr %s212, 2
      %s214 = scalar_lea.vmem %s3, %s213
      %p215 = pneg %p147
      %p216 = pneg %p144
      %p217 = scmp.lt.s32.totalorder %s20, 0
      %s218 = scalar_select %p217, %s20, 0
      %s219 = smul.addr %s218, 2
      %s220 = scalar_lea.vmem %s4, %s219
      %s221 = smul.u32 4, %s21
      %p222 = scmp.lt.s32.totalorder %s221, 7
      %s223 = scalar_select %p222, %s221, 7
      %p224 = scmp.lt.s32.totalorder %s20, 0
      %s225 = scalar_select %p224, %s20, 0
      %s226 = sadd.s32 %s225, %s223
      %s227 = smul.addr %s226, 2
      %s228 = scalar_lea.vmem %s0, %s227
      %s229 = smul.u32 4, %s21
      %s230 = smul.u32 4, %s21
      %p231 = scmp.lt.s32.totalorder %s230, 7
      %s232 = scalar_select %p231, %s230, 7
      %p233 = scmp.lt.s32.totalorder %s20, 0
      %s234 = scalar_select %p233, %s20, 0
      %s235 = sadd.s32 %s234, %s232
      %s236 = smul.addr %s235, 2
      %s237 = scalar_lea.vmem %s3, %s236
      %s238 = smul.u32 4, %s21
      %p239 = scmp.lt.s32.totalorder %s20, 0
      %s240 = scalar_select %p239, %s20, 0
      %s241 = smul.addr %s240, 2
      %s242 = scalar_lea.vmem %s4, %s241
      %p244 = scmp.eq.s32.totalorder %s21, 0
      // Predicated region
      $region33: #{qrnn_forward.2} parent=31 // pred_check
        %p245 = pneg %p244
      $region34: #{qrnn_forward.2} parent=31 // pred_check_branch
        %247 = sbr.rel (%p245) target = $region36
      $region35: #{qrnn_forward.2} parent=31 // pred_region
        %vm248 = vcmask 254976
        %249 = vst.msk [vmem:[#allocation2] sm:$0x3] %vm248, 0.0
      $region36: #{qrnn_forward.2} parent=31 // pred_fallthru
        _
      %v250 = vld [vmem:[%s228] sm:$0x3]
      %v251 = vld [vmem:[%s228 + $0x2] sm:$0x3]
      %v252 = vld [vmem:[%s228 + $0x4] sm:$0x3]
      %v253 = vld [vmem:[%s228 + $0x6] sm:$0x3]
      %v258 = vcombine.low %v250, %v251
      %v259 = vcombine.low %v252, %v253
      %v261 = vunpack.c.l.s4 1983009808
      %v262 = vunpack.c.0.s8 %v261
      %v263 = vlaneseq
      %v264 = vshrl.u32 %v263, 7
      %v265 = vsub.s32 %v262, %v264
      %v266 = vrot.slane %v258, %v265
      %v268 = vunpack.c.l.s4 1983009808
      %v269 = vunpack.c.0.s8 %v268
      %v270 = vlaneseq
      %v271 = vshrl.u32 %v270, 7
      %v272 = vsub.s32 %v269, %v271
      %v273 = vrot.slane %v259, %v272
      %v274 = vcombine.low %v266, %v273
      %v276 = vpack.c.bf16 %v274, %v274
      %v277 = vld [vmem:[%s1] sm:$0xf]
      %v278 = vld [vmem:[%s1 + $0x4] sm:$0xf]
      %v279 = vld [vmem:[%s2] sm:$0x1]
      %v281 = vlaneseq
      %v282 = vshrl.u32 %v281, 7
      %v283 = vsub.s32 0, %v282
      %v284 = vrot.slane %v279, %v283
      %v288 = vunpack.c.l.b16 %v277
      %v289 = vunpack.c.l.b16 %v278
      %v290 = vpack.c.b16 %v289, %v288
      %vm292 = vcmask 130048
      %v294 = vsel %vm292, %v276, 0
      %296 = vmatprep.subr.bf16.mxu0 0
      %297 = vmatpush1.bf16.msra.mxu0 0
      %298 = vmatprep.subr.bf16.mxu0 0
      %299 = vmatpush1.bf16.msra.mxu0 0
      %300 = vmatprep.subr.bf16.mxu0 0
      %301 = vmatpush1.bf16.msra.mxu0 0
      %302 = vmatprep.subr.bf16.mxu0 0
      %303 = vmatpush1.bf16.msra.mxu0 0
      %304 = vmatprep.subr.bf16.mxu0 0
      %305 = vmatpush1.bf16.msra.mxu0 0
      %306 = vmatprep.subr.bf16.mxu0 0
      %307 = vmatpush1.bf16.msra.mxu0 0
      %308 = vmatprep.subr.bf16.mxu0 0
      %309 = vmatpush1.bf16.msra.mxu0 0
      %310 = vmatprep.subr.bf16.mxu0 0
      %311 = vmatpush1.bf16.msra.mxu0 %v290
      %312 = vmatprep.subr.bf16.mxu0 0
      %313 = vmatpush2.bf16.msra.mxu0 0
      %314 = vmatprep.subr.bf16.mxu0 0
      %315 = vmatpush2.bf16.msra.mxu0 0
      %316 = vmatprep.subr.bf16.mxu0 0
      %317 = vmatpush2.bf16.msra.mxu0 0
      %318 = vmatprep.subr.bf16.mxu0 0
      %319 = vmatpush2.bf16.msra.mxu0 0
      %320 = vmatprep.subr.bf16.mxu0 0
      %321 = vmatpush2.bf16.msra.mxu0 0
      %322 = vmatprep.subr.bf16.mxu0 0
      %323 = vmatpush2.bf16.msra.mxu0 0
      %324 = vmatprep.subr.bf16.mxu0 0
      %325 = vmatpush2.bf16.msra.mxu0 0
      %326 = vmatprep.subr.bf16.mxu0 0
      %327 = vmatpush2.bf16.msra.mxu0 0
      %328 = vmatprep.mubr.bf16.mxu0 0
      %329 = vmatmul.mubr.bf16.gmra.mxu0 %v294
      %v330 = vpop.f32.mrf.mxu0
      %v331 = vadd.f32 %v284, %v330
      %v332 = vpop.f32.mrf.mxu0
      %v333 = vpop.f32.mrf.mxu0
      %v334 = vpop.f32.mrf.mxu0
      %335 = vdwg.mxu0
      %v336 = vtanh.pop %v331
      %s337 = scalar_lea.vmem %s1, 8
      %v338 = vld [vmem:[%s337] sm:$0xf]
      %v339 = vld [vmem:[%s337 + $0x4] sm:$0xf]
      %s340 = scalar_lea.vmem %s2, 1
      %v341 = vld [vmem:[%s340] sm:$0x1]
      %v343 = vlaneseq
      %v344 = vshrl.u32 %v343, 7
      %v345 = vsub.s32 0, %v344
      %v346 = vrot.slane %v341, %v345
      %v350 = vunpack.c.l.b16 %v338
      %v351 = vunpack.c.l.b16 %v339
      %v352 = vpack.c.b16 %v351, %v350
      %354 = vmatprep.subr.bf16.mxu0 0
      %355 = vmatpush1.bf16.msra.mxu0 0
      %356 = vmatprep.subr.bf16.mxu0 0
      %357 = vmatpush1.bf16.msra.mxu0 0
      %358 = vmatprep.subr.bf16.mxu0 0
      %359 = vmatpush1.bf16.msra.mxu0 0
      %360 = vmatprep.subr.bf16.mxu0 0
      %361 = vmatpush1.bf16.msra.mxu0 0
      %362 = vmatprep.subr.bf16.mxu0 0
      %363 = vmatpush1.bf16.msra.mxu0 0
      %364 = vmatprep.subr.bf16.mxu0 0
      %365 = vmatpush1.bf16.msra.mxu0 0
      %366 = vmatprep.subr.bf16.mxu0 0
      %367 = vmatpush1.bf16.msra.mxu0 0
      %368 = vmatprep.subr.bf16.mxu0 0
      %369 = vmatpush1.bf16.msra.mxu0 %v352
      %370 = vmatprep.subr.bf16.mxu0 0
      %371 = vmatpush2.bf16.msra.mxu0 0
      %372 = vmatprep.subr.bf16.mxu0 0
      %373 = vmatpush2.bf16.msra.mxu0 0
      %374 = vmatprep.subr.bf16.mxu0 0
      %375 = vmatpush2.bf16.msra.mxu0 0
      %376 = vmatprep.subr.bf16.mxu0 0
      %377 = vmatpush2.bf16.msra.mxu0 0
      %378 = vmatprep.subr.bf16.mxu0 0
      %379 = vmatpush2.bf16.msra.mxu0 0
      %380 = vmatprep.subr.bf16.mxu0 0
      %381 = vmatpush2.bf16.msra.mxu0 0
      %382 = vmatprep.subr.bf16.mxu0 0
      %383 = vmatpush2.bf16.msra.mxu0 0
      %384 = vmatprep.subr.bf16.mxu0 0
      %385 = vmatpush2.bf16.msra.mxu0 0
      %386 = vmatprep.mubr.bf16.mxu0 0
      %387 = vmatmul.mubr.bf16.gmra.mxu0 %v294
      %v388 = vpop.f32.mrf.mxu0
      %v389 = vadd.f32 %v346, %v388
      %v390 = vpop.f32.mrf.mxu0
      %v391 = vpop.f32.mrf.mxu0
      %v392 = vpop.f32.mrf.mxu0
      %393 = vdwg.mxu0
      %v394 = vxor.u32 %v389, 2147483648
      %v395 = vmul.f32 %v394, 1.442695
      %v396 = vpow.pop %v395
      %v397 = vadd.f32 %v396, 1.0
      %v398 = vrcp.pop %v397
      %v399 = vmul.f32 1.0, %v398
      %s400 = scalar_lea.vmem %s1, 16
      %v401 = vld [vmem:[%s400] sm:$0xf]
      %v402 = vld [vmem:[%s400 + $0x4] sm:$0xf]
      %s403 = scalar_lea.vmem %s2, 2
      %v404 = vld [vmem:[%s403] sm:$0x1]
      %v406 = vlaneseq
      %v407 = vshrl.u32 %v406, 7
      %v408 = vsub.s32 0, %v407
      %v409 = vrot.slane %v404, %v408
      %v413 = vunpack.c.l.b16 %v401
      %v414 = vunpack.c.l.b16 %v402
      %v415 = vpack.c.b16 %v414, %v413
      %417 = vmatprep.subr.bf16.mxu0 0
      %418 = vmatpush1.bf16.msra.mxu0 0
      %419 = vmatprep.subr.bf16.mxu0 0
      %420 = vmatpush1.bf16.msra.mxu0 0
      %421 = vmatprep.subr.bf16.mxu0 0
      %422 = vmatpush1.bf16.msra.mxu0 0
      %423 = vmatprep.subr.bf16.mxu0 0
      %424 = vmatpush1.bf16.msra.mxu0 0
      %425 = vmatprep.subr.bf16.mxu0 0
      %426 = vmatpush1.bf16.msra.mxu0 0
      %427 = vmatprep.subr.bf16.mxu0 0
      %428 = vmatpush1.bf16.msra.mxu0 0
      %429 = vmatprep.subr.bf16.mxu0 0
      %430 = vmatpush1.bf16.msra.mxu0 0
      %431 = vmatprep.subr.bf16.mxu0 0
      %432 = vmatpush1.bf16.msra.mxu0 %v415
      %433 = vmatprep.subr.bf16.mxu0 0
      %434 = vmatpush2.bf16.msra.mxu0 0
      %435 = vmatprep.subr.bf16.mxu0 0
      %436 = vmatpush2.bf16.msra.mxu0 0
      %437 = vmatprep.subr.bf16.mxu0 0
      %438 = vmatpush2.bf16.msra.mxu0 0
      %439 = vmatprep.subr.bf16.mxu0 0
      %440 = vmatpush2.bf16.msra.mxu0 0
      %441 = vmatprep.subr.bf16.mxu0 0
      %442 = vmatpush2.bf16.msra.mxu0 0
      %443 = vmatprep.subr.bf16.mxu0 0
      %444 = vmatpush2.bf16.msra.mxu0 0
      %445 = vmatprep.subr.bf16.mxu0 0
      %446 = vmatpush2.bf16.msra.mxu0 0
      %447 = vmatprep.subr.bf16.mxu0 0
      %448 = vmatpush2.bf16.msra.mxu0 0
      %449 = vmatprep.mubr.bf16.mxu0 0
      %450 = vmatmul.mubr.bf16.gmra.mxu0 %v294
      %v451 = vpop.f32.mrf.mxu0
      %v452 = vadd.f32 %v409, %v451
      %v453 = vpop.f32.mrf.mxu0
      %v454 = vpop.f32.mrf.mxu0
      %v455 = vpop.f32.mrf.mxu0
      %456 = vdwg.mxu0
      %v457 = vxor.u32 %v452, 2147483648
      %v458 = vmul.f32 %v457, 1.442695
      %v459 = vpow.pop %v458
      %v460 = vadd.f32 %v459, 1.0
      %v461 = vrcp.pop %v460
      %v462 = vmul.f32 1.0, %v461
      %v463 = vmul.f32 %v399, %v336
      %v465 = vcombine.high %v463, %v463
      %v467 = vunpack.c.l.s4 1983009808
      %v468 = vunpack.c.0.s8 %v467
      %v469 = vlaneseq
      %v470 = vshrl.u32 %v469, 7
      %v471 = vsub.s32 %v468, %v470
      %v472 = vrot.slane %v463, %v471
      %v474 = vunpack.c.l.s4 1983009808
      %v475 = vunpack.c.0.s8 %v474
      %v476 = vlaneseq
      %v477 = vshrl.u32 %v476, 7
      %v478 = vsub.s32 %v475, %v477
      %v479 = vrot.slane %v465, %v478
      %v480 = vcombine.high %v472, %v472
      %v481 = vcombine.high %v479, %v479
      %vm486 = vcmask 254976
      %487 = vst.msk [vmem:[#allocation3] sm:$0x3] %vm486, %v472
      %488 = vst.msk [vmem:[#allocation3 + $0x2] sm:$0x3] %vm486, %v480
      %489 = vst.msk [vmem:[#allocation3 + $0x4] sm:$0x3] %vm486, %v479
      %490 = vst.msk [vmem:[#allocation3 + $0x6] sm:$0x3] %vm486, %v481
      %v491 = vsub.f32 1.0, %v399
      %v493 = vcombine.high %v491, %v491
      %v495 = vunpack.c.l.s4 1983009808
      %v496 = vunpack.c.0.s8 %v495
      %v497 = vlaneseq
      %v498 = vshrl.u32 %v497, 7
      %v499 = vsub.s32 %v496, %v498
      %v500 = vrot.slane %v491, %v499
      %v502 = vunpack.c.l.s4 1983009808
      %v503 = vunpack.c.0.s8 %v502
      %v504 = vlaneseq
      %v505 = vshrl.u32 %v504, 7
      %v506 = vsub.s32 %v503, %v505
      %v507 = vrot.slane %v493, %v506
      %v508 = vcombine.high %v500, %v500
      %v509 = vcombine.high %v507, %v507
      %514 = vst.msk [vmem:[#allocation4] sm:$0x3] %vm486, %v500
      %515 = vst.msk [vmem:[#allocation4 + $0x2] sm:$0x3] %vm486, %v508
      %516 = vst.msk [vmem:[#allocation4 + $0x4] sm:$0x3] %vm486, %v507
      %517 = vst.msk [vmem:[#allocation4 + $0x6] sm:$0x3] %vm486, %v509
      %v519 = vcombine.high %v462, %v462
      %v521 = vunpack.c.l.s4 1983009808
      %v522 = vunpack.c.0.s8 %v521
      %v523 = vlaneseq
      %v524 = vshrl.u32 %v523, 7
      %v525 = vsub.s32 %v522, %v524
      %v526 = vrot.slane %v462, %v525
      %v528 = vunpack.c.l.s4 1983009808
      %v529 = vunpack.c.0.s8 %v528
      %v530 = vlaneseq
      %v531 = vshrl.u32 %v530, 7
      %v532 = vsub.s32 %v529, %v531
      %v533 = vrot.slane %v519, %v532
      %v534 = vcombine.high %v526, %v526
      %v535 = vcombine.high %v533, %v533
      %540 = vst.msk [vmem:[#allocation5] sm:$0x3] %vm486, %v526
      %541 = vst.msk [vmem:[#allocation5 + $0x2] sm:$0x3] %vm486, %v534
      %542 = vst.msk [vmem:[#allocation5 + $0x4] sm:$0x3] %vm486, %v533
      %543 = vst.msk [vmem:[#allocation5 + $0x6] sm:$0x3] %vm486, %v535
      %v544 = vld [vmem:[#allocation2] sm:$0x3]
      %v545 = vld [vmem:[#allocation3] sm:$0x3]
      %v546 = vld [vmem:[#allocation4] sm:$0x3]
      %v547 = vmul.f32 %v546, %v544
      %v548 = vadd.f32 %v545, %v547
      %549 = vst.msk [vmem:[#allocation3] sm:$0x3] %vm486, %v548
      %s550 = scalar_lea.vmem [#allocation3], 2
      %v551 = vld [vmem:[%s550] sm:$0x3]
      %s552 = scalar_lea.vmem [#allocation4], 2
      %v553 = vld [vmem:[%s552] sm:$0x3]
      %v554 = vmul.f32 %v553, %v548
      %v555 = vadd.f32 %v551, %v554
      %556 = vst.msk [vmem:[%s550] sm:$0x3] %vm486, %v555
      %s557 = scalar_lea.vmem [#allocation3], 4
      %v558 = vld [vmem:[%s557] sm:$0x3]
      %s559 = scalar_lea.vmem [#allocation4], 4
      %v560 = vld [vmem:[%s559] sm:$0x3]
      %v561 = vmul.f32 %v560, %v555
      %v562 = vadd.f32 %v558, %v561
      %563 = vst.msk [vmem:[%s557] sm:$0x3] %vm486, %v562
      %s564 = scalar_lea.vmem [#allocation3], 6
      %v565 = vld [vmem:[%s564] sm:$0x3]
      %s566 = scalar_lea.vmem [#allocation4], 6
      %v567 = vld [vmem:[%s566] sm:$0x3]
      %v568 = vmul.f32 %v567, %v562
      %v569 = vadd.f32 %v565, %v568
      %570 = vst.msk [vmem:[%s564] sm:$0x3] %vm486, %v569
      %571 = vst.msk [vmem:[#allocation2] sm:$0x3] %vm486, %v569
      %v572 = vld [vmem:[#allocation5] sm:$0x3]
      %v573 = vld [vmem:[#allocation5 + $0x2] sm:$0x3]
      %v574 = vld [vmem:[#allocation5 + $0x4] sm:$0x3]
      %v575 = vld [vmem:[#allocation5 + $0x6] sm:$0x3]
      %v576 = vld [vmem:[#allocation3] sm:$0x3]
      %v577 = vld [vmem:[#allocation3 + $0x2] sm:$0x3]
      %v578 = vld [vmem:[#allocation3 + $0x4] sm:$0x3]
      %v579 = vld [vmem:[#allocation3 + $0x6] sm:$0x3]
      %v580 = vmul.f32 %v572, %v576
      %v581 = vmul.f32 %v573, %v577
      %v582 = vmul.f32 %v574, %v578
      %v583 = vmul.f32 %v575, %v579
      %584 = vst.msk [vmem:[%s237] sm:$0x3] %vm486, %v580
      %585 = vst.msk [vmem:[%s237 + $0x2] sm:$0x3] %vm486, %v581
      %586 = vst.msk [vmem:[%s237 + $0x4] sm:$0x3] %vm486, %v582
      %587 = vst.msk [vmem:[%s237 + $0x6] sm:$0x3] %vm486, %v583
      %p588 = scmp.eq.s32.totalorder %s21, 1
      // Predicated region
      $region37: #{qrnn_forward.2} parent=31 // pred_check
        %p589 = pneg %p588
      $region38: #{qrnn_forward.2} parent=31 // pred_check_branch
        %591 = sbr.rel (%p589) target = $region40
      $region39: #{qrnn_forward.2} parent=31 // pred_region
        %592 = vst.msk [vmem:[%s242] sm:$0x3] %vm486, %v569
      $region40: #{qrnn_forward.2} parent=31 // pred_fallthru
        _
      %s593 = smul.u32 4, %s21
      %p594 = scmp.lt.s32.totalorder %s593, 7
      %s595 = scalar_select %p594, %s593, 7
      %p596 = scmp.lt.s32.totalorder %s20, 0
      %s597 = scalar_select %p596, %s20, 0
      %s598 = sadd.s32 %s597, %s595
      %s599 = smul.addr %s598, 2
      %s600 = scalar_lea.vmem %s3, %s599
      %p601 = scmp.lt.s32.totalorder %s20, 0
      %s602 = scalar_select %p601, %s20, 0
      %s603 = smul.addr %s602, 2
      %s604 = scalar_lea.vmem %s4, %s603
      // Predicated region
      $region41: #{qrnn_forward.2} parent=31 // pred_check
        %p605 = pneg %p118
      $region42: #{qrnn_forward.2} parent=31 // pred_check_branch
        %607 = sbr.rel (%p605) target = $region44
      $region43: #{qrnn_forward.2} parent=31 // pred_region
        %s608 = smul.u32 4, %s21
      $region44: #{qrnn_forward.2} parent=31 // pred_fallthru
        _
      // Predicated region
      $region45: #{qrnn_forward.2} parent=31 // pred_check
        %p609 = pneg %p144
      $region46: #{qrnn_forward.2} parent=31 // pred_check_branch
        %611 = sbr.rel (%p609) target = $region48
      $region47: #{qrnn_forward.2} parent=31 // pred_region
        _
      $region48: #{qrnn_forward.2} parent=31 // pred_fallthru
        _
      // Predicated region
      $region49: #{qrnn_forward.2} parent=31 // pred_check
        %p612 = pneg %p144
      $region50: #{qrnn_forward.2} parent=31 // pred_check_branch
        %614 = sbr.rel (%p612) target = $region52
      $region51: #{qrnn_forward.2} parent=31 // pred_region
        %p615 = scmp.lt.s32.totalorder %s20, 0
        %s616 = scalar_select %p615, %s20, 0
        %s617 = smul.addr %s616, 2
        %s618 = scalar_lea.vmem %s4, %s617
      $region52: #{qrnn_forward.2} parent=31 // pred_fallthru
        _
    $region32: #{qrnn_forward.2} parent=5 // pred_fallthru
      _
    %p619 = scmp.le.s32.totalorder 2, %s11
    // Predicated region
    $region53: #{qrnn_forward.2} parent=5 // pred_check
      %p620 = pneg %p619
    $region54: #{qrnn_forward.2} parent=5 // pred_check_branch
      %622 = sbr.rel (%p620) target = $region56
    $region55: #{qrnn_forward.2} parent=5 // pred_region
      %s623 = ssub.s32 %s11, 2
      // Predicated region
      $region57: #{qrnn_forward.2} parent=55 // pred_check
        %p624 = pneg %p124
      $region58: #{qrnn_forward.2} parent=55 // pred_check_branch
        %626 = sbr.rel (%p624) target = $region60
      $region59: #{qrnn_forward.2} parent=55 // pred_region
        %s627 = smul.u32 4, %s23
        %p628 = scmp.lt.s32.totalorder %s627, 7
        %s629 = scalar_select %p628, %s627, 7
        %p630 = scmp.lt.s32.totalorder %s22, 0
        %s631 = scalar_select %p630, %s22, 0
        %s632 = sadd.s32 %s631, %s629
        %s633 = smul.addr %s632, 2
        %s634 = scalar_lea.vmem %s3, %s633
      $region60: #{qrnn_forward.2} parent=55 // pred_fallthru
        _
    $region56: #{qrnn_forward.2} parent=5 // pred_fallthru
      _
  $region6: #{qrnn_forward.2} parent=0 // loop_footer
    %s15 = sadd.s32 1, %s11
  $region7: #{qrnn_forward.2} parent=0 // loop_footer_branch
    %10 = sbr.rel target = $region3
  $region8: #{qrnn_forward.2} parent=0 // loop_exit
    _

// kernel: qrnn_forward.3
$region0: #{qrnn_forward.3}
  #allocation0 [shape = 'u32[]', space=smem, size = 0x4, offset = 0x4, fixed_abs, tag = 'smem constant byte address 0x4 - core index']
  #allocation1 [shape = 'u32[144,128]{1,0:T(1,128)}', space=vmem, size = 0x12000, scoped, tag = 'internal scratch']
  #allocation2 [shape = 'f32[2,32]{1,0:T(2,128)}', space=vmem, size = 0x400, scoped, tag = 'scratch operand']
  #allocation3 [shape = 'f32[4,2,32]{2,1,0:T(2,128)}', space=vmem, size = 0x1000, scoped, tag = 'scratch operand']
  #allocation4 [shape = 'f32[4,2,32]{2,1,0:T(2,128)}', space=vmem, size = 0x1000, scoped, tag = 'scratch operand']
  #allocation5 [shape = 'f32[4,2,32]{2,1,0:T(2,128)}', space=vmem, size = 0x1000, scoped, tag = 'scratch operand']
  %s0 = inlined_call_operand.vmem [shape: f32[8,2,32], index: 0, kind: input, shape index: {}]
  %s1 = inlined_call_operand.vmem [shape: bf16[3,32,32], index: 1, kind: input, shape index: {}]
  %s2 = inlined_call_operand.vmem [shape: f32[3,1,32], index: 2, kind: input, shape index: {}]
  %s3 = inlined_call_operand.hbm [shape: f32[8,2,32], index: 3, kind: output, shape index: {0}]
  %s4 = inlined_call_operand.vmem [shape: f32[2,32], index: 4, kind: output, shape index: {1}]
  %5 = xla_tuple %s3, %s4
  %s6 = sld [smem:[#allocation0]]
  $region61: #{qrnn_forward.3} parent=0
    _
  %s8 = ssub.s32 1, %s6
  %s9 = scalar_select 0, %s8, %s6
  $region1: #{qrnn_forward.3} parent=0
    #allocation6 [shape = 'u8[8192]{0}', space=vmem, size = 0x2000, scoped, tag = 'output window, operand 0']
    #allocation7 [shape = 's32[2]{0}', space=sflag, size = 0x8, scoped, tag = 'scoped memory for qrnn_forward.3']
    %10 = vsyncpa [#allocation7], 0
    %s11 = scalar_lea.sflag [#allocation7], 1
    %12 = vsyncpa %s11, 0
    loop: start=0, step=1, limit=4
    $region2: #{qrnn_forward.3} parent=1 // loop_pre_header
      _
    $region3: #{qrnn_forward.3} parent=1 // loop_header
      %s14 = sphi 0, %s18
      %p15 = scmp.ge.s32.totalorder %s14, 4
      %s21 = sphi 0, %s33
      %s22 = sphi 0, %s29
      %s23 = sphi 0, %s21
      %s24 = sphi 0, %s22
      %s25 = sphi 0, %s23
      %s26 = sphi 0, %s24
      %s38 = sphi 0, %s40
      %s41 = sphi 0, %s38
      %s42 = sphi 0, %s41
      %s58 = sphi 0, %s42
      %s62 = sphi 0, %s62
      %s64 = sphi 0, %s62
      %s65 = sphi 0, %s64
      %s79 = sphi 0, %s65
      %s83 = sphi 0, %s83
      %s85 = sphi 0, %s83
      %s86 = sphi 0, %s85
      %s100 = sphi 0, %s86
      %s108 = sphi 0, %s110
      %s111 = sphi 0, %s108
      %s112 = sphi 0, %s111
      %s128 = sphi 0, %s112
      %s134 = sphi 0, %s136
      %s137 = sphi 0, %s134
      %s138 = sphi 0, %s137
      %s154 = sphi 0, %s138
    $region4: #{qrnn_forward.3} parent=1 // loop_header_branch
      %17 = sbr.rel (%p15) target = $region8
    $region5: #{qrnn_forward.3} parent=1 // loop_body
      %s19 = ssub.s32 %s14, 1
      %s20 = ssub.s32 %s14, 2
      %s27 = sadd.s32 1, %s22
      %p28 = scmp.ge.s32.totalorder %s27, 2
      %s29 = scalar_select %p28, 0, %s27
      %s30 = sadd.s32 1, %s21
      %s31 = scalar_select %p28, %s30, %s21
      %p32 = scmp.ge.s32.totalorder %s31, 1
      %s33 = scalar_select %p32, 0, %s31
      %s34 = ssub.s32 %s22, %s29
      %s35 = ssub.s32 %s21, %s33
      %s36 = sor.u32 %s34, %s35
      %p37 = scmp.eq.s32.totalorder %s36, 0
      %s39 = sadd.s32 %s38, 1
      %s40 = scalar_select %p37, %s38, %s39
      %p43 = pneg %p37
      %p44 = scmp.eq.s32.totalorder %s14, 1
      %p45 = por %p43, %p44
      %p46 = scmp.ne.s32.totalorder %s38, %s41
      %p47 = scmp.eq.s32.totalorder %s14, 0
      %p48 = por %p46, %p47
      %p49 = scmp.ne.s32.totalorder %s38, %s41
      %p50 = scmp.eq.s32.totalorder %s19, 1
      %p51 = por %p49, %p50
      %p52 = scmp.ne.s32.totalorder %s41, %s42
      %p53 = scmp.eq.s32.totalorder %s19, 0
      %p54 = por %p52, %p53
      %p55 = scmp.ne.s32.totalorder %s41, %s42
      %p56 = scmp.eq.s32.totalorder %s20, 1
      %p57 = por %p55, %p56
      %p59 = scmp.ne.s32.totalorder %s42, %s58
      %p60 = scmp.eq.s32.totalorder %s20, 0
      %p61 = por %p59, %p60
      %s63 = sadd.s32 %s62, 1
      %p66 = scmp.eq.s32.totalorder %s14, 1
      %p67 = scmp.ne.s32.totalorder %s62, %s64
      %p68 = scmp.eq.s32.totalorder %s14, 0
      %p69 = por %p67, %p68
      %p70 = scmp.ne.s32.totalorder %s62, %s64
      %p71 = scmp.eq.s32.totalorder %s19, 1
      %p72 = por %p70, %p71
      %p73 = scmp.ne.s32.totalorder %s64, %s65
      %p74 = scmp.eq.s32.totalorder %s19, 0
      %p75 = por %p73, %p74
      %p76 = scmp.ne.s32.totalorder %s64, %s65
      %p77 = scmp.eq.s32.totalorder %s20, 1
      %p78 = por %p76, %p77
      %p80 = scmp.ne.s32.totalorder %s65, %s79
      %p81 = scmp.eq.s32.totalorder %s20, 0
      %p82 = por %p80, %p81
      %s84 = sadd.s32 %s83, 1
      %p87 = scmp.eq.s32.totalorder %s14, 1
      %p88 = scmp.ne.s32.totalorder %s83, %s85
      %p89 = scmp.eq.s32.totalorder %s14, 0
      %p90 = por %p88, %p89
      %p91 = scmp.ne.s32.totalorder %s83, %s85
      %p92 = scmp.eq.s32.totalorder %s19, 1
      %p93 = por %p91, %p92
      %p94 = scmp.ne.s32.totalorder %s85, %s86
      %p95 = scmp.eq.s32.totalorder %s19, 0
      %p96 = por %p94, %p95
      %p97 = scmp.ne.s32.totalorder %s85, %s86
      %p98 = scmp.eq.s32.totalorder %s20, 1
      %p99 = por %p97, %p98
      %p101 = scmp.ne.s32.totalorder %s86, %s100
      %p102 = scmp.eq.s32.totalorder %s20, 0
      %p103 = por %p101, %p102
      %s104 = ssub.s32 %s22, %s29
      %s105 = ssub.s32 %s21, %s33
      %s106 = sor.u32 %s104, %s105
      %p107 = scmp.eq.s32.totalorder %s106, 0
      %s109 = sadd.s32 %s108, 1
      %s110 = scalar_select %p107, %s108, %s109
      %p113 = pneg %p107
      %p114 = scmp.eq.s32.totalorder %s14, 1
      %p115 = por %p113, %p114
      %p116 = scmp.ne.s32.totalorder %s108, %s111
      %p117 = scmp.eq.s32.totalorder %s14, 0
      %p118 = por %p116, %p117
      %p119 = scmp.ne.s32.totalorder %s108, %s111
      %p120 = scmp.eq.s32.totalorder %s19, 1
      %p121 = por %p119, %p120
      %p122 = scmp.ne.s32.totalorder %s111, %s112
      %p123 = scmp.eq.s32.totalorder %s19, 0
      %p124 = por %p122, %p123
      %p125 = scmp.ne.s32.totalorder %s111, %s112
      %p126 = scmp.eq.s32.totalorder %s20, 1
      %p127 = por %p125, %p126
      %p129 = scmp.ne.s32.totalorder %s112, %s128
      %p130 = scmp.eq.s32.totalorder %s20, 0
      %p131 = por %p129, %p130
      %s132 = ssub.s32 %s21, %s33
      %p133 = scmp.eq.s32.totalorder %s132, 0
      %s135 = sadd.s32 %s134, 1
      %s136 = scalar_select %p133, %s134, %s135
      %p139 = pneg %p133
      %p140 = scmp.eq.s32.totalorder %s14, 1
      %p141 = por %p139, %p140
      %p142 = scmp.ne.s32.totalorder %s134, %s137
      %p143 = scmp.eq.s32.totalorder %s14, 0
      %p144 = por %p142, %p143
      %p145 = scmp.ne.s32.totalorder %s134, %s137
      %p146 = scmp.eq.s32.totalorder %s19, 1
      %p147 = por %p145, %p146
      %p148 = scmp.ne.s32.totalorder %s137, %s138
      %p149 = scmp.eq.s32.totalorder %s19, 0
      %p150 = por %p148, %p149
      %p151 = scmp.ne.s32.totalorder %s137, %s138
      %p152 = scmp.eq.s32.totalorder %s20, 1
      %p153 = por %p151, %p152
      %p155 = scmp.ne.s32.totalorder %s138, %s154
      %p156 = scmp.eq.s32.totalorder %s20, 0
      %p157 = por %p155, %p156
      %p158 = scmp.le.s32.totalorder 1, %s14
      %p159 = scmp.lt.s32.totalorder %s14, 3
      %p160 = pnand %p158, %p159
      %p161 = pneg %p160
      // Predicated region
      $region9: #{qrnn_forward.3} parent=5 // pred_check
        _
      $region10: #{qrnn_forward.3} parent=5 // pred_check_branch
        %163 = sbr.rel (%p160) target = $region12
      $region11: #{qrnn_forward.3} parent=5 // pred_region
        %s164 = ssub.s32 %s14, 1
        // Predicated region
        $region13: #{qrnn_forward.3} parent=11 // pred_check
          %p165 = pneg %p75
        $region14: #{qrnn_forward.3} parent=11 // pred_check_branch
          %167 = sbr.rel (%p165) target = $region16
        $region15: #{qrnn_forward.3} parent=11 // pred_region
          _
        $region16: #{qrnn_forward.3} parent=11 // pred_fallthru
          _
        // Predicated region
        $region17: #{qrnn_forward.3} parent=11 // pred_check
          %p168 = pneg %p96
        $region18: #{qrnn_forward.3} parent=11 // pred_check_branch
          %170 = sbr.rel (%p168) target = $region20
        $region19: #{qrnn_forward.3} parent=11 // pred_region
          _
        $region20: #{qrnn_forward.3} parent=11 // pred_fallthru
          _
      $region12: #{qrnn_forward.3} parent=5 // pred_fallthru
        _
      %p171 = scmp.lt.s32.totalorder %s14, 2
      // Predicated region
      $region21: #{qrnn_forward.3} parent=5 // pred_check
        %p172 = pneg %p171
      $region22: #{qrnn_forward.3} parent=5 // pred_check_branch
        %174 = sbr.rel (%p172) target = $region24
      $region23: #{qrnn_forward.3} parent=5 // pred_region
        // Predicated region
        $region25: #{qrnn_forward.3} parent=23 // pred_check
          %p175 = pneg %p48
        $region26: #{qrnn_forward.3} parent=23 // pred_check_branch
          %177 = sbr.rel (%p175) target = $region28
        $region27: #{qrnn_forward.3} parent=23 // pred_region
          %s178 = smul.u32 4, %s22
          %p179 = scmp.lt.s32.totalorder %s178, 7
          %s180 = scalar_select %p179, %s178, 7
          %p181 = scmp.lt.s32.totalorder %s21, 0
          %s182 = scalar_select %p181, %s21, 0
          %s183 = sadd.s32 %s182, %s180
          %s184 = smul.addr %s183, 2
          %s185 = scalar_lea.vmem %s0, %s184
          %s186 = smul.u32 4, %s22
        $region28: #{qrnn_forward.3} parent=23 // pred_fallthru
          _
      $region24: #{qrnn_forward.3} parent=5 // pred_fallthru
        _
      %p187 = scmp.le.s32.totalorder 1, %s14
      %p188 = scmp.lt.s32.totalorder %s14, 3
      %p189 = pnand %p187, %p188
      %p190 = pneg %p189
      // Predicated region
      $region29: #{qrnn_forward.3} parent=5 // pred_check
        _
      $region30: #{qrnn_forward.3} parent=5 // pred_check_branch
        %192 = sbr.rel (%p189) target = $region32
      $region31: #{qrnn_forward.3} parent=5 // pred_region
        %s193 = ssub.s32 %s14, 1
        %s194 = smul.u32 4, %s24
        %p195 = scmp.lt.s32.totalorder %s194, 7
        %s196 = scalar_select %p195, %s194, 7
        %p197 = scmp.lt.s32.totalorder %s23, 0
        %s198 = scalar_select %p197, %s23, 0
        %s199 = sadd.s32 %s198, %s196
        %s200 = smul.addr %s199, 2
        %s201 = scalar_lea.vmem %s0, %s200
        %p202 = pneg %p54
        %p203 = pneg %p51
        %p204 = pneg %p75
        %p205 = pneg %p72
        %p206 = pneg %p96
        %p207 = pneg %p93
        %p208 = pneg %p124
        %p209 = pneg %p121
        %s210 = sand.u32 %s111, 1
        %s211 = scalar_lea.sflag [#allocation7], %s210
        %s212 = sand.u32 %s111, 1
        %s213 = smul.addr %s212, 8
        %s214 = scalar_lea.vmem [#allocation6], %s213
        %p215 = pneg %p150
        %p216 = pneg %p147
        %p217 = scmp.lt.s32.totalorder %s23, 0
        %s218 = scalar_select %p217, %s23, 0
        %s219 = smul.addr %s218, 2
        %s220 = scalar_lea.vmem %s4, %s219
        %s221 = smul.u32 4, %s24
        %p222 = scmp.lt.s32.totalorder %s221, 7
        %s223 = scalar_select %p222, %s221, 7
        %p224 = scmp.lt.s32.totalorder %s23, 0
        %s225 = scalar_select %p224, %s23, 0
        %s226 = sadd.s32 %s225, %s223
        %s227 = smul.addr %s226, 2
        %s228 = scalar_lea.vmem %s0, %s227
        %s229 = smul.u32 4, %s24
        %s230 = smul.u32 4, %s24
        %p231 = scmp.lt.s32.totalorder %s23, 0
        %s232 = scalar_select %p231, %s23, 0
        %s233 = smul.addr %s232, 2
        %s234 = scalar_lea.vmem %s4, %s233
        %p236 = scmp.eq.s32.totalorder %s24, 0
        // Predicated region
        $region33: #{qrnn_forward.3} parent=31 // pred_check
          %p237 = pneg %p236
        $region34: #{qrnn_forward.3} parent=31 // pred_check_branch
          %239 = sbr.rel (%p237) target = $region36
        $region35: #{qrnn_forward.3} parent=31 // pred_region
          %vm240 = vcmask 254976
          %241 = vst.msk [vmem:[#allocation2] sm:$0x3] %vm240, 0.0
        $region36: #{qrnn_forward.3} parent=31 // pred_fallthru
          _
        %v242 = vld [vmem:[%s228] sm:$0x3]
        %v243 = vld [vmem:[%s228 + $0x2] sm:$0x3]
        %v244 = vld [vmem:[%s228 + $0x4] sm:$0x3]
        %v245 = vld [vmem:[%s228 + $0x6] sm:$0x3]
        %v250 = vcombine.low %v242, %v243
        %v251 = vcombine.low %v244, %v245
        %v253 = vunpack.c.l.s4 1983009808
        %v254 = vunpack.c.0.s8 %v253
        %v255 = vlaneseq
        %v256 = vshrl.u32 %v255, 7
        %v257 = vsub.s32 %v254, %v256
        %v258 = vrot.slane %v250, %v257
        %v260 = vunpack.c.l.s4 1983009808
        %v261 = vunpack.c.0.s8 %v260
        %v262 = vlaneseq
        %v263 = vshrl.u32 %v262, 7
        %v264 = vsub.s32 %v261, %v263
        %v265 = vrot.slane %v251, %v264
        %v266 = vcombine.low %v258, %v265
        %v268 = vpack.c.bf16 %v266, %v266
        %v269 = vld [vmem:[%s1] sm:$0xf]
        %v270 = vld [vmem:[%s1 + $0x4] sm:$0xf]
        %v271 = vld [vmem:[%s1 + $0x8] sm:$0xf]
        %v272 = vld [vmem:[%s1 + $0xc] sm:$0xf]
        %v273 = vld [vmem:[%s2] sm:$0x1]
        %v275 = vlaneseq
        %v276 = vshrl.u32 %v275, 7
        %v277 = vsub.s32 0, %v276
        %v278 = vrot.slane %v273, %v277
        %v284 = vunpack.c.l.b16 %v269
        %v285 = vunpack.c.l.b16 %v270
        %v286 = vunpack.c.l.b16 %v271
        %v287 = vunpack.c.l.b16 %v272
        %v288 = vpack.c.b16 %v285, %v284
        %v289 = vpack.c.b16 %v287, %v286
        %vm292 = vcmask 261120
        %v294 = vsel %vm292, %v268, 0
        %296 = vmatprep.subr.bf16.mxu0 0
        %297 = vmatpush1.bf16.msra.mxu0 0
        %298 = vmatprep.subr.bf16.mxu0 0
        %299 = vmatpush1.bf16.msra.mxu0 0
        %300 = vmatprep.subr.bf16.mxu0 0
        %301 = vmatpush1.bf16.msra.mxu0 0
        %302 = vmatprep.subr.bf16.mxu0 0
        %303 = vmatpush1.bf16.msra.mxu0 0
        %304 = vmatprep.subr.bf16.mxu0 0
        %305 = vmatpush1.bf16.msra.mxu0 0
        %306 = vmatprep.subr.bf16.mxu0 0
        %307 = vmatpush1.bf16.msra.mxu0 0
        %308 = vmatprep.subr.bf16.mxu0 0
        %309 = vmatpush1.bf16.msra.mxu0 %v289
        %310 = vmatprep.subr.bf16.mxu0 0
        %311 = vmatpush1.bf16.msra.mxu0 %v288
        %312 = vmatprep.subr.bf16.mxu0 0
        %313 = vmatpush2.bf16.msra.mxu0 0
        %314 = vmatprep.subr.bf16.mxu0 0
        %315 = vmatpush2.bf16.msra.mxu0 0
        %316 = vmatprep.subr.bf16.mxu0 0
        %317 = vmatpush2.bf16.msra.mxu0 0
        %318 = vmatprep.subr.bf16.mxu0 0
        %319 = vmatpush2.bf16.msra.mxu0 0
        %320 = vmatprep.subr.bf16.mxu0 0
        %321 = vmatpush2.bf16.msra.mxu0 0
        %322 = vmatprep.subr.bf16.mxu0 0
        %323 = vmatpush2.bf16.msra.mxu0 0
        %324 = vmatprep.subr.bf16.mxu0 0
        %325 = vmatpush2.bf16.msra.mxu0 0
        %326 = vmatprep.subr.bf16.mxu0 0
        %327 = vmatpush2.bf16.msra.mxu0 0
        %328 = vmatprep.mubr.bf16.mxu0 0
        %329 = vmatmul.mubr.bf16.gmra.mxu0 %v294
        %v330 = vpop.f32.mrf.mxu0
        %v331 = vadd.f32 %v278, %v330
        %v332 = vpop.f32.mrf.mxu0
        %v333 = vpop.f32.mrf.mxu0
        %v334 = vpop.f32.mrf.mxu0
        %335 = vdwg.mxu0
        %v336 = vtanh.pop %v331
        %s337 = scalar_lea.vmem %s1, 16
        %v338 = vld [vmem:[%s337] sm:$0xf]
        %v339 = vld [vmem:[%s337 + $0x4] sm:$0xf]
        %v340 = vld [vmem:[%s337 + $0x8] sm:$0xf]
        %v341 = vld [vmem:[%s337 + $0xc] sm:$0xf]
        %s342 = scalar_lea.vmem %s2, 1
        %v343 = vld [vmem:[%s342] sm:$0x1]
        %v345 = vlaneseq
        %v346 = vshrl.u32 %v345, 7
        %v347 = vsub.s32 0, %v346
        %v348 = vrot.slane %v343, %v347
        %v354 = vunpack.c.l.b16 %v338
        %v355 = vunpack.c.l.b16 %v339
        %v356 = vunpack.c.l.b16 %v340
        %v357 = vunpack.c.l.b16 %v341
        %v358 = vpack.c.b16 %v355, %v354
        %v359 = vpack.c.b16 %v357, %v356
        %362 = vmatprep.subr.bf16.mxu0 0
        %363 = vmatpush1.bf16.msra.mxu0 0
        %364 = vmatprep.subr.bf16.mxu0 0
        %365 = vmatpush1.bf16.msra.mxu0 0
        %366 = vmatprep.subr.bf16.mxu0 0
        %367 = vmatpush1.bf16.msra.mxu0 0
        %368 = vmatprep.subr.bf16.mxu0 0
        %369 = vmatpush1.bf16.msra.mxu0 0
        %370 = vmatprep.subr.bf16.mxu0 0
        %371 = vmatpush1.bf16.msra.mxu0 0
        %372 = vmatprep.subr.bf16.mxu0 0
        %373 = vmatpush1.bf16.msra.mxu0 0
        %374 = vmatprep.subr.bf16.mxu0 0
        %375 = vmatpush1.bf16.msra.mxu0 %v359
        %376 = vmatprep.subr.bf16.mxu0 0
        %377 = vmatpush1.bf16.msra.mxu0 %v358
        %378 = vmatprep.subr.bf16.mxu0 0
        %379 = vmatpush2.bf16.msra.mxu0 0
        %380 = vmatprep.subr.bf16.mxu0 0
        %381 = vmatpush2.bf16.msra.mxu0 0
        %382 = vmatprep.subr.bf16.mxu0 0
        %383 = vmatpush2.bf16.msra.mxu0 0
        %384 = vmatprep.subr.bf16.mxu0 0
        %385 = vmatpush2.bf16.msra.mxu0 0
        %386 = vmatprep.subr.bf16.mxu0 0
        %387 = vmatpush2.bf16.msra.mxu0 0
        %388 = vmatprep.subr.bf16.mxu0 0
        %389 = vmatpush2.bf16.msra.mxu0 0
        %390 = vmatprep.subr.bf16.mxu0 0
        %391 = vmatpush2.bf16.msra.mxu0 0
        %392 = vmatprep.subr.bf16.mxu0 0
        %393 = vmatpush2.bf16.msra.mxu0 0
        %394 = vmatprep.mubr.bf16.mxu0 0
        %395 = vmatmul.mubr.bf16.gmra.mxu0 %v294
        %v396 = vpop.f32.mrf.mxu0
        %v397 = vadd.f32 %v348, %v396
        %v398 = vpop.f32.mrf.mxu0
        %v399 = vpop.f32.mrf.mxu0
        %v400 = vpop.f32.mrf.mxu0
        %401 = vdwg.mxu0
        %v402 = vxor.u32 %v397, 2147483648
        %v403 = vmul.f32 %v402, 1.442695
        %v404 = vpow.pop %v403
        %v405 = vadd.f32 %v404, 1.0
        %v406 = vrcp.pop %v405
        %v407 = vmul.f32 1.0, %v406
        %s408 = scalar_lea.vmem %s1, 32
        %v409 = vld [vmem:[%s408] sm:$0xf]
        %v410 = vld [vmem:[%s408 + $0x4] sm:$0xf]
        %v411 = vld [vmem:[%s408 + $0x8] sm:$0xf]
        %v412 = vld [vmem:[%s408 + $0xc] sm:$0xf]
        %s413 = scalar_lea.vmem %s2, 2
        %v414 = vld [vmem:[%s413] sm:$0x1]
        %v416 = vlaneseq
        %v417 = vshrl.u32 %v416, 7
        %v418 = vsub.s32 0, %v417
        %v419 = vrot.slane %v414, %v418
        %v425 = vunpack.c.l.b16 %v409
        %v426 = vunpack.c.l.b16 %v410
        %v427 = vunpack.c.l.b16 %v411
        %v428 = vunpack.c.l.b16 %v412
        %v429 = vpack.c.b16 %v426, %v425
        %v430 = vpack.c.b16 %v428, %v427
        %433 = vmatprep.subr.bf16.mxu0 0
        %434 = vmatpush1.bf16.msra.mxu0 0
        %435 = vmatprep.subr.bf16.mxu0 0
        %436 = vmatpush1.bf16.msra.mxu0 0
        %437 = vmatprep.subr.bf16.mxu0 0
        %438 = vmatpush1.bf16.msra.mxu0 0
        %439 = vmatprep.subr.bf16.mxu0 0
        %440 = vmatpush1.bf16.msra.mxu0 0
        %441 = vmatprep.subr.bf16.mxu0 0
        %442 = vmatpush1.bf16.msra.mxu0 0
        %443 = vmatprep.subr.bf16.mxu0 0
        %444 = vmatpush1.bf16.msra.mxu0 0
        %445 = vmatprep.subr.bf16.mxu0 0
        %446 = vmatpush1.bf16.msra.mxu0 %v430
        %447 = vmatprep.subr.bf16.mxu0 0
        %448 = vmatpush1.bf16.msra.mxu0 %v429
        %449 = vmatprep.subr.bf16.mxu0 0
        %450 = vmatpush2.bf16.msra.mxu0 0
        %451 = vmatprep.subr.bf16.mxu0 0
        %452 = vmatpush2.bf16.msra.mxu0 0
        %453 = vmatprep.subr.bf16.mxu0 0
        %454 = vmatpush2.bf16.msra.mxu0 0
        %455 = vmatprep.subr.bf16.mxu0 0
        %456 = vmatpush2.bf16.msra.mxu0 0
        %457 = vmatprep.subr.bf16.mxu0 0
        %458 = vmatpush2.bf16.msra.mxu0 0
        %459 = vmatprep.subr.bf16.mxu0 0
        %460 = vmatpush2.bf16.msra.mxu0 0
        %461 = vmatprep.subr.bf16.mxu0 0
        %462 = vmatpush2.bf16.msra.mxu0 0
        %463 = vmatprep.subr.bf16.mxu0 0
        %464 = vmatpush2.bf16.msra.mxu0 0
        %465 = vmatprep.mubr.bf16.mxu0 0
        %466 = vmatmul.mubr.bf16.gmra.mxu0 %v294
        %v467 = vpop.f32.mrf.mxu0
        %v468 = vadd.f32 %v419, %v467
        %v469 = vpop.f32.mrf.mxu0
        %v470 = vpop.f32.mrf.mxu0
        %v471 = vpop.f32.mrf.mxu0
        %472 = vdwg.mxu0
        %v473 = vxor.u32 %v468, 2147483648
        %v474 = vmul.f32 %v473, 1.442695
        %v475 = vpow.pop %v474
        %v476 = vadd.f32 %v475, 1.0
        %v477 = vrcp.pop %v476
        %v478 = vmul.f32 1.0, %v477
        %v479 = vmul.f32 %v407, %v336
        %v481 = vcombine.high %v479, %v479
        %v483 = vunpack.c.l.s4 1983009808
        %v484 = vunpack.c.0.s8 %v483
        %v485 = vlaneseq
        %v486 = vshrl.u32 %v485, 7
        %v487 = vsub.s32 %v484, %v486
        %v488 = vrot.slane %v479, %v487
        %v490 = vunpack.c.l.s4 1983009808
        %v491 = vunpack.c.0.s8 %v490
        %v492 = vlaneseq
        %v493 = vshrl.u32 %v492, 7
        %v494 = vsub.s32 %v491, %v493
        %v495 = vrot.slane %v481, %v494
        %v496 = vcombine.high %v488, %v488
        %v497 = vcombine.high %v495, %v495
        %vm502 = vcmask 254976
        %503 = vst.msk [vmem:[#allocation3] sm:$0x3] %vm502, %v488
        %504 = vst.msk [vmem:[#allocation3 + $0x2] sm:$0x3] %vm502, %v496
        %505 = vst.msk [vmem:[#allocation3 + $0x4] sm:$0x3] %vm502, %v495
        %506 = vst.msk [vmem:[#allocation3 + $0x6] sm:$0x3] %vm502, %v497
        %v507 = vsub.f32 1.0, %v407
        %v509 = vcombine.high %v507, %v507
        %v511 = vunpack.c.l.s4 1983009808
        %v512 = vunpack.c.0.s8 %v511
        %v513 = vlaneseq
        %v514 = vshrl.u32 %v513, 7
        %v515 = vsub.s32 %v512, %v514
        %v516 = vrot.slane %v507, %v515
        %v518 = vunpack.c.l.s4 1983009808
        %v519 = vunpack.c.0.s8 %v518
        %v520 = vlaneseq
        %v521 = vshrl.u32 %v520, 7
        %v522 = vsub.s32 %v519, %v521
        %v523 = vrot.slane %v509, %v522
        %v524 = vcombine.high %v516, %v516
        %v525 = vcombine.high %v523, %v523
        %530 = vst.msk [vmem:[#allocation4] sm:$0x3] %vm502, %v516
        %531 = vst.msk [vmem:[#allocation4 + $0x2] sm:$0x3] %vm502, %v524
        %532 = vst.msk [vmem:[#allocation4 + $0x4] sm:$0x3] %vm502, %v523
        %533 = vst.msk [vmem:[#allocation4 + $0x6] sm:$0x3] %vm502, %v525
        %v535 = vcombine.high %v478, %v478
        %v537 = vunpack.c.l.s4 1983009808
        %v538 = vunpack.c.0.s8 %v537
        %v539 = vlaneseq
        %v540 = vshrl.u32 %v539, 7
        %v541 = vsub.s32 %v538, %v540
        %v542 = vrot.slane %v478, %v541
        %v544 = vunpack.c.l.s4 1983009808
        %v545 = vunpack.c.0.s8 %v544
        %v546 = vlaneseq
        %v547 = vshrl.u32 %v546, 7
        %v548 = vsub.s32 %v545, %v547
        %v549 = vrot.slane %v535, %v548
        %v550 = vcombine.high %v542, %v542
        %v551 = vcombine.high %v549, %v549
        %556 = vst.msk [vmem:[#allocation5] sm:$0x3] %vm502, %v542
        %557 = vst.msk [vmem:[#allocation5 + $0x2] sm:$0x3] %vm502, %v550
        %558 = vst.msk [vmem:[#allocation5 + $0x4] sm:$0x3] %vm502, %v549
        %559 = vst.msk [vmem:[#allocation5 + $0x6] sm:$0x3] %vm502, %v551
        %v560 = vld [vmem:[#allocation2] sm:$0x3]
        %v561 = vld [vmem:[#allocation3] sm:$0x3]
        %v562 = vld [vmem:[#allocation4] sm:$0x3]
        %v563 = vmul.f32 %v562, %v560
        %v564 = vadd.f32 %v561, %v563
        %565 = vst.msk [vmem:[#allocation3] sm:$0x3] %vm502, %v564
        %s566 = scalar_lea.vmem [#allocation3], 2
        %v567 = vld [vmem:[%s566] sm:$0x3]
        %s568 = scalar_lea.vmem [#allocation4], 2
        %v569 = vld [vmem:[%s568] sm:$0x3]
        %v570 = vmul.f32 %v569, %v564
        %v571 = vadd.f32 %v567, %v570
        %572 = vst.msk [vmem:[%s566] sm:$0x3] %vm502, %v571
        %s573 = scalar_lea.vmem [#allocation3], 4
        %v574 = vld [vmem:[%s573] sm:$0x3]
        %s575 = scalar_lea.vmem [#allocation4], 4
        %v576 = vld [vmem:[%s575] sm:$0x3]
        %v577 = vmul.f32 %v576, %v571
        %v578 = vadd.f32 %v574, %v577
        %579 = vst.msk [vmem:[%s573] sm:$0x3] %vm502, %v578
        %s580 = scalar_lea.vmem [#allocation3], 6
        %v581 = vld [vmem:[%s580] sm:$0x3]
        %s582 = scalar_lea.vmem [#allocation4], 6
        %v583 = vld [vmem:[%s582] sm:$0x3]
        %v584 = vmul.f32 %v583, %v578
        %v585 = vadd.f32 %v581, %v584
        %586 = vst.msk [vmem:[%s580] sm:$0x3] %vm502, %v585
        %587 = vst.msk [vmem:[#allocation2] sm:$0x3] %vm502, %v585
        %v588 = vld [vmem:[#allocation5] sm:$0x3]
        %v589 = vld [vmem:[#allocation5 + $0x2] sm:$0x3]
        %v590 = vld [vmem:[#allocation5 + $0x4] sm:$0x3]
        %v591 = vld [vmem:[#allocation5 + $0x6] sm:$0x3]
        %v592 = vld [vmem:[#allocation3] sm:$0x3]
        %v593 = vld [vmem:[#allocation3 + $0x2] sm:$0x3]
        %v594 = vld [vmem:[#allocation3 + $0x4] sm:$0x3]
        %v595 = vld [vmem:[#allocation3 + $0x6] sm:$0x3]
        %v596 = vmul.f32 %v588, %v592
        %v597 = vmul.f32 %v589, %v593
        %v598 = vmul.f32 %v590, %v594
        %v599 = vmul.f32 %v591, %v595
        %600 = vst.msk [vmem:[%s214] sm:$0x3] %vm502, %v596
        %601 = vst.msk [vmem:[%s214 + $0x2] sm:$0x3] %vm502, %v597
        %602 = vst.msk [vmem:[%s214 + $0x4] sm:$0x3] %vm502, %v598
        %603 = vst.msk [vmem:[%s214 + $0x6] sm:$0x3] %vm502, %v599
        %p604 = scmp.eq.s32.totalorder %s24, 1
        // Predicated region
        $region37: #{qrnn_forward.3} parent=31 // pred_check
          %p605 = pneg %p604
        $region38: #{qrnn_forward.3} parent=31 // pred_check_branch
          %607 = sbr.rel (%p605) target = $region40
        $region39: #{qrnn_forward.3} parent=31 // pred_region
          %608 = vst.msk [vmem:[%s234] sm:$0x3] %vm502, %v585
        $region40: #{qrnn_forward.3} parent=31 // pred_fallthru
          _
        %s609 = sand.u32 %s111, 1
        %s610 = scalar_lea.sflag [#allocation7], %s609
        %s611 = sand.u32 %s111, 1
        %s612 = smul.addr %s611, 8
        %s613 = scalar_lea.vmem [#allocation6], %s612
        %p614 = scmp.lt.s32.totalorder %s23, 0
        %s615 = scalar_select %p614, %s23, 0
        %s616 = smul.addr %s615, 2
        %s617 = scalar_lea.vmem %s4, %s616
        // Predicated region
        $region41: #{qrnn_forward.3} parent=31 // pred_check
          %p618 = pneg %p121
        $region42: #{qrnn_forward.3} parent=31 // pred_check_branch
          %620 = sbr.rel (%p618) target = $region44
        $region43: #{qrnn_forward.3} parent=31 // pred_region
          %s621 = smul.u32 4, %s24
          %s623 = ssub.s32 128, 128
          %624 = vsyncadd %s610, %s623
          %s625 = sadd.s32 %s23, %s621
          %s626 = smul.addr %s625, 32
          %s627 = scalar_lea.hbm %s3, %s626
          %s628 = sshll.u32 %s613, 4
          %s629 = int_to_ptr.vmem [resolvable:$true] %s628
          %634 = dma.vmem_to_hbm [thread:$0]  %s629, 128, %s627, %s610, 32, 32, 2
        $region44: #{qrnn_forward.3} parent=31 // pred_fallthru
          _
        // Predicated region
        $region45: #{qrnn_forward.3} parent=31 // pred_check
          %p635 = pneg %p147
        $region46: #{qrnn_forward.3} parent=31 // pred_check_branch
          %637 = sbr.rel (%p635) target = $region48
        $region47: #{qrnn_forward.3} parent=31 // pred_region
          _
        $region48: #{qrnn_forward.3} parent=31 // pred_fallthru
          _
        // Predicated region
        $region49: #{qrnn_forward.3} parent=31 // pred_check
          %p638 = pneg %p147
        $region50: #{qrnn_forward.3} parent=31 // pred_check_branch
          %640 = sbr.rel (%p638) target = $region52
        $region51: #{qrnn_forward.3} parent=31 // pred_region
          %p641 = scmp.lt.s32.totalorder %s23, 0
          %s642 = scalar_select %p641, %s23, 0
          %s643 = smul.addr %s642, 2
          %s644 = scalar_lea.vmem %s4, %s643
        $region52: #{qrnn_forward.3} parent=31 // pred_fallthru
          _
      $region32: #{qrnn_forward.3} parent=5 // pred_fallthru
        _
      %p645 = scmp.le.s32.totalorder 2, %s14
      // Predicated region
      $region53: #{qrnn_forward.3} parent=5 // pred_check
        %p646 = pneg %p645
      $region54: #{qrnn_forward.3} parent=5 // pred_check_branch
        %648 = sbr.rel (%p646) target = $region56
      $region55: #{qrnn_forward.3} parent=5 // pred_region
        %s649 = ssub.s32 %s14, 2
        // Predicated region
        $region57: #{qrnn_forward.3} parent=55 // pred_check
          %p650 = pneg %p127
        $region58: #{qrnn_forward.3} parent=55 // pred_check_branch
          %652 = sbr.rel (%p650) target = $region60
        $region59: #{qrnn_forward.3} parent=55 // pred_region
          %s653 = sand.u32 %s112, 1
          %s654 = scalar_lea.sflag [#allocation7], %s653
          %s655 = sand.u32 %s112, 1
          %s656 = smul.addr %s655, 8
          %s657 = scalar_lea.vmem [#allocation6], %s656
          %658 = dma.done %s654, 128
        $region60: #{qrnn_forward.3} parent=55 // pred_fallthru
          _
      $region56: #{qrnn_forward.3} parent=5 // pred_fallthru
        _
    $region6: #{qrnn_forward.3} parent=1 // loop_footer
      %s18 = sadd.s32 1, %s14
    $region7: #{qrnn_forward.3} parent=1 // loop_footer_branch
      %13 = sbr.rel target = $region3
    $region8: #{qrnn_forward.3} parent=1 // loop_exit
      _
    %659 = vsyncpa [#allocation7], 1
    %s660 = scalar_lea.sflag [#allocation7], 1
    %661 = vsyncpa %s660, 1

// kernel: qrnn_forward.2
$region0: #{qrnn_forward.2}
  #allocation0 [shape = 'u32[]', space=smem, size = 0x4, offset = 0x4, fixed_abs, tag = 'smem constant byte address 0x4 - core index']
  #allocation1 [shape = 'u32[144,128]{1,0:T(1,128)}', space=vmem, size = 0x12000, scoped, tag = 'internal scratch']
  #allocation2 [shape = 'f32[2,32]{1,0:T(2,128)}', space=vmem, size = 0x400, scoped, tag = 'scratch operand']
  #allocation3 [shape = 'f32[4,2,32]{2,1,0:T(2,128)}', space=vmem, size = 0x1000, scoped, tag = 'scratch operand']
  #allocation4 [shape = 'f32[4,2,32]{2,1,0:T(2,128)}', space=vmem, size = 0x1000, scoped, tag = 'scratch operand']
  #allocation5 [shape = 'f32[4,2,32]{2,1,0:T(2,128)}', space=vmem, size = 0x1000, scoped, tag = 'scratch operand']
  %s0 = inlined_call_operand.vmem [shape: f32[8,2,16], index: 0, kind: input, shape index: {}]
  %s1 = inlined_call_operand.vmem [shape: bf16[3,16,32], index: 1, kind: input, shape index: {}]
  %s2 = inlined_call_operand.vmem [shape: f32[3,1,32], index: 2, kind: input, shape index: {}]
  %s3 = inlined_call_operand.vmem [shape: f32[8,2,32], index: 3, kind: output, shape index: {0}]
  %s4 = inlined_call_operand.vmem [shape: f32[2,32], index: 4, kind: output, shape index: {1}]
  %5 = xla_tuple %s3, %s4
  %s6 = sld [smem:[#allocation0]]
  $region61: #{qrnn_forward.2} parent=0
    _
  %s8 = ssub.s32 1, %s6
  %s9 = scalar_select 0, %s8, %s6
  loop: start=0, step=1, limit=4
  $region2: #{qrnn_forward.2} parent=0 // loop_pre_header
    _
  $region3: #{qrnn_forward.2} parent=0 // loop_header
    %s11 = sphi 0, %s15
    %p12 = scmp.ge.s32.totalorder %s11, 4
    %s18 = sphi 0, %s30
    %s19 = sphi 0, %s26
    %s20 = sphi 0, %s18
    %s21 = sphi 0, %s19
    %s22 = sphi 0, %s20
    %s23 = sphi 0, %s21
    %s35 = sphi 0, %s37
    %s38 = sphi 0, %s35
    %s39 = sphi 0, %s38
    %s55 = sphi 0, %s39
    %s59 = sphi 0, %s59
    %s61 = sphi 0, %s59
    %s62 = sphi 0, %s61
    %s76 = sphi 0, %s62
    %s80 = sphi 0, %s80
    %s82 = sphi 0, %s80
    %s83 = sphi 0, %s82
    %s97 = sphi 0, %s83
    %s105 = sphi 0, %s107
    %s108 = sphi 0, %s105
    %s109 = sphi 0, %s108
    %s125 = sphi 0, %s109
    %s131 = sphi 0, %s133
    %s134 = sphi 0, %s131
    %s135 = sphi 0, %s134
    %s151 = sphi 0, %s135
  $region4: #{qrnn_forward.2} parent=0 // loop_header_branch
    %14 = sbr.rel (%p12) target = $region8
  $region5: #{qrnn_forward.2} parent=0 // loop_body
    %s16 = ssub.s32 %s11, 1
    %s17 = ssub.s32 %s11, 2
    %s24 = sadd.s32 1, %s19
    %p25 = scmp.ge.s32.totalorder %s24, 2
    %s26 = scalar_select %p25, 0, %s24
    %s27 = sadd.s32 1, %s18
    %s28 = scalar_select %p25, %s27, %s18
    %p29 = scmp.ge.s32.totalorder %s28, 1
    %s30 = scalar_select %p29, 0, %s28
    %s31 = ssub.s32 %s19, %s26
    %s32 = ssub.s32 %s18, %s30
    %s33 = sor.u32 %s31, %s32
    %p34 = scmp.eq.s32.totalorder %s33, 0
    %s36 = sadd.s32 %s35, 1
    %s37 = scalar_select %p34, %s35, %s36
    %p40 = pneg %p34
    %p41 = scmp.eq.s32.totalorder %s11, 1
    %p42 = por %p40, %p41
    %p43 = scmp.ne.s32.totalorder %s35, %s38
    %p44 = scmp.eq.s32.totalorder %s11, 0
    %p45 = por %p43, %p44
    %p46 = scmp.ne.s32.totalorder %s35, %s38
    %p47 = scmp.eq.s32.totalorder %s16, 1
    %p48 = por %p46, %p47
    %p49 = scmp.ne.s32.totalorder %s38, %s39
    %p50 = scmp.eq.s32.totalorder %s16, 0
    %p51 = por %p49, %p50
    %p52 = scmp.ne.s32.totalorder %s38, %s39
    %p53 = scmp.eq.s32.totalorder %s17, 1
    %p54 = por %p52, %p53
    %p56 = scmp.ne.s32.totalorder %s39, %s55
    %p57 = scmp.eq.s32.totalorder %s17, 0
    %p58 = por %p56, %p57
    %s60 = sadd.s32 %s59, 1
    %p63 = scmp.eq.s32.totalorder %s11, 1
    %p64 = scmp.ne.s32.totalorder %s59, %s61
    %p65 = scmp.eq.s32.totalorder %s11, 0
    %p66 = por %p64, %p65
    %p67 = scmp.ne.s32.totalorder %s59, %s61
    %p68 = scmp.eq.s32.totalorder %s16, 1
    %p69 = por %p67, %p68
    %p70 = scmp.ne.s32.totalorder %s61, %s62
    %p71 = scmp.eq.s32.totalorder %s16, 0
    %p72 = por %p70, %p71
    %p73 = scmp.ne.s32.totalorder %s61, %s62
    %p74 = scmp.eq.s32.totalorder %s17, 1
    %p75 = por %p73, %p74
    %p77 = scmp.ne.s32.totalorder %s62, %s76
    %p78 = scmp.eq.s32.totalorder %s17, 0
    %p79 = por %p77, %p78
    %s81 = sadd.s32 %s80, 1
    %p84 = scmp.eq.s32.totalorder %s11, 1
    %p85 = scmp.ne.s32.totalorder %s80, %s82
    %p86 = scmp.eq.s32.totalorder %s11, 0
    %p87 = por %p85, %p86
    %p88 = scmp.ne.s32.totalorder %s80, %s82
    %p89 = scmp.eq.s32.totalorder %s16, 1
    %p90 = por %p88, %p89
    %p91 = scmp.ne.s32.totalorder %s82, %s83
    %p92 = scmp.eq.s32.totalorder %s16, 0
    %p93 = por %p91, %p92
    %p94 = scmp.ne.s32.totalorder %s82, %s83
    %p95 = scmp.eq.s32.totalorder %s17, 1
    %p96 = por %p94, %p95
    %p98 = scmp.ne.s32.totalorder %s83, %s97
    %p99 = scmp.eq.s32.totalorder %s17, 0
    %p100 = por %p98, %p99
    %s101 = ssub.s32 %s19, %s26
    %s102 = ssub.s32 %s18, %s30
    %s103 = sor.u32 %s101, %s102
    %p104 = scmp.eq.s32.totalorder %s103, 0
    %s106 = sadd.s32 %s105, 1
    %s107 = scalar_select %p104, %s105, %s106
    %p110 = pneg %p104
    %p111 = scmp.eq.s32.totalorder %s11, 1
    %p112 = por %p110, %p111
    %p113 = scmp.ne.s32.totalorder %s105, %s108
    %p114 = scmp.eq.s32.totalorder %s11, 0
    %p115 = por %p113, %p114
    %p116 = scmp.ne.s32.totalorder %s105, %s108
    %p117 = scmp.eq.s32.totalorder %s16, 1
    %p118 = por %p116, %p117
    %p119 = scmp.ne.s32.totalorder %s108, %s109
    %p120 = scmp.eq.s32.totalorder %s16, 0
    %p121 = por %p119, %p120
    %p122 = scmp.ne.s32.totalorder %s108, %s109
    %p123 = scmp.eq.s32.totalorder %s17, 1
    %p124 = por %p122, %p123
    %p126 = scmp.ne.s32.totalorder %s109, %s125
    %p127 = scmp.eq.s32.totalorder %s17, 0
    %p128 = por %p126, %p127
    %s129 = ssub.s32 %s18, %s30
    %p130 = scmp.eq.s32.totalorder %s129, 0
    %s132 = sadd.s32 %s131, 1
    %s133 = scalar_select %p130, %s131, %s132
    %p136 = pneg %p130
    %p137 = scmp.eq.s32.totalorder %s11, 1
    %p138 = por %p136, %p137
    %p139 = scmp.ne.s32.totalorder %s131, %s134
    %p140 = scmp.eq.s32.totalorder %s11, 0
    %p141 = por %p139, %p140
    %p142 = scmp.ne.s32.totalorder %s131, %s134
    %p143 = scmp.eq.s32.totalorder %s16, 1
    %p144 = por %p142, %p143
    %p145 = scmp.ne.s32.totalorder %s134, %s135
    %p146 = scmp.eq.s32.totalorder %s16, 0
    %p147 = por %p145, %p146
    %p148 = scmp.ne.s32.totalorder %s134, %s135
    %p149 = scmp.eq.s32.totalorder %s17, 1
    %p150 = por %p148, %p149
    %p152 = scmp.ne.s32.totalorder %s135, %s151
    %p153 = scmp.eq.s32.totalorder %s17, 0
    %p154 = por %p152, %p153
    %p155 = scmp.le.s32.totalorder 1, %s11
    %p156 = scmp.lt.s32.totalorder %s11, 3
    %p157 = pnand %p155, %p156
    %p158 = pneg %p157
    // Predicated region
    $region9: #{qrnn_forward.2} parent=5 // pred_check
      _
    $region10: #{qrnn_forward.2} parent=5 // pred_check_branch
      %160 = sbr.rel (%p157) target = $region12
    $region11: #{qrnn_forward.2} parent=5 // pred_region
      %s161 = ssub.s32 %s11, 1
      // Predicated region
      $region13: #{qrnn_forward.2} parent=11 // pred_check
        %p162 = pneg %p72
      $region14: #{qrnn_forward.2} parent=11 // pred_check_branch
        %164 = sbr.rel (%p162) target = $region16
      $region15: #{qrnn_forward.2} parent=11 // pred_region
        _
      $region16: #{qrnn_forward.2} parent=11 // pred_fallthru
        _
      // Predicated region
      $region17: #{qrnn_forward.2} parent=11 // pred_check
        %p165 = pneg %p93
      $region18: #{qrnn_forward.2} parent=11 // pred_check_branch
        %167 = sbr.rel (%p165) target = $region20
      $region19: #{qrnn_forward.2} parent=11 // pred_region
        _
      $region20: #{qrnn_forward.2} parent=11 // pred_fallthru
        _
    $region12: #{qrnn_forward.2} parent=5 // pred_fallthru
      _
    %p168 = scmp.lt.s32.totalorder %s11, 2
    // Predicated region
    $region21: #{qrnn_forward.2} parent=5 // pred_check
      %p169 = pneg %p168
    $region22: #{qrnn_forward.2} parent=5 // pred_check_branch
      %171 = sbr.rel (%p169) target = $region24
    $region23: #{qrnn_forward.2} parent=5 // pred_region
      // Predicated region
      $region25: #{qrnn_forward.2} parent=23 // pred_check
        %p172 = pneg %p45
      $region26: #{qrnn_forward.2} parent=23 // pred_check_branch
        %174 = sbr.rel (%p172) target = $region28
      $region27: #{qrnn_forward.2} parent=23 // pred_region
        %s175 = smul.u32 4, %s19
        %p176 = scmp.lt.s32.totalorder %s175, 7
        %s177 = scalar_select %p176, %s175, 7
        %p178 = scmp.lt.s32.totalorder %s18, 0
        %s179 = scalar_select %p178, %s18, 0
        %s180 = sadd.s32 %s179, %s177
        %s181 = smul.addr %s180, 2
        %s182 = scalar_lea.vmem %s0, %s181
        %s183 = smul.u32 4, %s19
      $region28: #{qrnn_forward.2} parent=23 // pred_fallthru
        _
    $region24: #{qrnn_forward.2} parent=5 // pred_fallthru
      _
    %p184 = scmp.le.s32.totalorder 1, %s11
    %p185 = scmp.lt.s32.totalorder %s11, 3
    %p186 = pnand %p184, %p185
    %p187 = pneg %p186
    // Predicated region
    $region29: #{qrnn_forward.2} parent=5 // pred_check
      _
    $region30: #{qrnn_forward.2} parent=5 // pred_check_branch
      %189 = sbr.rel (%p186) target = $region32
    $region31: #{qrnn_forward.2} parent=5 // pred_region
      %s190 = ssub.s32 %s11, 1
      %s191 = smul.u32 4, %s21
      %p192 = scmp.lt.s32.totalorder %s191, 7
      %s193 = scalar_select %p192, %s191, 7
      %p194 = scmp.lt.s32.totalorder %s20, 0
      %s195 = scalar_select %p194, %s20, 0
      %s196 = sadd.s32 %s195, %s193
      %s197 = smul.addr %s196, 2
      %s198 = scalar_lea.vmem %s0, %s197
      %p199 = pneg %p51
      %p200 = pneg %p48
      %p201 = pneg %p72
      %p202 = pneg %p69
      %p203 = pneg %p93
      %p204 = pneg %p90
      %p205 = pneg %p121
      %p206 = pneg %p118
      %s207 = smul.u32 4, %s21
      %p208 = scmp.lt.s32.totalorder %s207, 7
      %s209 = scalar_select %p208, %s207, 7
      %p210 = scmp.lt.s32.totalorder %s20, 0
      %s211 = scalar_select %p210, %s20, 0
      %s212 = sadd.s32 %s211, %s209
      %s213 = smul.addr %s212, 2
      %s214 = scalar_lea.vmem %s3, %s213
      %p215 = pneg %p147
      %p216 = pneg %p144
      %p217 = scmp.lt.s32.totalorder %s20, 0
      %s218 = scalar_select %p217, %s20, 0
      %s219 = smul.addr %s218, 2
      %s220 = scalar_lea.vmem %s4, %s219
      %s221 = smul.u32 4, %s21
      %p222 = scmp.lt.s32.totalorder %s221, 7
      %s223 = scalar_select %p222, %s221, 7
      %p224 = scmp.lt.s32.totalorder %s20, 0
      %s225 = scalar_select %p224, %s20, 0
      %s226 = sadd.s32 %s225, %s223
      %s227 = smul.addr %s226, 2
      %s228 = scalar_lea.vmem %s0, %s227
      %s229 = smul.u32 4, %s21
      %s230 = smul.u32 4, %s21
      %p231 = scmp.lt.s32.totalorder %s230, 7
      %s232 = scalar_select %p231, %s230, 7
      %p233 = scmp.lt.s32.totalorder %s20, 0
      %s234 = scalar_select %p233, %s20, 0
      %s235 = sadd.s32 %s234, %s232
      %s236 = smul.addr %s235, 2
      %s237 = scalar_lea.vmem %s3, %s236
      %s238 = smul.u32 4, %s21
      %p239 = scmp.lt.s32.totalorder %s20, 0
      %s240 = scalar_select %p239, %s20, 0
      %s241 = smul.addr %s240, 2
      %s242 = scalar_lea.vmem %s4, %s241
      %p244 = scmp.eq.s32.totalorder %s21, 0
      // Predicated region
      $region33: #{qrnn_forward.2} parent=31 // pred_check
        %p245 = pneg %p244
      $region34: #{qrnn_forward.2} parent=31 // pred_check_branch
        %247 = sbr.rel (%p245) target = $region36
      $region35: #{qrnn_forward.2} parent=31 // pred_region
        %vm248 = vcmask 254976
        %249 = vst.msk [vmem:[#allocation2] sm:$0x3] %vm248, 0.0
      $region36: #{qrnn_forward.2} parent=31 // pred_fallthru
        _
      %v250 = vld [vmem:[%s228] sm:$0x3]
      %v251 = vld [vmem:[%s228 + $0x2] sm:$0x3]
      %v252 = vld [vmem:[%s228 + $0x4] sm:$0x3]
      %v253 = vld [vmem:[%s228 + $0x6] sm:$0x3]
      %v258 = vcombine.low %v250, %v251
      %v259 = vcombine.low %v252, %v253
      %v261 = vunpack.c.l.s4 1983009808
      %v262 = vunpack.c.0.s8 %v261
      %v263 = vlaneseq
      %v264 = vshrl.u32 %v263, 7
      %v265 = vsub.s32 %v262, %v264
      %v266 = vrot.slane %v258, %v265
      %v268 = vunpack.c.l.s4 1983009808
      %v269 = vunpack.c.0.s8 %v268
      %v270 = vlaneseq
      %v271 = vshrl.u32 %v270, 7
      %v272 = vsub.s32 %v269, %v271
      %v273 = vrot.slane %v259, %v272
      %v274 = vcombine.low %v266, %v273
      %v276 = vpack.c.bf16 %v274, %v274
      %v277 = vld [vmem:[%s1] sm:$0xf]
      %v278 = vld [vmem:[%s1 + $0x4] sm:$0xf]
      %v279 = vld [vmem:[%s2] sm:$0x1]
      %v281 = vlaneseq
      %v282 = vshrl.u32 %v281, 7
      %v283 = vsub.s32 0, %v282
      %v284 = vrot.slane %v279, %v283
      %v288 = vunpack.c.l.b16 %v277
      %v289 = vunpack.c.l.b16 %v278
      %v290 = vpack.c.b16 %v289, %v288
      %vm292 = vcmask 130048
      %v294 = vsel %vm292, %v276, 0
      %296 = vmatprep.subr.bf16.mxu0 0
      %297 = vmatpush1.bf16.msra.mxu0 0
      %298 = vmatprep.subr.bf16.mxu0 0
      %299 = vmatpush1.bf16.msra.mxu0 0
      %300 = vmatprep.subr.bf16.mxu0 0
      %301 = vmatpush1.bf16.msra.mxu0 0
      %302 = vmatprep.subr.bf16.mxu0 0
      %303 = vmatpush1.bf16.msra.mxu0 0
      %304 = vmatprep.subr.bf16.mxu0 0
      %305 = vmatpush1.bf16.msra.mxu0 0
      %306 = vmatprep.subr.bf16.mxu0 0
      %307 = vmatpush1.bf16.msra.mxu0 0
      %308 = vmatprep.subr.bf16.mxu0 0
      %309 = vmatpush1.bf16.msra.mxu0 0
      %310 = vmatprep.subr.bf16.mxu0 0
      %311 = vmatpush1.bf16.msra.mxu0 %v290
      %312 = vmatprep.subr.bf16.mxu0 0
      %313 = vmatpush2.bf16.msra.mxu0 0
      %314 = vmatprep.subr.bf16.mxu0 0
      %315 = vmatpush2.bf16.msra.mxu0 0
      %316 = vmatprep.subr.bf16.mxu0 0
      %317 = vmatpush2.bf16.msra.mxu0 0
      %318 = vmatprep.subr.bf16.mxu0 0
      %319 = vmatpush2.bf16.msra.mxu0 0
      %320 = vmatprep.subr.bf16.mxu0 0
      %321 = vmatpush2.bf16.msra.mxu0 0
      %322 = vmatprep.subr.bf16.mxu0 0
      %323 = vmatpush2.bf16.msra.mxu0 0
      %324 = vmatprep.subr.bf16.mxu0 0
      %325 = vmatpush2.bf16.msra.mxu0 0
      %326 = vmatprep.subr.bf16.mxu0 0
      %327 = vmatpush2.bf16.msra.mxu0 0
      %328 = vmatprep.mubr.bf16.mxu0 0
      %329 = vmatmul.mubr.bf16.gmra.mxu0 %v294
      %v330 = vpop.f32.mrf.mxu0
      %v331 = vadd.f32 %v284, %v330
      %v332 = vpop.f32.mrf.mxu0
      %v333 = vpop.f32.mrf.mxu0
      %v334 = vpop.f32.mrf.mxu0
      %335 = vdwg.mxu0
      %v336 = vtanh.pop %v331
      %s337 = scalar_lea.vmem %s1, 8
      %v338 = vld [vmem:[%s337] sm:$0xf]
      %v339 = vld [vmem:[%s337 + $0x4] sm:$0xf]
      %s340 = scalar_lea.vmem %s2, 1
      %v341 = vld [vmem:[%s340] sm:$0x1]
      %v343 = vlaneseq
      %v344 = vshrl.u32 %v343, 7
      %v345 = vsub.s32 0, %v344
      %v346 = vrot.slane %v341, %v345
      %v350 = vunpack.c.l.b16 %v338
      %v351 = vunpack.c.l.b16 %v339
      %v352 = vpack.c.b16 %v351, %v350
      %354 = vmatprep.subr.bf16.mxu0 0
      %355 = vmatpush1.bf16.msra.mxu0 0
      %356 = vmatprep.subr.bf16.mxu0 0
      %357 = vmatpush1.bf16.msra.mxu0 0
      %358 = vmatprep.subr.bf16.mxu0 0
      %359 = vmatpush1.bf16.msra.mxu0 0
      %360 = vmatprep.subr.bf16.mxu0 0
      %361 = vmatpush1.bf16.msra.mxu0 0
      %362 = vmatprep.subr.bf16.mxu0 0
      %363 = vmatpush1.bf16.msra.mxu0 0
      %364 = vmatprep.subr.bf16.mxu0 0
      %365 = vmatpush1.bf16.msra.mxu0 0
      %366 = vmatprep.subr.bf16.mxu0 0
      %367 = vmatpush1.bf16.msra.mxu0 0
      %368 = vmatprep.subr.bf16.mxu0 0
      %369 = vmatpush1.bf16.msra.mxu0 %v352
      %370 = vmatprep.subr.bf16.mxu0 0
      %371 = vmatpush2.bf16.msra.mxu0 0
      %372 = vmatprep.subr.bf16.mxu0 0
      %373 = vmatpush2.bf16.msra.mxu0 0
      %374 = vmatprep.subr.bf16.mxu0 0
      %375 = vmatpush2.bf16.msra.mxu0 0
      %376 = vmatprep.subr.bf16.mxu0 0
      %377 = vmatpush2.bf16.msra.mxu0 0
      %378 = vmatprep.subr.bf16.mxu0 0
      %379 = vmatpush2.bf16.msra.mxu0 0
      %380 = vmatprep.subr.bf16.mxu0 0
      %381 = vmatpush2.bf16.msra.mxu0 0
      %382 = vmatprep.subr.bf16.mxu0 0
      %383 = vmatpush2.bf16.msra.mxu0 0
      %384 = vmatprep.subr.bf16.mxu0 0
      %385 = vmatpush2.bf16.msra.mxu0 0
      %386 = vmatprep.mubr.bf16.mxu0 0
      %387 = vmatmul.mubr.bf16.gmra.mxu0 %v294
      %v388 = vpop.f32.mrf.mxu0
      %v389 = vadd.f32 %v346, %v388
      %v390 = vpop.f32.mrf.mxu0
      %v391 = vpop.f32.mrf.mxu0
      %v392 = vpop.f32.mrf.mxu0
      %393 = vdwg.mxu0
      %v394 = vxor.u32 %v389, 2147483648
      %v395 = vmul.f32 %v394, 1.442695
      %v396 = vpow.pop %v395
      %v397 = vadd.f32 %v396, 1.0
      %v398 = vrcp.pop %v397
      %v399 = vmul.f32 1.0, %v398
      %s400 = scalar_lea.vmem %s1, 16
      %v401 = vld [vmem:[%s400] sm:$0xf]
      %v402 = vld [vmem:[%s400 + $0x4] sm:$0xf]
      %s403 = scalar_lea.vmem %s2, 2
      %v404 = vld [vmem:[%s403] sm:$0x1]
      %v406 = vlaneseq
      %v407 = vshrl.u32 %v406, 7
      %v408 = vsub.s32 0, %v407
      %v409 = vrot.slane %v404, %v408
      %v413 = vunpack.c.l.b16 %v401
      %v414 = vunpack.c.l.b16 %v402
      %v415 = vpack.c.b16 %v414, %v413
      %417 = vmatprep.subr.bf16.mxu0 0
      %418 = vmatpush1.bf16.msra.mxu0 0
      %419 = vmatprep.subr.bf16.mxu0 0
      %420 = vmatpush1.bf16.msra.mxu0 0
      %421 = vmatprep.subr.bf16.mxu0 0
      %422 = vmatpush1.bf16.msra.mxu0 0
      %423 = vmatprep.subr.bf16.mxu0 0
      %424 = vmatpush1.bf16.msra.mxu0 0
      %425 = vmatprep.subr.bf16.mxu0 0
      %426 = vmatpush1.bf16.msra.mxu0 0
      %427 = vmatprep.subr.bf16.mxu0 0
      %428 = vmatpush1.bf16.msra.mxu0 0
      %429 = vmatprep.subr.bf16.mxu0 0
      %430 = vmatpush1.bf16.msra.mxu0 0
      %431 = vmatprep.subr.bf16.mxu0 0
      %432 = vmatpush1.bf16.msra.mxu0 %v415
      %433 = vmatprep.subr.bf16.mxu0 0
      %434 = vmatpush2.bf16.msra.mxu0 0
      %435 = vmatprep.subr.bf16.mxu0 0
      %436 = vmatpush2.bf16.msra.mxu0 0
      %437 = vmatprep.subr.bf16.mxu0 0
      %438 = vmatpush2.bf16.msra.mxu0 0
      %439 = vmatprep.subr.bf16.mxu0 0
      %440 = vmatpush2.bf16.msra.mxu0 0
      %441 = vmatprep.subr.bf16.mxu0 0
      %442 = vmatpush2.bf16.msra.mxu0 0
      %443 = vmatprep.subr.bf16.mxu0 0
      %444 = vmatpush2.bf16.msra.mxu0 0
      %445 = vmatprep.subr.bf16.mxu0 0
      %446 = vmatpush2.bf16.msra.mxu0 0
      %447 = vmatprep.subr.bf16.mxu0 0
      %448 = vmatpush2.bf16.msra.mxu0 0
      %449 = vmatprep.mubr.bf16.mxu0 0
      %450 = vmatmul.mubr.bf16.gmra.mxu0 %v294
      %v451 = vpop.f32.mrf.mxu0
      %v452 = vadd.f32 %v409, %v451
      %v453 = vpop.f32.mrf.mxu0
      %v454 = vpop.f32.mrf.mxu0
      %v455 = vpop.f32.mrf.mxu0
      %456 = vdwg.mxu0
      %v457 = vxor.u32 %v452, 2147483648
      %v458 = vmul.f32 %v457, 1.442695
      %v459 = vpow.pop %v458
      %v460 = vadd.f32 %v459, 1.0
      %v461 = vrcp.pop %v460
      %v462 = vmul.f32 1.0, %v461
      %v463 = vmul.f32 %v399, %v336
      %v465 = vcombine.high %v463, %v463
      %v467 = vunpack.c.l.s4 1983009808
      %v468 = vunpack.c.0.s8 %v467
      %v469 = vlaneseq
      %v470 = vshrl.u32 %v469, 7
      %v471 = vsub.s32 %v468, %v470
      %v472 = vrot.slane %v463, %v471
      %v474 = vunpack.c.l.s4 1983009808
      %v475 = vunpack.c.0.s8 %v474
      %v476 = vlaneseq
      %v477 = vshrl.u32 %v476, 7
      %v478 = vsub.s32 %v475, %v477
      %v479 = vrot.slane %v465, %v478
      %v480 = vcombine.high %v472, %v472
      %v481 = vcombine.high %v479, %v479
      %vm486 = vcmask 254976
      %487 = vst.msk [vmem:[#allocation3] sm:$0x3] %vm486, %v472
      %488 = vst.msk [vmem:[#allocation3 + $0x2] sm:$0x3] %vm486, %v480
      %489 = vst.msk [vmem:[#allocation3 + $0x4] sm:$0x3] %vm486, %v479
      %490 = vst.msk [vmem:[#allocation3 + $0x6] sm:$0x3] %vm486, %v481
      %v491 = vsub.f32 1.0, %v399
      %v493 = vcombine.high %v491, %v491
      %v495 = vunpack.c.l.s4 1983009808
      %v496 = vunpack.c.0.s8 %v495
      %v497 = vlaneseq
      %v498 = vshrl.u32 %v497, 7
      %v499 = vsub.s32 %v496, %v498
      %v500 = vrot.slane %v491, %v499
      %v502 = vunpack.c.l.s4 1983009808
      %v503 = vunpack.c.0.s8 %v502
      %v504 = vlaneseq
      %v505 = vshrl.u32 %v504, 7
      %v506 = vsub.s32 %v503, %v505
      %v507 = vrot.slane %v493, %v506
      %v508 = vcombine.high %v500, %v500
      %v509 = vcombine.high %v507, %v507
      %514 = vst.msk [vmem:[#allocation4] sm:$0x3] %vm486, %v500
      %515 = vst.msk [vmem:[#allocation4 + $0x2] sm:$0x3] %vm486, %v508
      %516 = vst.msk [vmem:[#allocation4 + $0x4] sm:$0x3] %vm486, %v507
      %517 = vst.msk [vmem:[#allocation4 + $0x6] sm:$0x3] %vm486, %v509
      %v519 = vcombine.high %v462, %v462
      %v521 = vunpack.c.l.s4 1983009808
      %v522 = vunpack.c.0.s8 %v521
      %v523 = vlaneseq
      %v524 = vshrl.u32 %v523, 7
      %v525 = vsub.s32 %v522, %v524
      %v526 = vrot.slane %v462, %v525
      %v528 = vunpack.c.l.s4 1983009808
      %v529 = vunpack.c.0.s8 %v528
      %v530 = vlaneseq
      %v531 = vshrl.u32 %v530, 7
      %v532 = vsub.s32 %v529, %v531
      %v533 = vrot.slane %v519, %v532
      %v534 = vcombine.high %v526, %v526
      %v535 = vcombine.high %v533, %v533
      %540 = vst.msk [vmem:[#allocation5] sm:$0x3] %vm486, %v526
      %541 = vst.msk [vmem:[#allocation5 + $0x2] sm:$0x3] %vm486, %v534
      %542 = vst.msk [vmem:[#allocation5 + $0x4] sm:$0x3] %vm486, %v533
      %543 = vst.msk [vmem:[#allocation5 + $0x6] sm:$0x3] %vm486, %v535
      %v544 = vld [vmem:[#allocation2] sm:$0x3]
      %v545 = vld [vmem:[#allocation3] sm:$0x3]
      %v546 = vld [vmem:[#allocation4] sm:$0x3]
      %v547 = vmul.f32 %v546, %v544
      %v548 = vadd.f32 %v545, %v547
      %549 = vst.msk [vmem:[#allocation3] sm:$0x3] %vm486, %v548
      %s550 = scalar_lea.vmem [#allocation3], 2
      %v551 = vld [vmem:[%s550] sm:$0x3]
      %s552 = scalar_lea.vmem [#allocation4], 2
      %v553 = vld [vmem:[%s552] sm:$0x3]
      %v554 = vmul.f32 %v553, %v548
      %v555 = vadd.f32 %v551, %v554
      %556 = vst.msk [vmem:[%s550] sm:$0x3] %vm486, %v555
      %s557 = scalar_lea.vmem [#allocation3], 4
      %v558 = vld [vmem:[%s557] sm:$0x3]
      %s559 = scalar_lea.vmem [#allocation4], 4
      %v560 = vld [vmem:[%s559] sm:$0x3]
      %v561 = vmul.f32 %v560, %v555
      %v562 = vadd.f32 %v558, %v561
      %563 = vst.msk [vmem:[%s557] sm:$0x3] %vm486, %v562
      %s564 = scalar_lea.vmem [#allocation3], 6
      %v565 = vld [vmem:[%s564] sm:$0x3]
      %s566 = scalar_lea.vmem [#allocation4], 6
      %v567 = vld [vmem:[%s566] sm:$0x3]
      %v568 = vmul.f32 %v567, %v562
      %v569 = vadd.f32 %v565, %v568
      %570 = vst.msk [vmem:[%s564] sm:$0x3] %vm486, %v569
      %571 = vst.msk [vmem:[#allocation2] sm:$0x3] %vm486, %v569
      %v572 = vld [vmem:[#allocation5] sm:$0x3]
      %v573 = vld [vmem:[#allocation5 + $0x2] sm:$0x3]
      %v574 = vld [vmem:[#allocation5 + $0x4] sm:$0x3]
      %v575 = vld [vmem:[#allocation5 + $0x6] sm:$0x3]
      %v576 = vld [vmem:[#allocation3] sm:$0x3]
      %v577 = vld [vmem:[#allocation3 + $0x2] sm:$0x3]
      %v578 = vld [vmem:[#allocation3 + $0x4] sm:$0x3]
      %v579 = vld [vmem:[#allocation3 + $0x6] sm:$0x3]
      %v580 = vmul.f32 %v572, %v576
      %v581 = vmul.f32 %v573, %v577
      %v582 = vmul.f32 %v574, %v578
      %v583 = vmul.f32 %v575, %v579
      %584 = vst.msk [vmem:[%s237] sm:$0x3] %vm486, %v580
      %585 = vst.msk [vmem:[%s237 + $0x2] sm:$0x3] %vm486, %v581
      %586 = vst.msk [vmem:[%s237 + $0x4] sm:$0x3] %vm486, %v582
      %587 = vst.msk [vmem:[%s237 + $0x6] sm:$0x3] %vm486, %v583
      %p588 = scmp.eq.s32.totalorder %s21, 1
      // Predicated region
      $region37: #{qrnn_forward.2} parent=31 // pred_check
        %p589 = pneg %p588
      $region38: #{qrnn_forward.2} parent=31 // pred_check_branch
        %591 = sbr.rel (%p589) target = $region40
      $region39: #{qrnn_forward.2} parent=31 // pred_region
        %592 = vst.msk [vmem:[%s242] sm:$0x3] %vm486, %v569
      $region40: #{qrnn_forward.2} parent=31 // pred_fallthru
        _
      %s593 = smul.u32 4, %s21
      %p594 = scmp.lt.s32.totalorder %s593, 7
      %s595 = scalar_select %p594, %s593, 7
      %p596 = scmp.lt.s32.totalorder %s20, 0
      %s597 = scalar_select %p596, %s20, 0
      %s598 = sadd.s32 %s597, %s595
      %s599 = smul.addr %s598, 2
      %s600 = scalar_lea.vmem %s3, %s599
      %p601 = scmp.lt.s32.totalorder %s20, 0
      %s602 = scalar_select %p601, %s20, 0
      %s603 = smul.addr %s602, 2
      %s604 = scalar_lea.vmem %s4, %s603
      // Predicated region
      $region41: #{qrnn_forward.2} parent=31 // pred_check
        %p605 = pneg %p118
      $region42: #{qrnn_forward.2} parent=31 // pred_check_branch
        %607 = sbr.rel (%p605) target = $region44
      $region43: #{qrnn_forward.2} parent=31 // pred_region
        %s608 = smul.u32 4, %s21
      $region44: #{qrnn_forward.2} parent=31 // pred_fallthru
        _
      // Predicated region
      $region45: #{qrnn_forward.2} parent=31 // pred_check
        %p609 = pneg %p144
      $region46: #{qrnn_forward.2} parent=31 // pred_check_branch
        %611 = sbr.rel (%p609) target = $region48
      $region47: #{qrnn_forward.2} parent=31 // pred_region
        _
      $region48: #{qrnn_forward.2} parent=31 // pred_fallthru
        _
      // Predicated region
      $region49: #{qrnn_forward.2} parent=31 // pred_check
        %p612 = pneg %p144
      $region50: #{qrnn_forward.2} parent=31 // pred_check_branch
        %614 = sbr.rel (%p612) target = $region52
      $region51: #{qrnn_forward.2} parent=31 // pred_region
        %p615 = scmp.lt.s32.totalorder %s20, 0
        %s616 = scalar_select %p615, %s20, 0
        %s617 = smul.addr %s616, 2
        %s618 = scalar_lea.vmem %s4, %s617
      $region52: #{qrnn_forward.2} parent=31 // pred_fallthru
        _
    $region32: #{qrnn_forward.2} parent=5 // pred_fallthru
      _
    %p619 = scmp.le.s32.totalorder 2, %s11
    // Predicated region
    $region53: #{qrnn_forward.2} parent=5 // pred_check
      %p620 = pneg %p619
    $region54: #{qrnn_forward.2} parent=5 // pred_check_branch
      %622 = sbr.rel (%p620) target = $region56
    $region55: #{qrnn_forward.2} parent=5 // pred_region
      %s623 = ssub.s32 %s11, 2
      // Predicated region
      $region57: #{qrnn_forward.2} parent=55 // pred_check
        %p624 = pneg %p124
      $region58: #{qrnn_forward.2} parent=55 // pred_check_branch
        %626 = sbr.rel (%p624) target = $region60
      $region59: #{qrnn_forward.2} parent=55 // pred_region
        %s627 = smul.u32 4, %s23
        %p628 = scmp.lt.s32.totalorder %s627, 7
        %s629 = scalar_select %p628, %s627, 7
        %p630 = scmp.lt.s32.totalorder %s22, 0
        %s631 = scalar_select %p630, %s22, 0
        %s632 = sadd.s32 %s631, %s629
        %s633 = smul.addr %s632, 2
        %s634 = scalar_lea.vmem %s3, %s633
      $region60: #{qrnn_forward.2} parent=55 // pred_fallthru
        _
    $region56: #{qrnn_forward.2} parent=5 // pred_fallthru
      _
  $region6: #{qrnn_forward.2} parent=0 // loop_footer
    %s15 = sadd.s32 1, %s11
  $region7: #{qrnn_forward.2} parent=0 // loop_footer_branch
    %10 = sbr.rel target = $region3
  $region8: #{qrnn_forward.2} parent=0 // loop_exit
    _

</llo_original>
